<compile_context>
chip_gen: v7x
topology: tpu7x:2x2x1
jax: 0.10.0
libtpu: 0.0.40
codegen_flags: <defaults>
</compile_context>

<pallas_src>
import jax
import jax.numpy as jnp
from jax import lax
from jax.experimental import pallas as pl
from jax.experimental.pallas import tpu as pltpu


def _round_up(n: int, m: int) -> int:
    return (n + m - 1) // m * m


def _gru_kernel(x_ref, h0_ref, wx_ref, bx_ref, wh_ref, bmh_ref,
                out_ref, h_carry, ostage):
    """One grid step = TS timesteps of the recurrence for one batch tile.

    x_ref  : (TS, TB, D)   bf16 raw inputs (time-major block)
    h0_ref : (TB, Lp)      f32 initial hidden state (zero-padded lanes)
    wx_ref : (D, 3*Lp)     bf16 fused input weights  [Wz_hid | Wz_out | Wmx]
    bx_ref : (1, 3*Lp)     f32 fused input biases    [bz_hid | bz_out | bmx]
    wh_ref : (Lp, 3*Lp)    bf16 fused recurrent weights [Whz_hid|Whz_out|Wmh]
    bmh_ref: (1, Lp)       f32 memory-gate hidden bias
    out_ref: (TB, TS, Lp)  f32 hidden states, batch-first (no wrapper transpose)
    h_carry: (TB, Lp)      f32 carry; persists across the (arbitrary) time axis
    ostage : (TS, TB, Lp)  f32 staging buffer so every out_ref store uses
                           static indices (copied back with a static loop)

    Padded-lane invariant: padded weight rows/cols, padded biases and padded
    h0 lanes are exactly zero (bf16 cast of zero is zero), so the padded
    output-gate lanes (sigmoid(0)=0.5) only ever scale a zero carry and the
    padded hidden lanes remain exactly zero for all timesteps.
    """
    ts, tb, _ = x_ref.shape
    lp = h0_ref.shape[-1]

    # (Re)initialize the fp32 carry at the start of each batch tile's sequence.
    @pl.when(pl.program_id(1) == 0)
    def _():
        h_carry[...] = h0_ref[...].astype(jnp.float32)

    # Resident weights (one load per grid step) + hoisted bias broadcasts.
    wx = wx_ref[...]                                             # (D, 3Lp) bf16
    wh = wh_ref[...]                                             # (Lp, 3Lp) bf16
    bx = jnp.broadcast_to(bx_ref[...], (tb, 3 * lp))             # (TB, 3Lp) f32
    bmh = jnp.broadcast_to(bmh_ref[...], (tb, lp))               # (TB, Lp)  f32

    def step(s, h):
        # In-kernel x projection (no recurrence on it): bf16 MXU dot, f32 acc.
        # TODO(synk): batch this projection over the whole TS block with a
        # single (TS*TB, D) @ (D, 3Lp) dot once the in-kernel merge-reshape is
        # confirmed cheap on Mosaic.
        x_t = x_ref[s]                                           # (TB, D) bf16
        gx = jnp.dot(x_t, wx, preferred_element_type=jnp.float32) + bx
        hp = jnp.dot(h.astype(jnp.bfloat16), wh,
                     preferred_element_type=jnp.float32)         # (TB, 3Lp)

        # sigmoid(v) = 0.5*tanh(0.5*v) + 0.5 : a single EUP op per element.
        zr = gx[:, :2 * lp] + hp[:, :2 * lp]
        fused = 0.5 * jnp.tanh(0.5 * zr) + 0.5
        hidden_state = fused[:, :lp]
        output_state = fused[:, lp:]

        mem = gx[:, 2 * lp:] + hidden_state * (hp[:, 2 * lp:] + bmh)
        # lerp form: one fewer multiply on the serial critical path.
        h_new = h + (1.0 - output_state) * (jnp.tanh(mem) - h)

        ostage[s] = h_new                     # dynamic index on leading axis
        return h_new

    h_final = lax.fori_loop(0, ts, step, h_carry[...], unroll=True)
    h_carry[...] = h_final

    # Emit batch-first output; all indices here are static Python ints.
    for s in range(ts):
        out_ref[:, s, :] = ostage[s]


def gru_layer_forward(x, h0, params, *, latent_dim: int,
                      time_block: int = 8, batch_block: int | None = None):
    """x: (B, S, D) batch-first.  h0: (B, L).  Returns (B, S, L)."""
    B, S, D = x.shape
    L = latent_dim
    Lp = _round_up(L, 128)          # lane-dense gate width
    Gp = 3 * Lp                     # fused [hidden | output | memory] blocks
    # TODO(synk): on v6e/v7x consider rounding Lp to 256 multiples when L sits
    # just above a 256 boundary (2x256x256 MXU); measure before padding.

    wxz, whz, bz, wmx, bmx, wmh, bmh = params

    # --- time tile: multiple of 8 (sublane); pad S so there is no ragged
    #     block and TS never collapses to 1 for awkward S. ---
    TS = _round_up(max(1, time_block), 8)
    Sp = _round_up(S, TS)

    # --- batch tile: saturate the MXU M axis, but leave >=2 batch tiles so
    #     v7x megacore can shard the 'parallel' batch axis when B allows. ---
    if batch_block is not None:
        TB = batch_block
    else:
        TB = min(B, 256)
        if B % TB:
            TB = B
        if TB == B and B >= 16 and (B // 2) % 8 == 0:
            TB = B // 2
    if B % TB != 0 or (TB != B and TB % 8 != 0):
        TB = B

    f32, bf16 = jnp.float32, jnp.bfloat16

    # --- pack & pad weights: gate blocks at 128-aligned lane offsets.
    #     Padded rows/cols are exactly zero (and stay zero after the bf16
    #     cast), preserving the padded-lane invariant (see kernel docstring).
    wx_p = jnp.zeros((D, Gp), f32)
    wx_p = wx_p.at[:, 0:L].set(wxz[:, :L].astype(f32))             # hidden gate
    wx_p = wx_p.at[:, Lp:Lp + L].set(wxz[:, L:2 * L].astype(f32))  # output gate
    wx_p = wx_p.at[:, 2 * Lp:2 * Lp + L].set(wmx.astype(f32))      # memory (x)
    wh_p = jnp.zeros((Lp, Gp), f32)
    wh_p = wh_p.at[:L, 0:L].set(whz[:, :L].astype(f32))
    wh_p = wh_p.at[:L, Lp:Lp + L].set(whz[:, L:2 * L].astype(f32))
    wh_p = wh_p.at[:L, 2 * Lp:2 * Lp + L].set(wmh.astype(f32))
    wx_p = wx_p.astype(bf16)          # bf16 MXU operands, f32 accumulation
    wh_p = wh_p.astype(bf16)

    bx_p = jnp.zeros((1, Gp), f32)
    bx_p = bx_p.at[0, 0:L].set(bz[:L].astype(f32))
    bx_p = bx_p.at[0, Lp:Lp + L].set(bz[L:].astype(f32))
    bx_p = bx_p.at[0, 2 * Lp:2 * Lp + L].set(bmx.astype(f32))
    bmh_p = jnp.zeros((1, Lp), f32).at[0, :L].set(bmh.astype(f32))

    h0_p = jnp.zeros((B, Lp), f32).at[:, :L].set(h0.astype(f32))

    # --- time-major bf16 x; NO HBM-materialized gx (projection is in-kernel).
    x_tm = jnp.transpose(x, (1, 0, 2)).astype(bf16)                # (S, B, D)
    if Sp != S:
        x_tm = jnp.pad(x_tm, ((0, Sp - S), (0, 0), (0, 0)))

    # --- explicit VMEM budget (defaults would silently cap tile sizes). ---
    vmem_need = (
        2 * TS * TB * D * 2            # x blocks (bf16, double-buffered)
        + 2 * TB * Lp * 4              # h0 blocks
        + 2 * TB * TS * Lp * 4         # out blocks (f32, double-buffered)
        + (D + Lp) * Gp * 2            # resident fused weights (bf16)
        + (Gp + Lp) * 4                # bias rows
        + TB * Lp * 4                  # h carry scratch
        + TS * TB * Lp * 4             # out staging scratch
    )
    vmem_limit = int(min(112 * 2 ** 20, max(32 * 2 ** 20, 2 * vmem_need)))

    def _make_call(single_buffer_consts: bool):
        def _const_spec(shape):
            kwargs = {}
            if single_buffer_consts:
                # Constant index_map -> no need to double-buffer: halves the
                # resident-weight VMEM footprint (matters inside v7x's 64 MiB).
                kwargs["pipeline_mode"] = pl.Buffered(buffer_count=1)
            return pl.BlockSpec(shape, lambda b, t: (0, 0), **kwargs)

        grid_spec = pltpu.PrefetchScalarGridSpec(
            num_scalar_prefetch=0,
            grid=(B // TB, Sp // TS),
            in_specs=[
                pl.BlockSpec((TS, TB, D), lambda b, t: (t, b, 0)),   # x block
                pl.BlockSpec((TB, Lp), lambda b, t: (b, 0)),         # h0
                _const_spec((D, Gp)),                                # fused Wx
                _const_spec((1, Gp)),                                # fused bx
                _const_spec((Lp, Gp)),                               # fused Wh
                _const_spec((1, Lp)),                                # bmh
            ],
            out_specs=pl.BlockSpec((TB, TS, Lp), lambda b, t: (b, t, 0)),
            scratch_shapes=[pltpu.VMEM((TB, Lp), jnp.float32),       # h carry
                            pltpu.VMEM((TS, TB, Lp), jnp.float32)],  # staging
        )
        return pl.pallas_call(
            _gru_kernel,
            out_shape=jax.ShapeDtypeStruct((B, Sp, Lp), jnp.float32),
            grid_spec=grid_spec,
            compiler_params=pltpu.CompilerParams(
                # batch tiles are independent (v7x megacore); time must stay
                # innermost + 'arbitrary' or the recurrence carry breaks.
                dimension_semantics=("parallel", "arbitrary"),
                vmem_limit_bytes=vmem_limit),
        )

    try:
        out = _make_call(True)(x_tm, h0_p, wx_p, bx_p, wh_p, bmh_p)
    except Exception:
        # pl.Buffered(1) unsupported on this jax/Mosaic version -> default
        # double buffering (costs VMEM headroom only; correctness unchanged).
        out = _make_call(False)(x_tm, h0_p, wx_p, bx_p, wh_p, bmh_p)

    # Drop time padding and lane padding; already batch-first.
    return out[:, :S, :L]                                          # (B, S, L)


def _init_params(key, input_dim, latent_dim):
    """Deterministic param init mimicking nn.Linear (uniform +-1/sqrt(fan_in))."""
    D, L = input_dim, latent_dim
    concat = D + L
    ks = jax.random.split(key, 6)

    def u(k, shape, fan_in):
        bound = 1.0 / jnp.sqrt(fan_in)
        return jax.random.uniform(k, shape, jnp.float32, -bound, bound)

    # self.w : Linear(concat, 2L) -> torch weight (2L, concat); store transposed
    w_full = u(ks[0], (2 * L, concat), concat)
    b_full = u(ks[1], (2 * L,), concat)
    w_full_t = w_full.T                                # (concat, 2L)
    wxz = w_full_t[:D]                                 # (D, 2L)
    whz = w_full_t[D:]                                 # (L, 2L)

    # memory_gate_x : Linear(D, L)
    wmx = u(ks[2], (L, D), D).T                        # (D, L)
    bmx = u(ks[3], (L,), D)

    # memory_gate_h : Linear(L, L)
    wmh = u(ks[4], (L, L), L).T                        # (L, L)
    bmh = u(ks[5], (L,), L)

    return (wxz, whz, b_full, wmx, bmx, wmh, bmh)


def _reference_forward(x, h0, params, latent_dim):
    """Pure-JAX fp32 reference of the PyTorch GRULayer forward."""
    wxz, whz, bz, wmx, bmx, wmh, bmh = params
    L = latent_dim

    def cell(h, x_t):
        fused = jax.nn.sigmoid(x_t @ wxz + h @ whz + bz)
        hidden_state, output_state = fused[:, :L], fused[:, L:]
        mem = x_t @ wmx + bmx + hidden_state * (h @ wmh + bmh)
        h_new = output_state * h + (1.0 - output_state) * jnp.tanh(mem)
        return h_new, h_new

    x_tm = jnp.transpose(x, (1, 0, 2))
    _, hs = jax.lax.scan(cell, h0, x_tm)
    return jnp.transpose(hs, (1, 0, 2))


if __name__ == "__main__":
    B, S, D, L = 4, 16, 16, 32

    key = jax.random.PRNGKey(0)
    k_x, k_p = jax.random.split(key)

    x = jax.random.normal(k_x, (B, S, D), jnp.float32)
    # TODO(synk): the PyTorch module's h=None default creates a (1,1,L) tensor
    # which cannot be torch.cat'd with a 2-D x_t; we interpret the intended
    # default as zeros of shape (B, L).
    h0 = jnp.zeros((B, L), jnp.float32)

    params = _init_params(k_p, D, L)

    out = gru_layer_forward(x, h0, params, latent_dim=L)
    out = jax.block_until_ready(out)

    ref = _reference_forward(x, h0, params, L)
    assert out.shape == (B, S, L)
    max_err = float(jnp.max(jnp.abs(out - ref)))
    # bf16 matmul operands (fp32 accumulation/carry/gates) vs fp32 reference:
    # loosened tolerance per the review; hidden states are O(1).
    assert jnp.allclose(out, ref, atol=5e-2, rtol=5e-2), (
        f"mismatch vs reference (max abs err {max_err})")

    print("KERNEL_OK")
</pallas_src>

<mosaic_0001>
module attributes {stable_mosaic.version = 11 : i64} {
  func.func @_gru_kernel(%arg0: i32, %arg1: i32, %arg2: memref<8x4x16xbf16, #tpu.memory_space<vmem>>, %arg3: memref<4x128xf32, #tpu.memory_space<vmem>>, %arg4: memref<16x384xbf16, #tpu.memory_space<vmem>>, %arg5: memref<1x384xf32, #tpu.memory_space<vmem>>, %arg6: memref<128x384xbf16, #tpu.memory_space<vmem>>, %arg7: memref<1x128xf32, #tpu.memory_space<vmem>>, %arg8: memref<4x8x128xf32, #tpu.memory_space<vmem>>, %arg9: memref<4x128xf32, #tpu.memory_space<vmem>>, %arg10: memref<8x4x128xf32, #tpu.memory_space<vmem>>) attributes {dimension_semantics = [#tpu.dimension_semantics<parallel>, #tpu.dimension_semantics<arbitrary>], iteration_bounds = array<i64: 1, 2>, scalar_prefetch = 0 : i64, scratch_operands = 2 : i64, tpu.core_type = #tpu.core_type<tc>, window_params = [{transform_indices = @transform_0, window_bounds = array<i64: 8, 4, 16>}, {transform_indices = @transform_1, window_bounds = array<i64: 4, 128>}, {pipeline_mode = #tpu.pipeline_mode<synchronous>, transform_indices = @transform_2, window_bounds = array<i64: 16, 384>}, {pipeline_mode = #tpu.pipeline_mode<synchronous>, transform_indices = @transform_3, window_bounds = array<i64: 1, 384>}, {pipeline_mode = #tpu.pipeline_mode<synchronous>, transform_indices = @transform_4, window_bounds = array<i64: 128, 384>}, {pipeline_mode = #tpu.pipeline_mode<synchronous>, transform_indices = @transform_5, window_bounds = array<i64: 1, 128>}, {transform_indices = @transform_6, window_bounds = array<i64: 4, 8, 128>}]} {
    %c0_i32 = arith.constant 0 : i32
    %0 = arith.cmpi eq, %arg1, %c0_i32 : i32
    %1 = arith.extui %0 : i1 to i32
    %c0_i32_0 = arith.constant 0 : i32
    %2 = arith.cmpi ne, %1, %c0_i32_0 : i32
    scf.if %2 {
      %c0_133 = arith.constant 0 : index
      %c0_134 = arith.constant 0 : index
      %325 = vector.load %arg3[%c0_133, %c0_134] : memref<4x128xf32, #tpu.memory_space<vmem>>, vector<4x128xf32>
      %c0_135 = arith.constant 0 : index
      %c0_136 = arith.constant 0 : index
      %326 = vector.load %arg9[%c0_135, %c0_136] : memref<4x128xf32, #tpu.memory_space<vmem>>, vector<4x128xf32>
      tpu.vector_store %arg9[%c0_135, %c0_136], %325 {strides = array<i32>} : memref<4x128xf32, #tpu.memory_space<vmem>>, vector<4x128xf32>,
    } else {
    }
    %c0 = arith.constant 0 : index
    %c0_1 = arith.constant 0 : index
    %3 = vector.load %arg4[%c0, %c0_1] : memref<16x384xbf16, #tpu.memory_space<vmem>>, vector<16x384xbf16>
    %c0_2 = arith.constant 0 : index
    %c0_3 = arith.constant 0 : index
    %4 = vector.load %arg6[%c0_2, %c0_3] : memref<128x384xbf16, #tpu.memory_space<vmem>>, vector<128x384xbf16>
    %c0_4 = arith.constant 0 : index
    %c0_5 = arith.constant 0 : index
    %5 = vector.load %arg5[%c0_4, %c0_5] : memref<1x384xf32, #tpu.memory_space<vmem>>, vector<1x384xf32>
    %6 = vector.shape_cast %5 : vector<1x384xf32> to vector<1x384xf32>
    %7 = vector.broadcast %6 : vector<1x384xf32> to vector<4x384xf32>
    %c0_6 = arith.constant 0 : index
    %c0_7 = arith.constant 0 : index
    %8 = vector.load %arg7[%c0_6, %c0_7] : memref<1x128xf32, #tpu.memory_space<vmem>>, vector<1x128xf32>
    %9 = vector.shape_cast %8 : vector<1x128xf32> to vector<1x128xf32>
    %10 = vector.broadcast %9 : vector<1x128xf32> to vector<4x128xf32>
    %c0_8 = arith.constant 0 : index
    %c0_9 = arith.constant 0 : index
    %11 = vector.load %arg9[%c0_8, %c0_9] : memref<4x128xf32, #tpu.memory_space<vmem>>, vector<4x128xf32>
    %c0_i32_10 = arith.constant 0 : i32
    %12 = arith.index_cast %c0_i32_10 : i32 to index
    %c0_11 = arith.constant 0 : index
    %c0_12 = arith.constant 0 : index
    %13 = vector.load %arg2[%12, %c0_11, %c0_12] : memref<8x4x16xbf16, #tpu.memory_space<vmem>>, vector<1x4x16xbf16>
    %14 = vector.shape_cast %13 : vector<1x4x16xbf16> to vector<4x16xbf16>
    %cst = arith.constant dense<0.000000e+00> : vector<4x384xf32>
    %15 = tpu.matmul %14, %3, %cst {dimension_numbers = #tpu.dot_dimension_numbers<[1], [0], [0], [1], [0, 0, 1, 1], [], []>} : vector<4x16xbf16>, vector<16x384xbf16>, vector<4x384xf32> -> vector<4x384xf32>
    %16 = arith.addf %15, %7 : vector<4x384xf32>
    %17 = arith.truncf %11 : vector<4x128xf32> to vector<4x128xbf16>
    %cst_13 = arith.constant dense<0.000000e+00> : vector<4x384xf32>
    %18 = tpu.matmul %17, %4, %cst_13 {dimension_numbers = #tpu.dot_dimension_numbers<[1], [0], [0], [1], [0, 0, 1, 1], [], []>} : vector<4x128xbf16>, vector<128x384xbf16>, vector<4x384xf32> -> vector<4x384xf32>
    %19 = vector.extract_strided_slice %16 {offsets = [0, 0], sizes = [4, 256], strides = [1, 1]} : vector<4x384xf32> to vector<4x256xf32>
    %20 = vector.extract_strided_slice %18 {offsets = [0, 0], sizes = [4, 256], strides = [1, 1]} : vector<4x384xf32> to vector<4x256xf32>
    %21 = arith.addf %19, %20 : vector<4x256xf32>
    %cst_14 = arith.constant 5.000000e-01 : f32
    %22 = vector.broadcast %cst_14 : f32 to vector<4x256xf32>
    %23 = arith.mulf %22, %21 : vector<4x256xf32>
    %24 = math.tanh %23 : vector<4x256xf32>
    %cst_15 = arith.constant 5.000000e-01 : f32
    %25 = vector.broadcast %cst_15 : f32 to vector<4x256xf32>
    %26 = arith.mulf %25, %24 : vector<4x256xf32>
    %cst_16 = arith.constant 5.000000e-01 : f32
    %27 = vector.broadcast %cst_16 : f32 to vector<4x256xf32>
    %28 = arith.addf %26, %27 : vector<4x256xf32>
    %29 = vector.extract_strided_slice %28 {offsets = [0, 0], sizes = [4, 128], strides = [1, 1]} : vector<4x256xf32> to vector<4x128xf32>
    %30 = vector.extract_strided_slice %28 {offsets = [0, 128], sizes = [4, 128], strides = [1, 1]} : vector<4x256xf32> to vector<4x128xf32>
    %31 = vector.extract_strided_slice %16 {offsets = [0, 256], sizes = [4, 128], strides = [1, 1]} : vector<4x384xf32> to vector<4x128xf32>
    %32 = vector.extract_strided_slice %18 {offsets = [0, 256], sizes = [4, 128], strides = [1, 1]} : vector<4x384xf32> to vector<4x128xf32>
    %33 = arith.addf %32, %10 : vector<4x128xf32>
    %34 = arith.mulf %29, %33 : vector<4x128xf32>
    %35 = arith.addf %31, %34 : vector<4x128xf32>
    %cst_17 = arith.constant 1.000000e+00 : f32
    %36 = vector.broadcast %cst_17 : f32 to vector<4x128xf32>
    %37 = arith.subf %36, %30 : vector<4x128xf32>
    %38 = math.tanh %35 : vector<4x128xf32>
    %39 = arith.subf %38, %11 : vector<4x128xf32>
    %40 = arith.mulf %37, %39 : vector<4x128xf32>
    %41 = arith.addf %11, %40 : vector<4x128xf32>
    %42 = arith.index_cast %c0_i32_10 : i32 to index
    %c0_18 = arith.constant 0 : index
    %c0_19 = arith.constant 0 : index
    %43 = vector.load %arg10[%42, %c0_18, %c0_19] : memref<8x4x128xf32, #tpu.memory_space<vmem>>, vector<1x4x128xf32>
    %44 = vector.shape_cast %43 : vector<1x4x128xf32> to vector<4x128xf32>
    %45 = vector.shape_cast %41 : vector<4x128xf32> to vector<1x4x128xf32>
    tpu.vector_store %arg10[%42, %c0_18, %c0_19], %45 {strides = array<i32>} : memref<8x4x128xf32, #tpu.memory_space<vmem>>, vector<1x4x128xf32>,
    %c1_i32 = arith.constant 1 : i32
    %46 = arith.index_cast %c1_i32 : i32 to index
    %c0_20 = arith.constant 0 : index
    %c0_21 = arith.constant 0 : index
    %47 = vector.load %arg2[%46, %c0_20, %c0_21] : memref<8x4x16xbf16, #tpu.memory_space<vmem>>, vector<1x4x16xbf16>
    %48 = vector.shape_cast %47 : vector<1x4x16xbf16> to vector<4x16xbf16>
    %cst_22 = arith.constant dense<0.000000e+00> : vector<4x384xf32>
    %49 = tpu.matmul %48, %3, %cst_22 {dimension_numbers = #tpu.dot_dimension_numbers<[1], [0], [0], [1], [0, 0, 1, 1], [], []>} : vector<4x16xbf16>, vector<16x384xbf16>, vector<4x384xf32> -> vector<4x384xf32>
    %50 = arith.addf %49, %7 : vector<4x384xf32>
    %51 = arith.truncf %41 : vector<4x128xf32> to vector<4x128xbf16>
    %cst_23 = arith.constant dense<0.000000e+00> : vector<4x384xf32>
    %52 = tpu.matmul %51, %4, %cst_23 {dimension_numbers = #tpu.dot_dimension_numbers<[1], [0], [0], [1], [0, 0, 1, 1], [], []>} : vector<4x128xbf16>, vector<128x384xbf16>, vector<4x384xf32> -> vector<4x384xf32>
    %53 = vector.extract_strided_slice %50 {offsets = [0, 0], sizes = [4, 256], strides = [1, 1]} : vector<4x384xf32> to vector<4x256xf32>
    %54 = vector.extract_strided_slice %52 {offsets = [0, 0], sizes = [4, 256], strides = [1, 1]} : vector<4x384xf32> to vector<4x256xf32>
    %55 = arith.addf %53, %54 : vector<4x256xf32>
    %cst_24 = arith.constant 5.000000e-01 : f32
    %56 = vector.broadcast %cst_24 : f32 to vector<4x256xf32>
    %57 = arith.mulf %56, %55 : vector<4x256xf32>
    %58 = math.tanh %57 : vector<4x256xf32>
    %cst_25 = arith.constant 5.000000e-01 : f32
    %59 = vector.broadcast %cst_25 : f32 to vector<4x256xf32>
    %60 = arith.mulf %59, %58 : vector<4x256xf32>
    %cst_26 = arith.constant 5.000000e-01 : f32
    %61 = vector.broadcast %cst_26 : f32 to vector<4x256xf32>
    %62 = arith.addf %60, %61 : vector<4x256xf32>
    %63 = vector.extract_strided_slice %62 {offsets = [0, 0], sizes = [4, 128], strides = [1, 1]} : vector<4x256xf32> to vector<4x128xf32>
    %64 = vector.extract_strided_slice %62 {offsets = [0, 128], sizes = [4, 128], strides = [1, 1]} : vector<4x256xf32> to vector<4x128xf32>
    %65 = vector.extract_strided_slice %50 {offsets = [0, 256], sizes = [4, 128], strides = [1, 1]} : vector<4x384xf32> to vector<4x128xf32>
    %66 = vector.extract_strided_slice %52 {offsets = [0, 256], sizes = [4, 128], strides = [1, 1]} : vector<4x384xf32> to vector<4x128xf32>
    %67 = arith.addf %66, %10 : vector<4x128xf32>
    %68 = arith.mulf %63, %67 : vector<4x128xf32>
    %69 = arith.addf %65, %68 : vector<4x128xf32>
    %cst_27 = arith.constant 1.000000e+00 : f32
    %70 = vector.broadcast %cst_27 : f32 to vector<4x128xf32>
    %71 = arith.subf %70, %64 : vector<4x128xf32>
    %72 = math.tanh %69 : vector<4x128xf32>
    %73 = arith.subf %72, %41 : vector<4x128xf32>
    %74 = arith.mulf %71, %73 : vector<4x128xf32>
    %75 = arith.addf %41, %74 : vector<4x128xf32>
    %76 = arith.index_cast %c1_i32 : i32 to index
    %c0_28 = arith.constant 0 : index
    %c0_29 = arith.constant 0 : index
    %77 = vector.load %arg10[%76, %c0_28, %c0_29] : memref<8x4x128xf32, #tpu.memory_space<vmem>>, vector<1x4x128xf32>
    %78 = vector.shape_cast %77 : vector<1x4x128xf32> to vector<4x128xf32>
    %79 = vector.shape_cast %75 : vector<4x128xf32> to vector<1x4x128xf32>
    tpu.vector_store %arg10[%76, %c0_28, %c0_29], %79 {strides = array<i32>} : memref<8x4x128xf32, #tpu.memory_space<vmem>>, vector<1x4x128xf32>,
    %c2_i32 = arith.constant 2 : i32
    %80 = arith.index_cast %c2_i32 : i32 to index
    %c0_30 = arith.constant 0 : index
    %c0_31 = arith.constant 0 : index
    %81 = vector.load %arg2[%80, %c0_30, %c0_31] : memref<8x4x16xbf16, #tpu.memory_space<vmem>>, vector<1x4x16xbf16>
    %82 = vector.shape_cast %81 : vector<1x4x16xbf16> to vector<4x16xbf16>
    %cst_32 = arith.constant dense<0.000000e+00> : vector<4x384xf32>
    %83 = tpu.matmul %82, %3, %cst_32 {dimension_numbers = #tpu.dot_dimension_numbers<[1], [0], [0], [1], [0, 0, 1, 1], [], []>} : vector<4x16xbf16>, vector<16x384xbf16>, vector<4x384xf32> -> vector<4x384xf32>
    %84 = arith.addf %83, %7 : vector<4x384xf32>
    %85 = arith.truncf %75 : vector<4x128xf32> to vector<4x128xbf16>
    %cst_33 = arith.constant dense<0.000000e+00> : vector<4x384xf32>
    %86 = tpu.matmul %85, %4, %cst_33 {dimension_numbers = #tpu.dot_dimension_numbers<[1], [0], [0], [1], [0, 0, 1, 1], [], []>} : vector<4x128xbf16>, vector<128x384xbf16>, vector<4x384xf32> -> vector<4x384xf32>
    %87 = vector.extract_strided_slice %84 {offsets = [0, 0], sizes = [4, 256], strides = [1, 1]} : vector<4x384xf32> to vector<4x256xf32>
    %88 = vector.extract_strided_slice %86 {offsets = [0, 0], sizes = [4, 256], strides = [1, 1]} : vector<4x384xf32> to vector<4x256xf32>
    %89 = arith.addf %87, %88 : vector<4x256xf32>
    %cst_34 = arith.constant 5.000000e-01 : f32
    %90 = vector.broadcast %cst_34 : f32 to vector<4x256xf32>
    %91 = arith.mulf %90, %89 : vector<4x256xf32>
    %92 = math.tanh %91 : vector<4x256xf32>
    %cst_35 = arith.constant 5.000000e-01 : f32
    %93 = vector.broadcast %cst_35 : f32 to vector<4x256xf32>
    %94 = arith.mulf %93, %92 : vector<4x256xf32>
    %cst_36 = arith.constant 5.000000e-01 : f32
    %95 = vector.broadcast %cst_36 : f32 to vector<4x256xf32>
    %96 = arith.addf %94, %95 : vector<4x256xf32>
    %97 = vector.extract_strided_slice %96 {offsets = [0, 0], sizes = [4, 128], strides = [1, 1]} : vector<4x256xf32> to vector<4x128xf32>
    %98 = vector.extract_strided_slice %96 {offsets = [0, 128], sizes = [4, 128], strides = [1, 1]} : vector<4x256xf32> to vector<4x128xf32>
    %99 = vector.extract_strided_slice %84 {offsets = [0, 256], sizes = [4, 128], strides = [1, 1]} : vector<4x384xf32> to vector<4x128xf32>
    %100 = vector.extract_strided_slice %86 {offsets = [0, 256], sizes = [4, 128], strides = [1, 1]} : vector<4x384xf32> to vector<4x128xf32>
    %101 = arith.addf %100, %10 : vector<4x128xf32>
    %102 = arith.mulf %97, %101 : vector<4x128xf32>
    %103 = arith.addf %99, %102 : vector<4x128xf32>
    %cst_37 = arith.constant 1.000000e+00 : f32
    %104 = vector.broadcast %cst_37 : f32 to vector<4x128xf32>
    %105 = arith.subf %104, %98 : vector<4x128xf32>
    %106 = math.tanh %103 : vector<4x128xf32>
    %107 = arith.subf %106, %75 : vector<4x128xf32>
    %108 = arith.mulf %105, %107 : vector<4x128xf32>
    %109 = arith.addf %75, %108 : vector<4x128xf32>
    %110 = arith.index_cast %c2_i32 : i32 to index
    %c0_38 = arith.constant 0 : index
    %c0_39 = arith.constant 0 : index
    %111 = vector.load %arg10[%110, %c0_38, %c0_39] : memref<8x4x128xf32, #tpu.memory_space<vmem>>, vector<1x4x128xf32>
    %112 = vector.shape_cast %111 : vector<1x4x128xf32> to vector<4x128xf32>
    %113 = vector.shape_cast %109 : vector<4x128xf32> to vector<1x4x128xf32>
    tpu.vector_store %arg10[%110, %c0_38, %c0_39], %113 {strides = array<i32>} : memref<8x4x128xf32, #tpu.memory_space<vmem>>, vector<1x4x128xf32>,
    %c3_i32 = arith.constant 3 : i32
    %114 = arith.index_cast %c3_i32 : i32 to index
    %c0_40 = arith.constant 0 : index
    %c0_41 = arith.constant 0 : index
    %115 = vector.load %arg2[%114, %c0_40, %c0_41] : memref<8x4x16xbf16, #tpu.memory_space<vmem>>, vector<1x4x16xbf16>
    %116 = vector.shape_cast %115 : vector<1x4x16xbf16> to vector<4x16xbf16>
    %cst_42 = arith.constant dense<0.000000e+00> : vector<4x384xf32>
    %117 = tpu.matmul %116, %3, %cst_42 {dimension_numbers = #tpu.dot_dimension_numbers<[1], [0], [0], [1], [0, 0, 1, 1], [], []>} : vector<4x16xbf16>, vector<16x384xbf16>, vector<4x384xf32> -> vector<4x384xf32>
    %118 = arith.addf %117, %7 : vector<4x384xf32>
    %119 = arith.truncf %109 : vector<4x128xf32> to vector<4x128xbf16>
    %cst_43 = arith.constant dense<0.000000e+00> : vector<4x384xf32>
    %120 = tpu.matmul %119, %4, %cst_43 {dimension_numbers = #tpu.dot_dimension_numbers<[1], [0], [0], [1], [0, 0, 1, 1], [], []>} : vector<4x128xbf16>, vector<128x384xbf16>, vector<4x384xf32> -> vector<4x384xf32>
    %121 = vector.extract_strided_slice %118 {offsets = [0, 0], sizes = [4, 256], strides = [1, 1]} : vector<4x384xf32> to vector<4x256xf32>
    %122 = vector.extract_strided_slice %120 {offsets = [0, 0], sizes = [4, 256], strides = [1, 1]} : vector<4x384xf32> to vector<4x256xf32>
    %123 = arith.addf %121, %122 : vector<4x256xf32>
    %cst_44 = arith.constant 5.000000e-01 : f32
    %124 = vector.broadcast %cst_44 : f32 to vector<4x256xf32>
    %125 = arith.mulf %124, %123 : vector<4x256xf32>
    %126 = math.tanh %125 : vector<4x256xf32>
    %cst_45 = arith.constant 5.000000e-01 : f32
    %127 = vector.broadcast %cst_45 : f32 to vector<4x256xf32>
    %128 = arith.mulf %127, %126 : vector<4x256xf32>
    %cst_46 = arith.constant 5.000000e-01 : f32
    %129 = vector.broadcast %cst_46 : f32 to vector<4x256xf32>
    %130 = arith.addf %128, %129 : vector<4x256xf32>
    %131 = vector.extract_strided_slice %130 {offsets = [0, 0], sizes = [4, 128], strides = [1, 1]} : vector<4x256xf32> to vector<4x128xf32>
    %132 = vector.extract_strided_slice %130 {offsets = [0, 128], sizes = [4, 128], strides = [1, 1]} : vector<4x256xf32> to vector<4x128xf32>
    %133 = vector.extract_strided_slice %118 {offsets = [0, 256], sizes = [4, 128], strides = [1, 1]} : vector<4x384xf32> to vector<4x128xf32>
    %134 = vector.extract_strided_slice %120 {offsets = [0, 256], sizes = [4, 128], strides = [1, 1]} : vector<4x384xf32> to vector<4x128xf32>
    %135 = arith.addf %134, %10 : vector<4x128xf32>
    %136 = arith.mulf %131, %135 : vector<4x128xf32>
    %137 = arith.addf %133, %136 : vector<4x128xf32>
    %cst_47 = arith.constant 1.000000e+00 : f32
    %138 = vector.broadcast %cst_47 : f32 to vector<4x128xf32>
    %139 = arith.subf %138, %132 : vector<4x128xf32>
    %140 = math.tanh %137 : vector<4x128xf32>
    %141 = arith.subf %140, %109 : vector<4x128xf32>
    %142 = arith.mulf %139, %141 : vector<4x128xf32>
    %143 = arith.addf %109, %142 : vector<4x128xf32>
    %144 = arith.index_cast %c3_i32 : i32 to index
    %c0_48 = arith.constant 0 : index
    %c0_49 = arith.constant 0 : index
    %145 = vector.load %arg10[%144, %c0_48, %c0_49] : memref<8x4x128xf32, #tpu.memory_space<vmem>>, vector<1x4x128xf32>
    %146 = vector.shape_cast %145 : vector<1x4x128xf32> to vector<4x128xf32>
    %147 = vector.shape_cast %143 : vector<4x128xf32> to vector<1x4x128xf32>
    tpu.vector_store %arg10[%144, %c0_48, %c0_49], %147 {strides = array<i32>} : memref<8x4x128xf32, #tpu.memory_space<vmem>>, vector<1x4x128xf32>,
    %c4_i32 = arith.constant 4 : i32
    %148 = arith.index_cast %c4_i32 : i32 to index
    %c0_50 = arith.constant 0 : index
    %c0_51 = arith.constant 0 : index
    %149 = vector.load %arg2[%148, %c0_50, %c0_51] : memref<8x4x16xbf16, #tpu.memory_space<vmem>>, vector<1x4x16xbf16>
    %150 = vector.shape_cast %149 : vector<1x4x16xbf16> to vector<4x16xbf16>
    %cst_52 = arith.constant dense<0.000000e+00> : vector<4x384xf32>
    %151 = tpu.matmul %150, %3, %cst_52 {dimension_numbers = #tpu.dot_dimension_numbers<[1], [0], [0], [1], [0, 0, 1, 1], [], []>} : vector<4x16xbf16>, vector<16x384xbf16>, vector<4x384xf32> -> vector<4x384xf32>
    %152 = arith.addf %151, %7 : vector<4x384xf32>
    %153 = arith.truncf %143 : vector<4x128xf32> to vector<4x128xbf16>
    %cst_53 = arith.constant dense<0.000000e+00> : vector<4x384xf32>
    %154 = tpu.matmul %153, %4, %cst_53 {dimension_numbers = #tpu.dot_dimension_numbers<[1], [0], [0], [1], [0, 0, 1, 1], [], []>} : vector<4x128xbf16>, vector<128x384xbf16>, vector<4x384xf32> -> vector<4x384xf32>
    %155 = vector.extract_strided_slice %152 {offsets = [0, 0], sizes = [4, 256], strides = [1, 1]} : vector<4x384xf32> to vector<4x256xf32>
    %156 = vector.extract_strided_slice %154 {offsets = [0, 0], sizes = [4, 256], strides = [1, 1]} : vector<4x384xf32> to vector<4x256xf32>
    %157 = arith.addf %155, %156 : vector<4x256xf32>
    %cst_54 = arith.constant 5.000000e-01 : f32
    %158 = vector.broadcast %cst_54 : f32 to vector<4x256xf32>
    %159 = arith.mulf %158, %157 : vector<4x256xf32>
    %160 = math.tanh %159 : vector<4x256xf32>
    %cst_55 = arith.constant 5.000000e-01 : f32
    %161 = vector.broadcast %cst_55 : f32 to vector<4x256xf32>
    %162 = arith.mulf %161, %160 : vector<4x256xf32>
    %cst_56 = arith.constant 5.000000e-01 : f32
    %163 = vector.broadcast %cst_56 : f32 to vector<4x256xf32>
    %164 = arith.addf %162, %163 : vector<4x256xf32>
    %165 = vector.extract_strided_slice %164 {offsets = [0, 0], sizes = [4, 128], strides = [1, 1]} : vector<4x256xf32> to vector<4x128xf32>
    %166 = vector.extract_strided_slice %164 {offsets = [0, 128], sizes = [4, 128], strides = [1, 1]} : vector<4x256xf32> to vector<4x128xf32>
    %167 = vector.extract_strided_slice %152 {offsets = [0, 256], sizes = [4, 128], strides = [1, 1]} : vector<4x384xf32> to vector<4x128xf32>
    %168 = vector.extract_strided_slice %154 {offsets = [0, 256], sizes = [4, 128], strides = [1, 1]} : vector<4x384xf32> to vector<4x128xf32>
    %169 = arith.addf %168, %10 : vector<4x128xf32>
    %170 = arith.mulf %165, %169 : vector<4x128xf32>
    %171 = arith.addf %167, %170 : vector<4x128xf32>
    %cst_57 = arith.constant 1.000000e+00 : f32
    %172 = vector.broadcast %cst_57 : f32 to vector<4x128xf32>
    %173 = arith.subf %172, %166 : vector<4x128xf32>
    %174 = math.tanh %171 : vector<4x128xf32>
    %175 = arith.subf %174, %143 : vector<4x128xf32>
    %176 = arith.mulf %173, %175 : vector<4x128xf32>
    %177 = arith.addf %143, %176 : vector<4x128xf32>
    %178 = arith.index_cast %c4_i32 : i32 to index
    %c0_58 = arith.constant 0 : index
    %c0_59 = arith.constant 0 : index
    %179 = vector.load %arg10[%178, %c0_58, %c0_59] : memref<8x4x128xf32, #tpu.memory_space<vmem>>, vector<1x4x128xf32>
    %180 = vector.shape_cast %179 : vector<1x4x128xf32> to vector<4x128xf32>
    %181 = vector.shape_cast %177 : vector<4x128xf32> to vector<1x4x128xf32>
    tpu.vector_store %arg10[%178, %c0_58, %c0_59], %181 {strides = array<i32>} : memref<8x4x128xf32, #tpu.memory_space<vmem>>, vector<1x4x128xf32>,
    %c5_i32 = arith.constant 5 : i32
    %182 = arith.index_cast %c5_i32 : i32 to index
    %c0_60 = arith.constant 0 : index
    %c0_61 = arith.constant 0 : index
    %183 = vector.load %arg2[%182, %c0_60, %c0_61] : memref<8x4x16xbf16, #tpu.memory_space<vmem>>, vector<1x4x16xbf16>
    %184 = vector.shape_cast %183 : vector<1x4x16xbf16> to vector<4x16xbf16>
    %cst_62 = arith.constant dense<0.000000e+00> : vector<4x384xf32>
    %185 = tpu.matmul %184, %3, %cst_62 {dimension_numbers = #tpu.dot_dimension_numbers<[1], [0], [0], [1], [0, 0, 1, 1], [], []>} : vector<4x16xbf16>, vector<16x384xbf16>, vector<4x384xf32> -> vector<4x384xf32>
    %186 = arith.addf %185, %7 : vector<4x384xf32>
    %187 = arith.truncf %177 : vector<4x128xf32> to vector<4x128xbf16>
    %cst_63 = arith.constant dense<0.000000e+00> : vector<4x384xf32>
    %188 = tpu.matmul %187, %4, %cst_63 {dimension_numbers = #tpu.dot_dimension_numbers<[1], [0], [0], [1], [0, 0, 1, 1], [], []>} : vector<4x128xbf16>, vector<128x384xbf16>, vector<4x384xf32> -> vector<4x384xf32>
    %189 = vector.extract_strided_slice %186 {offsets = [0, 0], sizes = [4, 256], strides = [1, 1]} : vector<4x384xf32> to vector<4x256xf32>
    %190 = vector.extract_strided_slice %188 {offsets = [0, 0], sizes = [4, 256], strides = [1, 1]} : vector<4x384xf32> to vector<4x256xf32>
    %191 = arith.addf %189, %190 : vector<4x256xf32>
    %cst_64 = arith.constant 5.000000e-01 : f32
    %192 = vector.broadcast %cst_64 : f32 to vector<4x256xf32>
    %193 = arith.mulf %192, %191 : vector<4x256xf32>
    %194 = math.tanh %193 : vector<4x256xf32>
    %cst_65 = arith.constant 5.000000e-01 : f32
    %195 = vector.broadcast %cst_65 : f32 to vector<4x256xf32>
    %196 = arith.mulf %195, %194 : vector<4x256xf32>
    %cst_66 = arith.constant 5.000000e-01 : f32
    %197 = vector.broadcast %cst_66 : f32 to vector<4x256xf32>
    %198 = arith.addf %196, %197 : vector<4x256xf32>
    %199 = vector.extract_strided_slice %198 {offsets = [0, 0], sizes = [4, 128], strides = [1, 1]} : vector<4x256xf32> to vector<4x128xf32>
    %200 = vector.extract_strided_slice %198 {offsets = [0, 128], sizes = [4, 128], strides = [1, 1]} : vector<4x256xf32> to vector<4x128xf32>
    %201 = vector.extract_strided_slice %186 {offsets = [0, 256], sizes = [4, 128], strides = [1, 1]} : vector<4x384xf32> to vector<4x128xf32>
    %202 = vector.extract_strided_slice %188 {offsets = [0, 256], sizes = [4, 128], strides = [1, 1]} : vector<4x384xf32> to vector<4x128xf32>
    %203 = arith.addf %202, %10 : vector<4x128xf32>
    %204 = arith.mulf %199, %203 : vector<4x128xf32>
    %205 = arith.addf %201, %204 : vector<4x128xf32>
    %cst_67 = arith.constant 1.000000e+00 : f32
    %206 = vector.broadcast %cst_67 : f32 to vector<4x128xf32>
    %207 = arith.subf %206, %200 : vector<4x128xf32>
    %208 = math.tanh %205 : vector<4x128xf32>
    %209 = arith.subf %208, %177 : vector<4x128xf32>
    %210 = arith.mulf %207, %209 : vector<4x128xf32>
    %211 = arith.addf %177, %210 : vector<4x128xf32>
    %212 = arith.index_cast %c5_i32 : i32 to index
    %c0_68 = arith.constant 0 : index
    %c0_69 = arith.constant 0 : index
    %213 = vector.load %arg10[%212, %c0_68, %c0_69] : memref<8x4x128xf32, #tpu.memory_space<vmem>>, vector<1x4x128xf32>
    %214 = vector.shape_cast %213 : vector<1x4x128xf32> to vector<4x128xf32>
    %215 = vector.shape_cast %211 : vector<4x128xf32> to vector<1x4x128xf32>
    tpu.vector_store %arg10[%212, %c0_68, %c0_69], %215 {strides = array<i32>} : memref<8x4x128xf32, #tpu.memory_space<vmem>>, vector<1x4x128xf32>,
    %c6_i32 = arith.constant 6 : i32
    %216 = arith.index_cast %c6_i32 : i32 to index
    %c0_70 = arith.constant 0 : index
    %c0_71 = arith.constant 0 : index
    %217 = vector.load %arg2[%216, %c0_70, %c0_71] : memref<8x4x16xbf16, #tpu.memory_space<vmem>>, vector<1x4x16xbf16>
    %218 = vector.shape_cast %217 : vector<1x4x16xbf16> to vector<4x16xbf16>
    %cst_72 = arith.constant dense<0.000000e+00> : vector<4x384xf32>
    %219 = tpu.matmul %218, %3, %cst_72 {dimension_numbers = #tpu.dot_dimension_numbers<[1], [0], [0], [1], [0, 0, 1, 1], [], []>} : vector<4x16xbf16>, vector<16x384xbf16>, vector<4x384xf32> -> vector<4x384xf32>
    %220 = arith.addf %219, %7 : vector<4x384xf32>
    %221 = arith.truncf %211 : vector<4x128xf32> to vector<4x128xbf16>
    %cst_73 = arith.constant dense<0.000000e+00> : vector<4x384xf32>
    %222 = tpu.matmul %221, %4, %cst_73 {dimension_numbers = #tpu.dot_dimension_numbers<[1], [0], [0], [1], [0, 0, 1, 1], [], []>} : vector<4x128xbf16>, vector<128x384xbf16>, vector<4x384xf32> -> vector<4x384xf32>
    %223 = vector.extract_strided_slice %220 {offsets = [0, 0], sizes = [4, 256], strides = [1, 1]} : vector<4x384xf32> to vector<4x256xf32>
    %224 = vector.extract_strided_slice %222 {offsets = [0, 0], sizes = [4, 256], strides = [1, 1]} : vector<4x384xf32> to vector<4x256xf32>
    %225 = arith.addf %223, %224 : vector<4x256xf32>
    %cst_74 = arith.constant 5.000000e-01 : f32
    %226 = vector.broadcast %cst_74 : f32 to vector<4x256xf32>
    %227 = arith.mulf %226, %225 : vector<4x256xf32>
    %228 = math.tanh %227 : vector<4x256xf32>
    %cst_75 = arith.constant 5.000000e-01 : f32
    %229 = vector.broadcast %cst_75 : f32 to vector<4x256xf32>
    %230 = arith.mulf %229, %228 : vector<4x256xf32>
    %cst_76 = arith.constant 5.000000e-01 : f32
    %231 = vector.broadcast %cst_76 : f32 to vector<4x256xf32>
    %232 = arith.addf %230, %231 : vector<4x256xf32>
    %233 = vector.extract_strided_slice %232 {offsets = [0, 0], sizes = [4, 128], strides = [1, 1]} : vector<4x256xf32> to vector<4x128xf32>
    %234 = vector.extract_strided_slice %232 {offsets = [0, 128], sizes = [4, 128], strides = [1, 1]} : vector<4x256xf32> to vector<4x128xf32>
    %235 = vector.extract_strided_slice %220 {offsets = [0, 256], sizes = [4, 128], strides = [1, 1]} : vector<4x384xf32> to vector<4x128xf32>
    %236 = vector.extract_strided_slice %222 {offsets = [0, 256], sizes = [4, 128], strides = [1, 1]} : vector<4x384xf32> to vector<4x128xf32>
    %237 = arith.addf %236, %10 : vector<4x128xf32>
    %238 = arith.mulf %233, %237 : vector<4x128xf32>
    %239 = arith.addf %235, %238 : vector<4x128xf32>
    %cst_77 = arith.constant 1.000000e+00 : f32
    %240 = vector.broadcast %cst_77 : f32 to vector<4x128xf32>
    %241 = arith.subf %240, %234 : vector<4x128xf32>
    %242 = math.tanh %239 : vector<4x128xf32>
    %243 = arith.subf %242, %211 : vector<4x128xf32>
    %244 = arith.mulf %241, %243 : vector<4x128xf32>
    %245 = arith.addf %211, %244 : vector<4x128xf32>
    %246 = arith.index_cast %c6_i32 : i32 to index
    %c0_78 = arith.constant 0 : index
    %c0_79 = arith.constant 0 : index
    %247 = vector.load %arg10[%246, %c0_78, %c0_79] : memref<8x4x128xf32, #tpu.memory_space<vmem>>, vector<1x4x128xf32>
    %248 = vector.shape_cast %247 : vector<1x4x128xf32> to vector<4x128xf32>
    %249 = vector.shape_cast %245 : vector<4x128xf32> to vector<1x4x128xf32>
    tpu.vector_store %arg10[%246, %c0_78, %c0_79], %249 {strides = array<i32>} : memref<8x4x128xf32, #tpu.memory_space<vmem>>, vector<1x4x128xf32>,
    %c7_i32 = arith.constant 7 : i32
    %250 = arith.index_cast %c7_i32 : i32 to index
    %c0_80 = arith.constant 0 : index
    %c0_81 = arith.constant 0 : index
    %251 = vector.load %arg2[%250, %c0_80, %c0_81] : memref<8x4x16xbf16, #tpu.memory_space<vmem>>, vector<1x4x16xbf16>
    %252 = vector.shape_cast %251 : vector<1x4x16xbf16> to vector<4x16xbf16>
    %cst_82 = arith.constant dense<0.000000e+00> : vector<4x384xf32>
    %253 = tpu.matmul %252, %3, %cst_82 {dimension_numbers = #tpu.dot_dimension_numbers<[1], [0], [0], [1], [0, 0, 1, 1], [], []>} : vector<4x16xbf16>, vector<16x384xbf16>, vector<4x384xf32> -> vector<4x384xf32>
    %254 = arith.addf %253, %7 : vector<4x384xf32>
    %255 = arith.truncf %245 : vector<4x128xf32> to vector<4x128xbf16>
    %cst_83 = arith.constant dense<0.000000e+00> : vector<4x384xf32>
    %256 = tpu.matmul %255, %4, %cst_83 {dimension_numbers = #tpu.dot_dimension_numbers<[1], [0], [0], [1], [0, 0, 1, 1], [], []>} : vector<4x128xbf16>, vector<128x384xbf16>, vector<4x384xf32> -> vector<4x384xf32>
    %257 = vector.extract_strided_slice %254 {offsets = [0, 0], sizes = [4, 256], strides = [1, 1]} : vector<4x384xf32> to vector<4x256xf32>
    %258 = vector.extract_strided_slice %256 {offsets = [0, 0], sizes = [4, 256], strides = [1, 1]} : vector<4x384xf32> to vector<4x256xf32>
    %259 = arith.addf %257, %258 : vector<4x256xf32>
    %cst_84 = arith.constant 5.000000e-01 : f32
    %260 = vector.broadcast %cst_84 : f32 to vector<4x256xf32>
    %261 = arith.mulf %260, %259 : vector<4x256xf32>
    %262 = math.tanh %261 : vector<4x256xf32>
    %cst_85 = arith.constant 5.000000e-01 : f32
    %263 = vector.broadcast %cst_85 : f32 to vector<4x256xf32>
    %264 = arith.mulf %263, %262 : vector<4x256xf32>
    %cst_86 = arith.constant 5.000000e-01 : f32
    %265 = vector.broadcast %cst_86 : f32 to vector<4x256xf32>
    %266 = arith.addf %264, %265 : vector<4x256xf32>
    %267 = vector.extract_strided_slice %266 {offsets = [0, 0], sizes = [4, 128], strides = [1, 1]} : vector<4x256xf32> to vector<4x128xf32>
    %268 = vector.extract_strided_slice %266 {offsets = [0, 128], sizes = [4, 128], strides = [1, 1]} : vector<4x256xf32> to vector<4x128xf32>
    %269 = vector.extract_strided_slice %254 {offsets = [0, 256], sizes = [4, 128], strides = [1, 1]} : vector<4x384xf32> to vector<4x128xf32>
    %270 = vector.extract_strided_slice %256 {offsets = [0, 256], sizes = [4, 128], strides = [1, 1]} : vector<4x384xf32> to vector<4x128xf32>
    %271 = arith.addf %270, %10 : vector<4x128xf32>
    %272 = arith.mulf %267, %271 : vector<4x128xf32>
    %273 = arith.addf %269, %272 : vector<4x128xf32>
    %cst_87 = arith.constant 1.000000e+00 : f32
    %274 = vector.broadcast %cst_87 : f32 to vector<4x128xf32>
    %275 = arith.subf %274, %268 : vector<4x128xf32>
    %276 = math.tanh %273 : vector<4x128xf32>
    %277 = arith.subf %276, %245 : vector<4x128xf32>
    %278 = arith.mulf %275, %277 : vector<4x128xf32>
    %279 = arith.addf %245, %278 : vector<4x128xf32>
    %280 = arith.index_cast %c7_i32 : i32 to index
    %c0_88 = arith.constant 0 : index
    %c0_89 = arith.constant 0 : index
    %281 = vector.load %arg10[%280, %c0_88, %c0_89] : memref<8x4x128xf32, #tpu.memory_space<vmem>>, vector<1x4x128xf32>
    %282 = vector.shape_cast %281 : vector<1x4x128xf32> to vector<4x128xf32>
    %283 = vector.shape_cast %279 : vector<4x128xf32> to vector<1x4x128xf32>
    tpu.vector_store %arg10[%280, %c0_88, %c0_89], %283 {strides = array<i32>} : memref<8x4x128xf32, #tpu.memory_space<vmem>>, vector<1x4x128xf32>,
    %c8_i32 = arith.constant 8 : i32
    %c0_90 = arith.constant 0 : index
    %c0_91 = arith.constant 0 : index
    %284 = vector.load %arg9[%c0_90, %c0_91] : memref<4x128xf32, #tpu.memory_space<vmem>>, vector<4x128xf32>
    tpu.vector_store %arg9[%c0_90, %c0_91], %279 {strides = array<i32>} : memref<4x128xf32, #tpu.memory_space<vmem>>, vector<4x128xf32>,
    %c0_92 = arith.constant 0 : index
    %c0_93 = arith.constant 0 : index
    %c0_94 = arith.constant 0 : index
    %285 = vector.load %arg10[%c0_92, %c0_93, %c0_94] : memref<8x4x128xf32, #tpu.memory_space<vmem>>, vector<1x4x128xf32>
    %286 = vector.shape_cast %285 : vector<1x4x128xf32> to vector<4x128xf32>
    %c0_95 = arith.constant 0 : index
    %c0_96 = arith.constant 0 : index
    %c0_97 = arith.constant 0 : index
    %287 = vector.load %arg8[%c0_95, %c0_96, %c0_97] : memref<4x8x128xf32, #tpu.memory_space<vmem>>, vector<4x1x128xf32>
    %288 = vector.shape_cast %287 : vector<4x1x128xf32> to vector<4x128xf32>
    %289 = vector.shape_cast %286 : vector<4x128xf32> to vector<4x1x128xf32>
    tpu.vector_store %arg8[%c0_95, %c0_96, %c0_97], %289 {strides = array<i32>} : memref<4x8x128xf32, #tpu.memory_space<vmem>>, vector<4x1x128xf32>,
    %c1 = arith.constant 1 : index
    %c0_98 = arith.constant 0 : index
    %c0_99 = arith.constant 0 : index
    %290 = vector.load %arg10[%c1, %c0_98, %c0_99] : memref<8x4x128xf32, #tpu.memory_space<vmem>>, vector<1x4x128xf32>
    %291 = vector.shape_cast %290 : vector<1x4x128xf32> to vector<4x128xf32>
    %c0_100 = arith.constant 0 : index
    %c1_101 = arith.constant 1 : index
    %c0_102 = arith.constant 0 : index
    %292 = vector.load %arg8[%c0_100, %c1_101, %c0_102] : memref<4x8x128xf32, #tpu.memory_space<vmem>>, vector<4x1x128xf32>
    %293 = vector.shape_cast %292 : vector<4x1x128xf32> to vector<4x128xf32>
    %294 = vector.shape_cast %291 : vector<4x128xf32> to vector<4x1x128xf32>
    tpu.vector_store %arg8[%c0_100, %c1_101, %c0_102], %294 {strides = array<i32>} : memref<4x8x128xf32, #tpu.memory_space<vmem>>, vector<4x1x128xf32>,
    %c2 = arith.constant 2 : index
    %c0_103 = arith.constant 0 : index
    %c0_104 = arith.constant 0 : index
    %295 = vector.load %arg10[%c2, %c0_103, %c0_104] : memref<8x4x128xf32, #tpu.memory_space<vmem>>, vector<1x4x128xf32>
    %296 = vector.shape_cast %295 : vector<1x4x128xf32> to vector<4x128xf32>
    %c0_105 = arith.constant 0 : index
    %c2_106 = arith.constant 2 : index
    %c0_107 = arith.constant 0 : index
    %297 = vector.load %arg8[%c0_105, %c2_106, %c0_107] : memref<4x8x128xf32, #tpu.memory_space<vmem>>, vector<4x1x128xf32>
    %298 = vector.shape_cast %297 : vector<4x1x128xf32> to vector<4x128xf32>
    %299 = vector.shape_cast %296 : vector<4x128xf32> to vector<4x1x128xf32>
    tpu.vector_store %arg8[%c0_105, %c2_106, %c0_107], %299 {strides = array<i32>} : memref<4x8x128xf32, #tpu.memory_space<vmem>>, vector<4x1x128xf32>,
    %c3 = arith.constant 3 : index
    %c0_108 = arith.constant 0 : index
    %c0_109 = arith.constant 0 : index
    %300 = vector.load %arg10[%c3, %c0_108, %c0_109] : memref<8x4x128xf32, #tpu.memory_space<vmem>>, vector<1x4x128xf32>
    %301 = vector.shape_cast %300 : vector<1x4x128xf32> to vector<4x128xf32>
    %c0_110 = arith.constant 0 : index
    %c3_111 = arith.constant 3 : index
    %c0_112 = arith.constant 0 : index
    %302 = vector.load %arg8[%c0_110, %c3_111, %c0_112] : memref<4x8x128xf32, #tpu.memory_space<vmem>>, vector<4x1x128xf32>
    %303 = vector.shape_cast %302 : vector<4x1x128xf32> to vector<4x128xf32>
    %304 = vector.shape_cast %301 : vector<4x128xf32> to vector<4x1x128xf32>
    tpu.vector_store %arg8[%c0_110, %c3_111, %c0_112], %304 {strides = array<i32>} : memref<4x8x128xf32, #tpu.memory_space<vmem>>, vector<4x1x128xf32>,
    %c4 = arith.constant 4 : index
    %c0_113 = arith.constant 0 : index
    %c0_114 = arith.constant 0 : index
    %305 = vector.load %arg10[%c4, %c0_113, %c0_114] : memref<8x4x128xf32, #tpu.memory_space<vmem>>, vector<1x4x128xf32>
    %306 = vector.shape_cast %305 : vector<1x4x128xf32> to vector<4x128xf32>
    %c0_115 = arith.constant 0 : index
    %c4_116 = arith.constant 4 : index
    %c0_117 = arith.constant 0 : index
    %307 = vector.load %arg8[%c0_115, %c4_116, %c0_117] : memref<4x8x128xf32, #tpu.memory_space<vmem>>, vector<4x1x128xf32>
    %308 = vector.shape_cast %307 : vector<4x1x128xf32> to vector<4x128xf32>
    %309 = vector.shape_cast %306 : vector<4x128xf32> to vector<4x1x128xf32>
    tpu.vector_store %arg8[%c0_115, %c4_116, %c0_117], %309 {strides = array<i32>} : memref<4x8x128xf32, #tpu.memory_space<vmem>>, vector<4x1x128xf32>,
    %c5 = arith.constant 5 : index
    %c0_118 = arith.constant 0 : index
    %c0_119 = arith.constant 0 : index
    %310 = vector.load %arg10[%c5, %c0_118, %c0_119] : memref<8x4x128xf32, #tpu.memory_space<vmem>>, vector<1x4x128xf32>
    %311 = vector.shape_cast %310 : vector<1x4x128xf32> to vector<4x128xf32>
    %c0_120 = arith.constant 0 : index
    %c5_121 = arith.constant 5 : index
    %c0_122 = arith.constant 0 : index
    %312 = vector.load %arg8[%c0_120, %c5_121, %c0_122] : memref<4x8x128xf32, #tpu.memory_space<vmem>>, vector<4x1x128xf32>
    %313 = vector.shape_cast %312 : vector<4x1x128xf32> to vector<4x128xf32>
    %314 = vector.shape_cast %311 : vector<4x128xf32> to vector<4x1x128xf32>
    tpu.vector_store %arg8[%c0_120, %c5_121, %c0_122], %314 {strides = array<i32>} : memref<4x8x128xf32, #tpu.memory_space<vmem>>, vector<4x1x128xf32>,
    %c6 = arith.constant 6 : index
    %c0_123 = arith.constant 0 : index
    %c0_124 = arith.constant 0 : index
    %315 = vector.load %arg10[%c6, %c0_123, %c0_124] : memref<8x4x128xf32, #tpu.memory_space<vmem>>, vector<1x4x128xf32>
    %316 = vector.shape_cast %315 : vector<1x4x128xf32> to vector<4x128xf32>
    %c0_125 = arith.constant 0 : index
    %c6_126 = arith.constant 6 : index
    %c0_127 = arith.constant 0 : index
    %317 = vector.load %arg8[%c0_125, %c6_126, %c0_127] : memref<4x8x128xf32, #tpu.memory_space<vmem>>, vector<4x1x128xf32>
    %318 = vector.shape_cast %317 : vector<4x1x128xf32> to vector<4x128xf32>
    %319 = vector.shape_cast %316 : vector<4x128xf32> to vector<4x1x128xf32>
    tpu.vector_store %arg8[%c0_125, %c6_126, %c0_127], %319 {strides = array<i32>} : memref<4x8x128xf32, #tpu.memory_space<vmem>>, vector<4x1x128xf32>,
    %c7 = arith.constant 7 : index
    %c0_128 = arith.constant 0 : index
    %c0_129 = arith.constant 0 : index
    %320 = vector.load %arg10[%c7, %c0_128, %c0_129] : memref<8x4x128xf32, #tpu.memory_space<vmem>>, vector<1x4x128xf32>
    %321 = vector.shape_cast %320 : vector<1x4x128xf32> to vector<4x128xf32>
    %c0_130 = arith.constant 0 : index
    %c7_131 = arith.constant 7 : index
    %c0_132 = arith.constant 0 : index
    %322 = vector.load %arg8[%c0_130, %c7_131, %c0_132] : memref<4x8x128xf32, #tpu.memory_space<vmem>>, vector<4x1x128xf32>
    %323 = vector.shape_cast %322 : vector<4x1x128xf32> to vector<4x128xf32>
    %324 = vector.shape_cast %321 : vector<4x128xf32> to vector<4x1x128xf32>
    tpu.vector_store %arg8[%c0_130, %c7_131, %c0_132], %324 {strides = array<i32>} : memref<4x8x128xf32, #tpu.memory_space<vmem>>, vector<4x1x128xf32>,
    return
  }
  func.func @transform_0(%arg0: i32, %arg1: i32) -> (i32, i32, i32) {
    %c0_i32 = arith.constant 0 : i32
    %c0_i32_0 = arith.constant 0 : i32
    return %arg1, %arg0, %c0_i32 : i32, i32, i32
  }
  func.func @transform_1(%arg0: i32, %arg1: i32) -> (i32, i32) {
    %c0_i32 = arith.constant 0 : i32
    %c0_i32_0 = arith.constant 0 : i32
    return %arg0, %c0_i32 : i32, i32
  }
  func.func @transform_2(%arg0: i32, %arg1: i32) -> (i32, i32) {
    %c0_i32 = arith.constant 0 : i32
    %c0_i32_0 = arith.constant 0 : i32
    %c0_i32_1 = arith.constant 0 : i32
    return %c0_i32, %c0_i32_0 : i32, i32
  }
  func.func @transform_3(%arg0: i32, %arg1: i32) -> (i32, i32) {
    %c0_i32 = arith.constant 0 : i32
    %c0_i32_0 = arith.constant 0 : i32
    %c0_i32_1 = arith.constant 0 : i32
    return %c0_i32, %c0_i32_0 : i32, i32
  }
  func.func @transform_4(%arg0: i32, %arg1: i32) -> (i32, i32) {
    %c0_i32 = arith.constant 0 : i32
    %c0_i32_0 = arith.constant 0 : i32
    %c0_i32_1 = arith.constant 0 : i32
    return %c0_i32, %c0_i32_0 : i32, i32
  }
  func.func @transform_5(%arg0: i32, %arg1: i32) -> (i32, i32) {
    %c0_i32 = arith.constant 0 : i32
    %c0_i32_0 = arith.constant 0 : i32
    %c0_i32_1 = arith.constant 0 : i32
    return %c0_i32, %c0_i32_0 : i32, i32
  }
  func.func @transform_6(%arg0: i32, %arg1: i32) -> (i32, i32, i32) {
    %c0_i32 = arith.constant 0 : i32
    %c0_i32_0 = arith.constant 0 : i32
    return %arg0, %arg1, %c0_i32 : i32, i32, i32
  }
}

module attributes {stable_mosaic.version = 11 : i64} {
  func.func @_gru_kernel(%arg0: i32, %arg1: i32, %arg2: memref<8x4x16xbf16, #tpu.memory_space<vmem>>, %arg3: memref<4x128xf32, #tpu.memory_space<vmem>>, %arg4: memref<16x384xbf16, #tpu.memory_space<vmem>>, %arg5: memref<1x384xf32, #tpu.memory_space<vmem>>, %arg6: memref<128x384xbf16, #tpu.memory_space<vmem>>, %arg7: memref<1x128xf32, #tpu.memory_space<vmem>>, %arg8: memref<4x8x128xf32, #tpu.memory_space<vmem>>, %arg9: memref<4x128xf32, #tpu.memory_space<vmem>>, %arg10: memref<8x4x128xf32, #tpu.memory_space<vmem>>) attributes {dimension_semantics = [#tpu.dimension_semantics<parallel>, #tpu.dimension_semantics<arbitrary>], iteration_bounds = array<i64: 1, 2>, scalar_prefetch = 0 : i64, scratch_operands = 2 : i64, tpu.core_type = #tpu.core_type<tc>, window_params = [{transform_indices = @transform_0, window_bounds = array<i64: 8, 4, 16>}, {transform_indices = @transform_1, window_bounds = array<i64: 4, 128>}, {pipeline_mode = #tpu.pipeline_mode<synchronous>, transform_indices = @transform_2, window_bounds = array<i64: 16, 384>}, {pipeline_mode = #tpu.pipeline_mode<synchronous>, transform_indices = @transform_3, window_bounds = array<i64: 1, 384>}, {pipeline_mode = #tpu.pipeline_mode<synchronous>, transform_indices = @transform_4, window_bounds = array<i64: 128, 384>}, {pipeline_mode = #tpu.pipeline_mode<synchronous>, transform_indices = @transform_5, window_bounds = array<i64: 1, 128>}, {transform_indices = @transform_6, window_bounds = array<i64: 4, 8, 128>}]} {
    %c0_i32 = arith.constant 0 : i32
    %0 = arith.cmpi eq, %arg1, %c0_i32 : i32
    %1 = arith.extui %0 : i1 to i32
    %c0_i32_0 = arith.constant 0 : i32
    %2 = arith.cmpi ne, %1, %c0_i32_0 : i32
    scf.if %2 {
      %c0_133 = arith.constant 0 : index
      %c0_134 = arith.constant 0 : index
      %325 = vector.load %arg3[%c0_133, %c0_134] : memref<4x128xf32, #tpu.memory_space<vmem>>, vector<4x128xf32>
      %c0_135 = arith.constant 0 : index
      %c0_136 = arith.constant 0 : index
      %326 = vector.load %arg9[%c0_135, %c0_136] : memref<4x128xf32, #tpu.memory_space<vmem>>, vector<4x128xf32>
      tpu.vector_store %arg9[%c0_135, %c0_136], %325 {strides = array<i32>} : memref<4x128xf32, #tpu.memory_space<vmem>>, vector<4x128xf32>,
    } else {
    }
    %c0 = arith.constant 0 : index
    %c0_1 = arith.constant 0 : index
    %3 = vector.load %arg4[%c0, %c0_1] : memref<16x384xbf16, #tpu.memory_space<vmem>>, vector<16x384xbf16>
    %c0_2 = arith.constant 0 : index
    %c0_3 = arith.constant 0 : index
    %4 = vector.load %arg6[%c0_2, %c0_3] : memref<128x384xbf16, #tpu.memory_space<vmem>>, vector<128x384xbf16>
    %c0_4 = arith.constant 0 : index
    %c0_5 = arith.constant 0 : index
    %5 = vector.load %arg5[%c0_4, %c0_5] : memref<1x384xf32, #tpu.memory_space<vmem>>, vector<1x384xf32>
    %6 = vector.shape_cast %5 : vector<1x384xf32> to vector<1x384xf32>
    %7 = vector.broadcast %6 : vector<1x384xf32> to vector<4x384xf32>
    %c0_6 = arith.constant 0 : index
    %c0_7 = arith.constant 0 : index
    %8 = vector.load %arg7[%c0_6, %c0_7] : memref<1x128xf32, #tpu.memory_space<vmem>>, vector<1x128xf32>
    %9 = vector.shape_cast %8 : vector<1x128xf32> to vector<1x128xf32>
    %10 = vector.broadcast %9 : vector<1x128xf32> to vector<4x128xf32>
    %c0_8 = arith.constant 0 : index
    %c0_9 = arith.constant 0 : index
    %11 = vector.load %arg9[%c0_8, %c0_9] : memref<4x128xf32, #tpu.memory_space<vmem>>, vector<4x128xf32>
    %c0_i32_10 = arith.constant 0 : i32
    %12 = arith.index_cast %c0_i32_10 : i32 to index
    %c0_11 = arith.constant 0 : index
    %c0_12 = arith.constant 0 : index
    %13 = vector.load %arg2[%12, %c0_11, %c0_12] : memref<8x4x16xbf16, #tpu.memory_space<vmem>>, vector<1x4x16xbf16>
    %14 = vector.shape_cast %13 : vector<1x4x16xbf16> to vector<4x16xbf16>
    %cst = arith.constant dense<0.000000e+00> : vector<4x384xf32>
    %15 = tpu.matmul %14, %3, %cst {dimension_numbers = #tpu.dot_dimension_numbers<[1], [0], [0], [1], [0, 0, 1, 1], [], []>} : vector<4x16xbf16>, vector<16x384xbf16>, vector<4x384xf32> -> vector<4x384xf32>
    %16 = arith.addf %15, %7 : vector<4x384xf32>
    %17 = arith.truncf %11 : vector<4x128xf32> to vector<4x128xbf16>
    %cst_13 = arith.constant dense<0.000000e+00> : vector<4x384xf32>
    %18 = tpu.matmul %17, %4, %cst_13 {dimension_numbers = #tpu.dot_dimension_numbers<[1], [0], [0], [1], [0, 0, 1, 1], [], []>} : vector<4x128xbf16>, vector<128x384xbf16>, vector<4x384xf32> -> vector<4x384xf32>
    %19 = vector.extract_strided_slice %16 {offsets = [0, 0], sizes = [4, 256], strides = [1, 1]} : vector<4x384xf32> to vector<4x256xf32>
    %20 = vector.extract_strided_slice %18 {offsets = [0, 0], sizes = [4, 256], strides = [1, 1]} : vector<4x384xf32> to vector<4x256xf32>
    %21 = arith.addf %19, %20 : vector<4x256xf32>
    %cst_14 = arith.constant 5.000000e-01 : f32
    %22 = vector.broadcast %cst_14 : f32 to vector<4x256xf32>
    %23 = arith.mulf %22, %21 : vector<4x256xf32>
    %24 = math.tanh %23 : vector<4x256xf32>
    %cst_15 = arith.constant 5.000000e-01 : f32
    %25 = vector.broadcast %cst_15 : f32 to vector<4x256xf32>
    %26 = arith.mulf %25, %24 : vector<4x256xf32>
    %cst_16 = arith.constant 5.000000e-01 : f32
    %27 = vector.broadcast %cst_16 : f32 to vector<4x256xf32>
    %28 = arith.addf %26, %27 : vector<4x256xf32>
    %29 = vector.extract_strided_slice %28 {offsets = [0, 0], sizes = [4, 128], strides = [1, 1]} : vector<4x256xf32> to vector<4x128xf32>
    %30 = vector.extract_strided_slice %28 {offsets = [0, 128], sizes = [4, 128], strides = [1, 1]} : vector<4x256xf32> to vector<4x128xf32>
    %31 = vector.extract_strided_slice %16 {offsets = [0, 256], sizes = [4, 128], strides = [1, 1]} : vector<4x384xf32> to vector<4x128xf32>
    %32 = vector.extract_strided_slice %18 {offsets = [0, 256], sizes = [4, 128], strides = [1, 1]} : vector<4x384xf32> to vector<4x128xf32>
    %33 = arith.addf %32, %10 : vector<4x128xf32>
    %34 = arith.mulf %29, %33 : vector<4x128xf32>
    %35 = arith.addf %31, %34 : vector<4x128xf32>
    %cst_17 = arith.constant 1.000000e+00 : f32
    %36 = vector.broadcast %cst_17 : f32 to vector<4x128xf32>
    %37 = arith.subf %36, %30 : vector<4x128xf32>
    %38 = math.tanh %35 : vector<4x128xf32>
    %39 = arith.subf %38, %11 : vector<4x128xf32>
    %40 = arith.mulf %37, %39 : vector<4x128xf32>
    %41 = arith.addf %11, %40 : vector<4x128xf32>
    %42 = arith.index_cast %c0_i32_10 : i32 to index
    %c0_18 = arith.constant 0 : index
    %c0_19 = arith.constant 0 : index
    %43 = vector.load %arg10[%42, %c0_18, %c0_19] : memref<8x4x128xf32, #tpu.memory_space<vmem>>, vector<1x4x128xf32>
    %44 = vector.shape_cast %43 : vector<1x4x128xf32> to vector<4x128xf32>
    %45 = vector.shape_cast %41 : vector<4x128xf32> to vector<1x4x128xf32>
    tpu.vector_store %arg10[%42, %c0_18, %c0_19], %45 {strides = array<i32>} : memref<8x4x128xf32, #tpu.memory_space<vmem>>, vector<1x4x128xf32>,
    %c1_i32 = arith.constant 1 : i32
    %46 = arith.index_cast %c1_i32 : i32 to index
    %c0_20 = arith.constant 0 : index
    %c0_21 = arith.constant 0 : index
    %47 = vector.load %arg2[%46, %c0_20, %c0_21] : memref<8x4x16xbf16, #tpu.memory_space<vmem>>, vector<1x4x16xbf16>
    %48 = vector.shape_cast %47 : vector<1x4x16xbf16> to vector<4x16xbf16>
    %cst_22 = arith.constant dense<0.000000e+00> : vector<4x384xf32>
    %49 = tpu.matmul %48, %3, %cst_22 {dimension_numbers = #tpu.dot_dimension_numbers<[1], [0], [0], [1], [0, 0, 1, 1], [], []>} : vector<4x16xbf16>, vector<16x384xbf16>, vector<4x384xf32> -> vector<4x384xf32>
    %50 = arith.addf %49, %7 : vector<4x384xf32>
    %51 = arith.truncf %41 : vector<4x128xf32> to vector<4x128xbf16>
    %cst_23 = arith.constant dense<0.000000e+00> : vector<4x384xf32>
    %52 = tpu.matmul %51, %4, %cst_23 {dimension_numbers = #tpu.dot_dimension_numbers<[1], [0], [0], [1], [0, 0, 1, 1], [], []>} : vector<4x128xbf16>, vector<128x384xbf16>, vector<4x384xf32> -> vector<4x384xf32>
    %53 = vector.extract_strided_slice %50 {offsets = [0, 0], sizes = [4, 256], strides = [1, 1]} : vector<4x384xf32> to vector<4x256xf32>
    %54 = vector.extract_strided_slice %52 {offsets = [0, 0], sizes = [4, 256], strides = [1, 1]} : vector<4x384xf32> to vector<4x256xf32>
    %55 = arith.addf %53, %54 : vector<4x256xf32>
    %cst_24 = arith.constant 5.000000e-01 : f32
    %56 = vector.broadcast %cst_24 : f32 to vector<4x256xf32>
    %57 = arith.mulf %56, %55 : vector<4x256xf32>
    %58 = math.tanh %57 : vector<4x256xf32>
    %cst_25 = arith.constant 5.000000e-01 : f32
    %59 = vector.broadcast %cst_25 : f32 to vector<4x256xf32>
    %60 = arith.mulf %59, %58 : vector<4x256xf32>
    %cst_26 = arith.constant 5.000000e-01 : f32
    %61 = vector.broadcast %cst_26 : f32 to vector<4x256xf32>
    %62 = arith.addf %60, %61 : vector<4x256xf32>
    %63 = vector.extract_strided_slice %62 {offsets = [0, 0], sizes = [4, 128], strides = [1, 1]} : vector<4x256xf32> to vector<4x128xf32>
    %64 = vector.extract_strided_slice %62 {offsets = [0, 128], sizes = [4, 128], strides = [1, 1]} : vector<4x256xf32> to vector<4x128xf32>
    %65 = vector.extract_strided_slice %50 {offsets = [0, 256], sizes = [4, 128], strides = [1, 1]} : vector<4x384xf32> to vector<4x128xf32>
    %66 = vector.extract_strided_slice %52 {offsets = [0, 256], sizes = [4, 128], strides = [1, 1]} : vector<4x384xf32> to vector<4x128xf32>
    %67 = arith.addf %66, %10 : vector<4x128xf32>
    %68 = arith.mulf %63, %67 : vector<4x128xf32>
    %69 = arith.addf %65, %68 : vector<4x128xf32>
    %cst_27 = arith.constant 1.000000e+00 : f32
    %70 = vector.broadcast %cst_27 : f32 to vector<4x128xf32>
    %71 = arith.subf %70, %64 : vector<4x128xf32>
    %72 = math.tanh %69 : vector<4x128xf32>
    %73 = arith.subf %72, %41 : vector<4x128xf32>
    %74 = arith.mulf %71, %73 : vector<4x128xf32>
    %75 = arith.addf %41, %74 : vector<4x128xf32>
    %76 = arith.index_cast %c1_i32 : i32 to index
    %c0_28 = arith.constant 0 : index
    %c0_29 = arith.constant 0 : index
    %77 = vector.load %arg10[%76, %c0_28, %c0_29] : memref<8x4x128xf32, #tpu.memory_space<vmem>>, vector<1x4x128xf32>
    %78 = vector.shape_cast %77 : vector<1x4x128xf32> to vector<4x128xf32>
    %79 = vector.shape_cast %75 : vector<4x128xf32> to vector<1x4x128xf32>
    tpu.vector_store %arg10[%76, %c0_28, %c0_29], %79 {strides = array<i32>} : memref<8x4x128xf32, #tpu.memory_space<vmem>>, vector<1x4x128xf32>,
    %c2_i32 = arith.constant 2 : i32
    %80 = arith.index_cast %c2_i32 : i32 to index
    %c0_30 = arith.constant 0 : index
    %c0_31 = arith.constant 0 : index
    %81 = vector.load %arg2[%80, %c0_30, %c0_31] : memref<8x4x16xbf16, #tpu.memory_space<vmem>>, vector<1x4x16xbf16>
    %82 = vector.shape_cast %81 : vector<1x4x16xbf16> to vector<4x16xbf16>
    %cst_32 = arith.constant dense<0.000000e+00> : vector<4x384xf32>
    %83 = tpu.matmul %82, %3, %cst_32 {dimension_numbers = #tpu.dot_dimension_numbers<[1], [0], [0], [1], [0, 0, 1, 1], [], []>} : vector<4x16xbf16>, vector<16x384xbf16>, vector<4x384xf32> -> vector<4x384xf32>
    %84 = arith.addf %83, %7 : vector<4x384xf32>
    %85 = arith.truncf %75 : vector<4x128xf32> to vector<4x128xbf16>
    %cst_33 = arith.constant dense<0.000000e+00> : vector<4x384xf32>
    %86 = tpu.matmul %85, %4, %cst_33 {dimension_numbers = #tpu.dot_dimension_numbers<[1], [0], [0], [1], [0, 0, 1, 1], [], []>} : vector<4x128xbf16>, vector<128x384xbf16>, vector<4x384xf32> -> vector<4x384xf32>
    %87 = vector.extract_strided_slice %84 {offsets = [0, 0], sizes = [4, 256], strides = [1, 1]} : vector<4x384xf32> to vector<4x256xf32>
    %88 = vector.extract_strided_slice %86 {offsets = [0, 0], sizes = [4, 256], strides = [1, 1]} : vector<4x384xf32> to vector<4x256xf32>
    %89 = arith.addf %87, %88 : vector<4x256xf32>
    %cst_34 = arith.constant 5.000000e-01 : f32
    %90 = vector.broadcast %cst_34 : f32 to vector<4x256xf32>
    %91 = arith.mulf %90, %89 : vector<4x256xf32>
    %92 = math.tanh %91 : vector<4x256xf32>
    %cst_35 = arith.constant 5.000000e-01 : f32
    %93 = vector.broadcast %cst_35 : f32 to vector<4x256xf32>
    %94 = arith.mulf %93, %92 : vector<4x256xf32>
    %cst_36 = arith.constant 5.000000e-01 : f32
    %95 = vector.broadcast %cst_36 : f32 to vector<4x256xf32>
    %96 = arith.addf %94, %95 : vector<4x256xf32>
    %97 = vector.extract_strided_slice %96 {offsets = [0, 0], sizes = [4, 128], strides = [1, 1]} : vector<4x256xf32> to vector<4x128xf32>
    %98 = vector.extract_strided_slice %96 {offsets = [0, 128], sizes = [4, 128], strides = [1, 1]} : vector<4x256xf32> to vector<4x128xf32>
    %99 = vector.extract_strided_slice %84 {offsets = [0, 256], sizes = [4, 128], strides = [1, 1]} : vector<4x384xf32> to vector<4x128xf32>
    %100 = vector.extract_strided_slice %86 {offsets = [0, 256], sizes = [4, 128], strides = [1, 1]} : vector<4x384xf32> to vector<4x128xf32>
    %101 = arith.addf %100, %10 : vector<4x128xf32>
    %102 = arith.mulf %97, %101 : vector<4x128xf32>
    %103 = arith.addf %99, %102 : vector<4x128xf32>
    %cst_37 = arith.constant 1.000000e+00 : f32
    %104 = vector.broadcast %cst_37 : f32 to vector<4x128xf32>
    %105 = arith.subf %104, %98 : vector<4x128xf32>
    %106 = math.tanh %103 : vector<4x128xf32>
    %107 = arith.subf %106, %75 : vector<4x128xf32>
    %108 = arith.mulf %105, %107 : vector<4x128xf32>
    %109 = arith.addf %75, %108 : vector<4x128xf32>
    %110 = arith.index_cast %c2_i32 : i32 to index
    %c0_38 = arith.constant 0 : index
    %c0_39 = arith.constant 0 : index
    %111 = vector.load %arg10[%110, %c0_38, %c0_39] : memref<8x4x128xf32, #tpu.memory_space<vmem>>, vector<1x4x128xf32>
    %112 = vector.shape_cast %111 : vector<1x4x128xf32> to vector<4x128xf32>
    %113 = vector.shape_cast %109 : vector<4x128xf32> to vector<1x4x128xf32>
    tpu.vector_store %arg10[%110, %c0_38, %c0_39], %113 {strides = array<i32>} : memref<8x4x128xf32, #tpu.memory_space<vmem>>, vector<1x4x128xf32>,
    %c3_i32 = arith.constant 3 : i32
    %114 = arith.index_cast %c3_i32 : i32 to index
    %c0_40 = arith.constant 0 : index
    %c0_41 = arith.constant 0 : index
    %115 = vector.load %arg2[%114, %c0_40, %c0_41] : memref<8x4x16xbf16, #tpu.memory_space<vmem>>, vector<1x4x16xbf16>
    %116 = vector.shape_cast %115 : vector<1x4x16xbf16> to vector<4x16xbf16>
    %cst_42 = arith.constant dense<0.000000e+00> : vector<4x384xf32>
    %117 = tpu.matmul %116, %3, %cst_42 {dimension_numbers = #tpu.dot_dimension_numbers<[1], [0], [0], [1], [0, 0, 1, 1], [], []>} : vector<4x16xbf16>, vector<16x384xbf16>, vector<4x384xf32> -> vector<4x384xf32>
    %118 = arith.addf %117, %7 : vector<4x384xf32>
    %119 = arith.truncf %109 : vector<4x128xf32> to vector<4x128xbf16>
    %cst_43 = arith.constant dense<0.000000e+00> : vector<4x384xf32>
    %120 = tpu.matmul %119, %4, %cst_43 {dimension_numbers = #tpu.dot_dimension_numbers<[1], [0], [0], [1], [0, 0, 1, 1], [], []>} : vector<4x128xbf16>, vector<128x384xbf16>, vector<4x384xf32> -> vector<4x384xf32>
    %121 = vector.extract_strided_slice %118 {offsets = [0, 0], sizes = [4, 256], strides = [1, 1]} : vector<4x384xf32> to vector<4x256xf32>
    %122 = vector.extract_strided_slice %120 {offsets = [0, 0], sizes = [4, 256], strides = [1, 1]} : vector<4x384xf32> to vector<4x256xf32>
    %123 = arith.addf %121, %122 : vector<4x256xf32>
    %cst_44 = arith.constant 5.000000e-01 : f32
    %124 = vector.broadcast %cst_44 : f32 to vector<4x256xf32>
    %125 = arith.mulf %124, %123 : vector<4x256xf32>
    %126 = math.tanh %125 : vector<4x256xf32>
    %cst_45 = arith.constant 5.000000e-01 : f32
    %127 = vector.broadcast %cst_45 : f32 to vector<4x256xf32>
    %128 = arith.mulf %127, %126 : vector<4x256xf32>
    %cst_46 = arith.constant 5.000000e-01 : f32
    %129 = vector.broadcast %cst_46 : f32 to vector<4x256xf32>
    %130 = arith.addf %128, %129 : vector<4x256xf32>
    %131 = vector.extract_strided_slice %130 {offsets = [0, 0], sizes = [4, 128], strides = [1, 1]} : vector<4x256xf32> to vector<4x128xf32>
    %132 = vector.extract_strided_slice %130 {offsets = [0, 128], sizes = [4, 128], strides = [1, 1]} : vector<4x256xf32> to vector<4x128xf32>
    %133 = vector.extract_strided_slice %118 {offsets = [0, 256], sizes = [4, 128], strides = [1, 1]} : vector<4x384xf32> to vector<4x128xf32>
    %134 = vector.extract_strided_slice %120 {offsets = [0, 256], sizes = [4, 128], strides = [1, 1]} : vector<4x384xf32> to vector<4x128xf32>
    %135 = arith.addf %134, %10 : vector<4x128xf32>
    %136 = arith.mulf %131, %135 : vector<4x128xf32>
    %137 = arith.addf %133, %136 : vector<4x128xf32>
    %cst_47 = arith.constant 1.000000e+00 : f32
    %138 = vector.broadcast %cst_47 : f32 to vector<4x128xf32>
    %139 = arith.subf %138, %132 : vector<4x128xf32>
    %140 = math.tanh %137 : vector<4x128xf32>
    %141 = arith.subf %140, %109 : vector<4x128xf32>
    %142 = arith.mulf %139, %141 : vector<4x128xf32>
    %143 = arith.addf %109, %142 : vector<4x128xf32>
    %144 = arith.index_cast %c3_i32 : i32 to index
    %c0_48 = arith.constant 0 : index
    %c0_49 = arith.constant 0 : index
    %145 = vector.load %arg10[%144, %c0_48, %c0_49] : memref<8x4x128xf32, #tpu.memory_space<vmem>>, vector<1x4x128xf32>
    %146 = vector.shape_cast %145 : vector<1x4x128xf32> to vector<4x128xf32>
    %147 = vector.shape_cast %143 : vector<4x128xf32> to vector<1x4x128xf32>
    tpu.vector_store %arg10[%144, %c0_48, %c0_49], %147 {strides = array<i32>} : memref<8x4x128xf32, #tpu.memory_space<vmem>>, vector<1x4x128xf32>,
    %c4_i32 = arith.constant 4 : i32
    %148 = arith.index_cast %c4_i32 : i32 to index
    %c0_50 = arith.constant 0 : index
    %c0_51 = arith.constant 0 : index
    %149 = vector.load %arg2[%148, %c0_50, %c0_51] : memref<8x4x16xbf16, #tpu.memory_space<vmem>>, vector<1x4x16xbf16>
    %150 = vector.shape_cast %149 : vector<1x4x16xbf16> to vector<4x16xbf16>
    %cst_52 = arith.constant dense<0.000000e+00> : vector<4x384xf32>
    %151 = tpu.matmul %150, %3, %cst_52 {dimension_numbers = #tpu.dot_dimension_numbers<[1], [0], [0], [1], [0, 0, 1, 1], [], []>} : vector<4x16xbf16>, vector<16x384xbf16>, vector<4x384xf32> -> vector<4x384xf32>
    %152 = arith.addf %151, %7 : vector<4x384xf32>
    %153 = arith.truncf %143 : vector<4x128xf32> to vector<4x128xbf16>
    %cst_53 = arith.constant dense<0.000000e+00> : vector<4x384xf32>
    %154 = tpu.matmul %153, %4, %cst_53 {dimension_numbers = #tpu.dot_dimension_numbers<[1], [0], [0], [1], [0, 0, 1, 1], [], []>} : vector<4x128xbf16>, vector<128x384xbf16>, vector<4x384xf32> -> vector<4x384xf32>
    %155 = vector.extract_strided_slice %152 {offsets = [0, 0], sizes = [4, 256], strides = [1, 1]} : vector<4x384xf32> to vector<4x256xf32>
    %156 = vector.extract_strided_slice %154 {offsets = [0, 0], sizes = [4, 256], strides = [1, 1]} : vector<4x384xf32> to vector<4x256xf32>
    %157 = arith.addf %155, %156 : vector<4x256xf32>
    %cst_54 = arith.constant 5.000000e-01 : f32
    %158 = vector.broadcast %cst_54 : f32 to vector<4x256xf32>
    %159 = arith.mulf %158, %157 : vector<4x256xf32>
    %160 = math.tanh %159 : vector<4x256xf32>
    %cst_55 = arith.constant 5.000000e-01 : f32
    %161 = vector.broadcast %cst_55 : f32 to vector<4x256xf32>
    %162 = arith.mulf %161, %160 : vector<4x256xf32>
    %cst_56 = arith.constant 5.000000e-01 : f32
    %163 = vector.broadcast %cst_56 : f32 to vector<4x256xf32>
    %164 = arith.addf %162, %163 : vector<4x256xf32>
    %165 = vector.extract_strided_slice %164 {offsets = [0, 0], sizes = [4, 128], strides = [1, 1]} : vector<4x256xf32> to vector<4x128xf32>
    %166 = vector.extract_strided_slice %164 {offsets = [0, 128], sizes = [4, 128], strides = [1, 1]} : vector<4x256xf32> to vector<4x128xf32>
    %167 = vector.extract_strided_slice %152 {offsets = [0, 256], sizes = [4, 128], strides = [1, 1]} : vector<4x384xf32> to vector<4x128xf32>
    %168 = vector.extract_strided_slice %154 {offsets = [0, 256], sizes = [4, 128], strides = [1, 1]} : vector<4x384xf32> to vector<4x128xf32>
    %169 = arith.addf %168, %10 : vector<4x128xf32>
    %170 = arith.mulf %165, %169 : vector<4x128xf32>
    %171 = arith.addf %167, %170 : vector<4x128xf32>
    %cst_57 = arith.constant 1.000000e+00 : f32
    %172 = vector.broadcast %cst_57 : f32 to vector<4x128xf32>
    %173 = arith.subf %172, %166 : vector<4x128xf32>
    %174 = math.tanh %171 : vector<4x128xf32>
    %175 = arith.subf %174, %143 : vector<4x128xf32>
    %176 = arith.mulf %173, %175 : vector<4x128xf32>
    %177 = arith.addf %143, %176 : vector<4x128xf32>
    %178 = arith.index_cast %c4_i32 : i32 to index
    %c0_58 = arith.constant 0 : index
    %c0_59 = arith.constant 0 : index
    %179 = vector.load %arg10[%178, %c0_58, %c0_59] : memref<8x4x128xf32, #tpu.memory_space<vmem>>, vector<1x4x128xf32>
    %180 = vector.shape_cast %179 : vector<1x4x128xf32> to vector<4x128xf32>
    %181 = vector.shape_cast %177 : vector<4x128xf32> to vector<1x4x128xf32>
    tpu.vector_store %arg10[%178, %c0_58, %c0_59], %181 {strides = array<i32>} : memref<8x4x128xf32, #tpu.memory_space<vmem>>, vector<1x4x128xf32>,
    %c5_i32 = arith.constant 5 : i32
    %182 = arith.index_cast %c5_i32 : i32 to index
    %c0_60 = arith.constant 0 : index
    %c0_61 = arith.constant 0 : index
    %183 = vector.load %arg2[%182, %c0_60, %c0_61] : memref<8x4x16xbf16, #tpu.memory_space<vmem>>, vector<1x4x16xbf16>
    %184 = vector.shape_cast %183 : vector<1x4x16xbf16> to vector<4x16xbf16>
    %cst_62 = arith.constant dense<0.000000e+00> : vector<4x384xf32>
    %185 = tpu.matmul %184, %3, %cst_62 {dimension_numbers = #tpu.dot_dimension_numbers<[1], [0], [0], [1], [0, 0, 1, 1], [], []>} : vector<4x16xbf16>, vector<16x384xbf16>, vector<4x384xf32> -> vector<4x384xf32>
    %186 = arith.addf %185, %7 : vector<4x384xf32>
    %187 = arith.truncf %177 : vector<4x128xf32> to vector<4x128xbf16>
    %cst_63 = arith.constant dense<0.000000e+00> : vector<4x384xf32>
    %188 = tpu.matmul %187, %4, %cst_63 {dimension_numbers = #tpu.dot_dimension_numbers<[1], [0], [0], [1], [0, 0, 1, 1], [], []>} : vector<4x128xbf16>, vector<128x384xbf16>, vector<4x384xf32> -> vector<4x384xf32>
    %189 = vector.extract_strided_slice %186 {offsets = [0, 0], sizes = [4, 256], strides = [1, 1]} : vector<4x384xf32> to vector<4x256xf32>
    %190 = vector.extract_strided_slice %188 {offsets = [0, 0], sizes = [4, 256], strides = [1, 1]} : vector<4x384xf32> to vector<4x256xf32>
    %191 = arith.addf %189, %190 : vector<4x256xf32>
    %cst_64 = arith.constant 5.000000e-01 : f32
    %192 = vector.broadcast %cst_64 : f32 to vector<4x256xf32>
    %193 = arith.mulf %192, %191 : vector<4x256xf32>
    %194 = math.tanh %193 : vector<4x256xf32>
    %cst_65 = arith.constant 5.000000e-01 : f32
    %195 = vector.broadcast %cst_65 : f32 to vector<4x256xf32>
    %196 = arith.mulf %195, %194 : vector<4x256xf32>
    %cst_66 = arith.constant 5.000000e-01 : f32
    %197 = vector.broadcast %cst_66 : f32 to vector<4x256xf32>
    %198 = arith.addf %196, %197 : vector<4x256xf32>
    %199 = vector.extract_strided_slice %198 {offsets = [0, 0], sizes = [4, 128], strides = [1, 1]} : vector<4x256xf32> to vector<4x128xf32>
    %200 = vector.extract_strided_slice %198 {offsets = [0, 128], sizes = [4, 128], strides = [1, 1]} : vector<4x256xf32> to vector<4x128xf32>
    %201 = vector.extract_strided_slice %186 {offsets = [0, 256], sizes = [4, 128], strides = [1, 1]} : vector<4x384xf32> to vector<4x128xf32>
    %202 = vector.extract_strided_slice %188 {offsets = [0, 256], sizes = [4, 128], strides = [1, 1]} : vector<4x384xf32> to vector<4x128xf32>
    %203 = arith.addf %202, %10 : vector<4x128xf32>
    %204 = arith.mulf %199, %203 : vector<4x128xf32>
    %205 = arith.addf %201, %204 : vector<4x128xf32>
    %cst_67 = arith.constant 1.000000e+00 : f32
    %206 = vector.broadcast %cst_67 : f32 to vector<4x128xf32>
    %207 = arith.subf %206, %200 : vector<4x128xf32>
    %208 = math.tanh %205 : vector<4x128xf32>
    %209 = arith.subf %208, %177 : vector<4x128xf32>
    %210 = arith.mulf %207, %209 : vector<4x128xf32>
    %211 = arith.addf %177, %210 : vector<4x128xf32>
    %212 = arith.index_cast %c5_i32 : i32 to index
    %c0_68 = arith.constant 0 : index
    %c0_69 = arith.constant 0 : index
    %213 = vector.load %arg10[%212, %c0_68, %c0_69] : memref<8x4x128xf32, #tpu.memory_space<vmem>>, vector<1x4x128xf32>
    %214 = vector.shape_cast %213 : vector<1x4x128xf32> to vector<4x128xf32>
    %215 = vector.shape_cast %211 : vector<4x128xf32> to vector<1x4x128xf32>
    tpu.vector_store %arg10[%212, %c0_68, %c0_69], %215 {strides = array<i32>} : memref<8x4x128xf32, #tpu.memory_space<vmem>>, vector<1x4x128xf32>,
    %c6_i32 = arith.constant 6 : i32
    %216 = arith.index_cast %c6_i32 : i32 to index
    %c0_70 = arith.constant 0 : index
    %c0_71 = arith.constant 0 : index
    %217 = vector.load %arg2[%216, %c0_70, %c0_71] : memref<8x4x16xbf16, #tpu.memory_space<vmem>>, vector<1x4x16xbf16>
    %218 = vector.shape_cast %217 : vector<1x4x16xbf16> to vector<4x16xbf16>
    %cst_72 = arith.constant dense<0.000000e+00> : vector<4x384xf32>
    %219 = tpu.matmul %218, %3, %cst_72 {dimension_numbers = #tpu.dot_dimension_numbers<[1], [0], [0], [1], [0, 0, 1, 1], [], []>} : vector<4x16xbf16>, vector<16x384xbf16>, vector<4x384xf32> -> vector<4x384xf32>
    %220 = arith.addf %219, %7 : vector<4x384xf32>
    %221 = arith.truncf %211 : vector<4x128xf32> to vector<4x128xbf16>
    %cst_73 = arith.constant dense<0.000000e+00> : vector<4x384xf32>
    %222 = tpu.matmul %221, %4, %cst_73 {dimension_numbers = #tpu.dot_dimension_numbers<[1], [0], [0], [1], [0, 0, 1, 1], [], []>} : vector<4x128xbf16>, vector<128x384xbf16>, vector<4x384xf32> -> vector<4x384xf32>
    %223 = vector.extract_strided_slice %220 {offsets = [0, 0], sizes = [4, 256], strides = [1, 1]} : vector<4x384xf32> to vector<4x256xf32>
    %224 = vector.extract_strided_slice %222 {offsets = [0, 0], sizes = [4, 256], strides = [1, 1]} : vector<4x384xf32> to vector<4x256xf32>
    %225 = arith.addf %223, %224 : vector<4x256xf32>
    %cst_74 = arith.constant 5.000000e-01 : f32
    %226 = vector.broadcast %cst_74 : f32 to vector<4x256xf32>
    %227 = arith.mulf %226, %225 : vector<4x256xf32>
    %228 = math.tanh %227 : vector<4x256xf32>
    %cst_75 = arith.constant 5.000000e-01 : f32
    %229 = vector.broadcast %cst_75 : f32 to vector<4x256xf32>
    %230 = arith.mulf %229, %228 : vector<4x256xf32>
    %cst_76 = arith.constant 5.000000e-01 : f32
    %231 = vector.broadcast %cst_76 : f32 to vector<4x256xf32>
    %232 = arith.addf %230, %231 : vector<4x256xf32>
    %233 = vector.extract_strided_slice %232 {offsets = [0, 0], sizes = [4, 128], strides = [1, 1]} : vector<4x256xf32> to vector<4x128xf32>
    %234 = vector.extract_strided_slice %232 {offsets = [0, 128], sizes = [4, 128], strides = [1, 1]} : vector<4x256xf32> to vector<4x128xf32>
    %235 = vector.extract_strided_slice %220 {offsets = [0, 256], sizes = [4, 128], strides = [1, 1]} : vector<4x384xf32> to vector<4x128xf32>
    %236 = vector.extract_strided_slice %222 {offsets = [0, 256], sizes = [4, 128], strides = [1, 1]} : vector<4x384xf32> to vector<4x128xf32>
    %237 = arith.addf %236, %10 : vector<4x128xf32>
    %238 = arith.mulf %233, %237 : vector<4x128xf32>
    %239 = arith.addf %235, %238 : vector<4x128xf32>
    %cst_77 = arith.constant 1.000000e+00 : f32
    %240 = vector.broadcast %cst_77 : f32 to vector<4x128xf32>
    %241 = arith.subf %240, %234 : vector<4x128xf32>
    %242 = math.tanh %239 : vector<4x128xf32>
    %243 = arith.subf %242, %211 : vector<4x128xf32>
    %244 = arith.mulf %241, %243 : vector<4x128xf32>
    %245 = arith.addf %211, %244 : vector<4x128xf32>
    %246 = arith.index_cast %c6_i32 : i32 to index
    %c0_78 = arith.constant 0 : index
    %c0_79 = arith.constant 0 : index
    %247 = vector.load %arg10[%246, %c0_78, %c0_79] : memref<8x4x128xf32, #tpu.memory_space<vmem>>, vector<1x4x128xf32>
    %248 = vector.shape_cast %247 : vector<1x4x128xf32> to vector<4x128xf32>
    %249 = vector.shape_cast %245 : vector<4x128xf32> to vector<1x4x128xf32>
    tpu.vector_store %arg10[%246, %c0_78, %c0_79], %249 {strides = array<i32>} : memref<8x4x128xf32, #tpu.memory_space<vmem>>, vector<1x4x128xf32>,
    %c7_i32 = arith.constant 7 : i32
    %250 = arith.index_cast %c7_i32 : i32 to index
    %c0_80 = arith.constant 0 : index
    %c0_81 = arith.constant 0 : index
    %251 = vector.load %arg2[%250, %c0_80, %c0_81] : memref<8x4x16xbf16, #tpu.memory_space<vmem>>, vector<1x4x16xbf16>
    %252 = vector.shape_cast %251 : vector<1x4x16xbf16> to vector<4x16xbf16>
    %cst_82 = arith.constant dense<0.000000e+00> : vector<4x384xf32>
    %253 = tpu.matmul %252, %3, %cst_82 {dimension_numbers = #tpu.dot_dimension_numbers<[1], [0], [0], [1], [0, 0, 1, 1], [], []>} : vector<4x16xbf16>, vector<16x384xbf16>, vector<4x384xf32> -> vector<4x384xf32>
    %254 = arith.addf %253, %7 : vector<4x384xf32>
    %255 = arith.truncf %245 : vector<4x128xf32> to vector<4x128xbf16>
    %cst_83 = arith.constant dense<0.000000e+00> : vector<4x384xf32>
    %256 = tpu.matmul %255, %4, %cst_83 {dimension_numbers = #tpu.dot_dimension_numbers<[1], [0], [0], [1], [0, 0, 1, 1], [], []>} : vector<4x128xbf16>, vector<128x384xbf16>, vector<4x384xf32> -> vector<4x384xf32>
    %257 = vector.extract_strided_slice %254 {offsets = [0, 0], sizes = [4, 256], strides = [1, 1]} : vector<4x384xf32> to vector<4x256xf32>
    %258 = vector.extract_strided_slice %256 {offsets = [0, 0], sizes = [4, 256], strides = [1, 1]} : vector<4x384xf32> to vector<4x256xf32>
    %259 = arith.addf %257, %258 : vector<4x256xf32>
    %cst_84 = arith.constant 5.000000e-01 : f32
    %260 = vector.broadcast %cst_84 : f32 to vector<4x256xf32>
    %261 = arith.mulf %260, %259 : vector<4x256xf32>
    %262 = math.tanh %261 : vector<4x256xf32>
    %cst_85 = arith.constant 5.000000e-01 : f32
    %263 = vector.broadcast %cst_85 : f32 to vector<4x256xf32>
    %264 = arith.mulf %263, %262 : vector<4x256xf32>
    %cst_86 = arith.constant 5.000000e-01 : f32
    %265 = vector.broadcast %cst_86 : f32 to vector<4x256xf32>
    %266 = arith.addf %264, %265 : vector<4x256xf32>
    %267 = vector.extract_strided_slice %266 {offsets = [0, 0], sizes = [4, 128], strides = [1, 1]} : vector<4x256xf32> to vector<4x128xf32>
    %268 = vector.extract_strided_slice %266 {offsets = [0, 128], sizes = [4, 128], strides = [1, 1]} : vector<4x256xf32> to vector<4x128xf32>
    %269 = vector.extract_strided_slice %254 {offsets = [0, 256], sizes = [4, 128], strides = [1, 1]} : vector<4x384xf32> to vector<4x128xf32>
    %270 = vector.extract_strided_slice %256 {offsets = [0, 256], sizes = [4, 128], strides = [1, 1]} : vector<4x384xf32> to vector<4x128xf32>
    %271 = arith.addf %270, %10 : vector<4x128xf32>
    %272 = arith.mulf %267, %271 : vector<4x128xf32>
    %273 = arith.addf %269, %272 : vector<4x128xf32>
    %cst_87 = arith.constant 1.000000e+00 : f32
    %274 = vector.broadcast %cst_87 : f32 to vector<4x128xf32>
    %275 = arith.subf %274, %268 : vector<4x128xf32>
    %276 = math.tanh %273 : vector<4x128xf32>
    %277 = arith.subf %276, %245 : vector<4x128xf32>
    %278 = arith.mulf %275, %277 : vector<4x128xf32>
    %279 = arith.addf %245, %278 : vector<4x128xf32>
    %280 = arith.index_cast %c7_i32 : i32 to index
    %c0_88 = arith.constant 0 : index
    %c0_89 = arith.constant 0 : index
    %281 = vector.load %arg10[%280, %c0_88, %c0_89] : memref<8x4x128xf32, #tpu.memory_space<vmem>>, vector<1x4x128xf32>
    %282 = vector.shape_cast %281 : vector<1x4x128xf32> to vector<4x128xf32>
    %283 = vector.shape_cast %279 : vector<4x128xf32> to vector<1x4x128xf32>
    tpu.vector_store %arg10[%280, %c0_88, %c0_89], %283 {strides = array<i32>} : memref<8x4x128xf32, #tpu.memory_space<vmem>>, vector<1x4x128xf32>,
    %c8_i32 = arith.constant 8 : i32
    %c0_90 = arith.constant 0 : index
    %c0_91 = arith.constant 0 : index
    %284 = vector.load %arg9[%c0_90, %c0_91] : memref<4x128xf32, #tpu.memory_space<vmem>>, vector<4x128xf32>
    tpu.vector_store %arg9[%c0_90, %c0_91], %279 {strides = array<i32>} : memref<4x128xf32, #tpu.memory_space<vmem>>, vector<4x128xf32>,
    %c0_92 = arith.constant 0 : index
    %c0_93 = arith.constant 0 : index
    %c0_94 = arith.constant 0 : index
    %285 = vector.load %arg10[%c0_92, %c0_93, %c0_94] : memref<8x4x128xf32, #tpu.memory_space<vmem>>, vector<1x4x128xf32>
    %286 = vector.shape_cast %285 : vector<1x4x128xf32> to vector<4x128xf32>
    %c0_95 = arith.constant 0 : index
    %c0_96 = arith.constant 0 : index
    %c0_97 = arith.constant 0 : index
    %287 = vector.load %arg8[%c0_95, %c0_96, %c0_97] : memref<4x8x128xf32, #tpu.memory_space<vmem>>, vector<4x1x128xf32>
    %288 = vector.shape_cast %287 : vector<4x1x128xf32> to vector<4x128xf32>
    %289 = vector.shape_cast %286 : vector<4x128xf32> to vector<4x1x128xf32>
    tpu.vector_store %arg8[%c0_95, %c0_96, %c0_97], %289 {strides = array<i32>} : memref<4x8x128xf32, #tpu.memory_space<vmem>>, vector<4x1x128xf32>,
    %c1 = arith.constant 1 : index
    %c0_98 = arith.constant 0 : index
    %c0_99 = arith.constant 0 : index
    %290 = vector.load %arg10[%c1, %c0_98, %c0_99] : memref<8x4x128xf32, #tpu.memory_space<vmem>>, vector<1x4x128xf32>
    %291 = vector.shape_cast %290 : vector<1x4x128xf32> to vector<4x128xf32>
    %c0_100 = arith.constant 0 : index
    %c1_101 = arith.constant 1 : index
    %c0_102 = arith.constant 0 : index
    %292 = vector.load %arg8[%c0_100, %c1_101, %c0_102] : memref<4x8x128xf32, #tpu.memory_space<vmem>>, vector<4x1x128xf32>
    %293 = vector.shape_cast %292 : vector<4x1x128xf32> to vector<4x128xf32>
    %294 = vector.shape_cast %291 : vector<4x128xf32> to vector<4x1x128xf32>
    tpu.vector_store %arg8[%c0_100, %c1_101, %c0_102], %294 {strides = array<i32>} : memref<4x8x128xf32, #tpu.memory_space<vmem>>, vector<4x1x128xf32>,
    %c2 = arith.constant 2 : index
    %c0_103 = arith.constant 0 : index
    %c0_104 = arith.constant 0 : index
    %295 = vector.load %arg10[%c2, %c0_103, %c0_104] : memref<8x4x128xf32, #tpu.memory_space<vmem>>, vector<1x4x128xf32>
    %296 = vector.shape_cast %295 : vector<1x4x128xf32> to vector<4x128xf32>
    %c0_105 = arith.constant 0 : index
    %c2_106 = arith.constant 2 : index
    %c0_107 = arith.constant 0 : index
    %297 = vector.load %arg8[%c0_105, %c2_106, %c0_107] : memref<4x8x128xf32, #tpu.memory_space<vmem>>, vector<4x1x128xf32>
    %298 = vector.shape_cast %297 : vector<4x1x128xf32> to vector<4x128xf32>
    %299 = vector.shape_cast %296 : vector<4x128xf32> to vector<4x1x128xf32>
    tpu.vector_store %arg8[%c0_105, %c2_106, %c0_107], %299 {strides = array<i32>} : memref<4x8x128xf32, #tpu.memory_space<vmem>>, vector<4x1x128xf32>,
    %c3 = arith.constant 3 : index
    %c0_108 = arith.constant 0 : index
    %c0_109 = arith.constant 0 : index
    %300 = vector.load %arg10[%c3, %c0_108, %c0_109] : memref<8x4x128xf32, #tpu.memory_space<vmem>>, vector<1x4x128xf32>
    %301 = vector.shape_cast %300 : vector<1x4x128xf32> to vector<4x128xf32>
    %c0_110 = arith.constant 0 : index
    %c3_111 = arith.constant 3 : index
    %c0_112 = arith.constant 0 : index
    %302 = vector.load %arg8[%c0_110, %c3_111, %c0_112] : memref<4x8x128xf32, #tpu.memory_space<vmem>>, vector<4x1x128xf32>
    %303 = vector.shape_cast %302 : vector<4x1x128xf32> to vector<4x128xf32>
    %304 = vector.shape_cast %301 : vector<4x128xf32> to vector<4x1x128xf32>
    tpu.vector_store %arg8[%c0_110, %c3_111, %c0_112], %304 {strides = array<i32>} : memref<4x8x128xf32, #tpu.memory_space<vmem>>, vector<4x1x128xf32>,
    %c4 = arith.constant 4 : index
    %c0_113 = arith.constant 0 : index
    %c0_114 = arith.constant 0 : index
    %305 = vector.load %arg10[%c4, %c0_113, %c0_114] : memref<8x4x128xf32, #tpu.memory_space<vmem>>, vector<1x4x128xf32>
    %306 = vector.shape_cast %305 : vector<1x4x128xf32> to vector<4x128xf32>
    %c0_115 = arith.constant 0 : index
    %c4_116 = arith.constant 4 : index
    %c0_117 = arith.constant 0 : index
    %307 = vector.load %arg8[%c0_115, %c4_116, %c0_117] : memref<4x8x128xf32, #tpu.memory_space<vmem>>, vector<4x1x128xf32>
    %308 = vector.shape_cast %307 : vector<4x1x128xf32> to vector<4x128xf32>
    %309 = vector.shape_cast %306 : vector<4x128xf32> to vector<4x1x128xf32>
    tpu.vector_store %arg8[%c0_115, %c4_116, %c0_117], %309 {strides = array<i32>} : memref<4x8x128xf32, #tpu.memory_space<vmem>>, vector<4x1x128xf32>,
    %c5 = arith.constant 5 : index
    %c0_118 = arith.constant 0 : index
    %c0_119 = arith.constant 0 : index
    %310 = vector.load %arg10[%c5, %c0_118, %c0_119] : memref<8x4x128xf32, #tpu.memory_space<vmem>>, vector<1x4x128xf32>
    %311 = vector.shape_cast %310 : vector<1x4x128xf32> to vector<4x128xf32>
    %c0_120 = arith.constant 0 : index
    %c5_121 = arith.constant 5 : index
    %c0_122 = arith.constant 0 : index
    %312 = vector.load %arg8[%c0_120, %c5_121, %c0_122] : memref<4x8x128xf32, #tpu.memory_space<vmem>>, vector<4x1x128xf32>
    %313 = vector.shape_cast %312 : vector<4x1x128xf32> to vector<4x128xf32>
    %314 = vector.shape_cast %311 : vector<4x128xf32> to vector<4x1x128xf32>
    tpu.vector_store %arg8[%c0_120, %c5_121, %c0_122], %314 {strides = array<i32>} : memref<4x8x128xf32, #tpu.memory_space<vmem>>, vector<4x1x128xf32>,
    %c6 = arith.constant 6 : index
    %c0_123 = arith.constant 0 : index
    %c0_124 = arith.constant 0 : index
    %315 = vector.load %arg10[%c6, %c0_123, %c0_124] : memref<8x4x128xf32, #tpu.memory_space<vmem>>, vector<1x4x128xf32>
    %316 = vector.shape_cast %315 : vector<1x4x128xf32> to vector<4x128xf32>
    %c0_125 = arith.constant 0 : index
    %c6_126 = arith.constant 6 : index
    %c0_127 = arith.constant 0 : index
    %317 = vector.load %arg8[%c0_125, %c6_126, %c0_127] : memref<4x8x128xf32, #tpu.memory_space<vmem>>, vector<4x1x128xf32>
    %318 = vector.shape_cast %317 : vector<4x1x128xf32> to vector<4x128xf32>
    %319 = vector.shape_cast %316 : vector<4x128xf32> to vector<4x1x128xf32>
    tpu.vector_store %arg8[%c0_125, %c6_126, %c0_127], %319 {strides = array<i32>} : memref<4x8x128xf32, #tpu.memory_space<vmem>>, vector<4x1x128xf32>,
    %c7 = arith.constant 7 : index
    %c0_128 = arith.constant 0 : index
    %c0_129 = arith.constant 0 : index
    %320 = vector.load %arg10[%c7, %c0_128, %c0_129] : memref<8x4x128xf32, #tpu.memory_space<vmem>>, vector<1x4x128xf32>
    %321 = vector.shape_cast %320 : vector<1x4x128xf32> to vector<4x128xf32>
    %c0_130 = arith.constant 0 : index
    %c7_131 = arith.constant 7 : index
    %c0_132 = arith.constant 0 : index
    %322 = vector.load %arg8[%c0_130, %c7_131, %c0_132] : memref<4x8x128xf32, #tpu.memory_space<vmem>>, vector<4x1x128xf32>
    %323 = vector.shape_cast %322 : vector<4x1x128xf32> to vector<4x128xf32>
    %324 = vector.shape_cast %321 : vector<4x128xf32> to vector<4x1x128xf32>
    tpu.vector_store %arg8[%c0_130, %c7_131, %c0_132], %324 {strides = array<i32>} : memref<4x8x128xf32, #tpu.memory_space<vmem>>, vector<4x1x128xf32>,
    return
  }
  func.func @transform_0(%arg0: i32, %arg1: i32) -> (i32, i32, i32) {
    %c0_i32 = arith.constant 0 : i32
    %c0_i32_0 = arith.constant 0 : i32
    return %arg1, %arg0, %c0_i32 : i32, i32, i32
  }
  func.func @transform_1(%arg0: i32, %arg1: i32) -> (i32, i32) {
    %c0_i32 = arith.constant 0 : i32
    %c0_i32_0 = arith.constant 0 : i32
    return %arg0, %c0_i32 : i32, i32
  }
  func.func @transform_2(%arg0: i32, %arg1: i32) -> (i32, i32) {
    %c0_i32 = arith.constant 0 : i32
    %c0_i32_0 = arith.constant 0 : i32
    %c0_i32_1 = arith.constant 0 : i32
    return %c0_i32, %c0_i32_0 : i32, i32
  }
  func.func @transform_3(%arg0: i32, %arg1: i32) -> (i32, i32) {
    %c0_i32 = arith.constant 0 : i32
    %c0_i32_0 = arith.constant 0 : i32
    %c0_i32_1 = arith.constant 0 : i32
    return %c0_i32, %c0_i32_0 : i32, i32
  }
  func.func @transform_4(%arg0: i32, %arg1: i32) -> (i32, i32) {
    %c0_i32 = arith.constant 0 : i32
    %c0_i32_0 = arith.constant 0 : i32
    %c0_i32_1 = arith.constant 0 : i32
    return %c0_i32, %c0_i32_0 : i32, i32
  }
  func.func @transform_5(%arg0: i32, %arg1: i32) -> (i32, i32) {
    %c0_i32 = arith.constant 0 : i32
    %c0_i32_0 = arith.constant 0 : i32
    %c0_i32_1 = arith.constant 0 : i32
    return %c0_i32, %c0_i32_0 : i32, i32
  }
  func.func @transform_6(%arg0: i32, %arg1: i32) -> (i32, i32, i32) {
    %c0_i32 = arith.constant 0 : i32
    %c0_i32_0 = arith.constant 0 : i32
    return %arg0, %arg1, %c0_i32 : i32, i32, i32
  }
}

</mosaic_0001>

<llo_original>
// kernel: tpu_custom_call.1
$region0: #{tpu_custom_call.1}
  #allocation0 [shape = 'u32[]', space=smem, size = 0x4, offset = 0x4, fixed_abs, tag = 'smem constant byte address 0x4 - core index']
  #allocation1 [shape = 'u32[144,128]{1,0:T(1,128)}', space=vmem, size = 0x12000, scoped, tag = 'internal scratch']
  #allocation2 [shape = 'f32[4,128]{1,0:T(4,128)}', space=vmem, size = 0x800, scoped, tag = 'scratch operand']
  #allocation3 [shape = 'f32[8,4,128]{2,1,0:T(4,128)}', space=vmem, size = 0x4000, scoped, tag = 'scratch operand']
  %s0 = inlined_call_operand.hbm [shape: bf16[16,4,16], index: 0, kind: input, shape index: {}]
  %s1 = inlined_call_operand.hbm [shape: f32[4,128], index: 1, kind: input, shape index: {}]
  %s2 = inlined_call_operand.hbm [shape: bf16[16,384], index: 2, kind: input, shape index: {}]
  %s3 = inlined_call_operand.vmem [shape: f32[1,384], index: 3, kind: input, shape index: {}]
  %s4 = inlined_call_operand.hbm [shape: bf16[128,384], index: 4, kind: input, shape index: {}]
  %s5 = inlined_call_operand.vmem [shape: f32[1,128], index: 5, kind: input, shape index: {}]
  %s6 = inlined_call_operand.hbm [shape: f32[4,16,128], index: 6, kind: output, shape index: {}]
  %s7 = sld [smem:[#allocation0]]
  $region77: #{tpu_custom_call.1} parent=0
    _
  %s9 = ssub.s32 1, %s7
  %s10 = scalar_select 0, %s9, %s7
  $region1: #{tpu_custom_call.1} parent=0
    #allocation4 [shape = 'u8[16384]{0}', space=vmem, size = 0x4000, scoped, tag = 'input window, operand 0']
    #allocation5 [shape = 's32[2]{0}', space=sflag, size = 0x8, scoped, tag = 'scoped memory for tpu_custom_call.1']
    #allocation6 [shape = 's32[2]{0}', space=sflag, size = 0x8, scoped, tag = 'scoped memory for tpu_custom_call.1']
    #allocation7 [shape = 'u8[2048]{0}', space=vmem, size = 0x800, scoped, tag = 'input window, operand 1, single buffered']
    #allocation8 [shape = 's32[1]{0}', space=sflag, size = 0x4, scoped, tag = 'scoped memory for tpu_custom_call.1']
    #allocation9 [shape = 'u8[12288]{0}', space=vmem, size = 0x3000, scoped, tag = 'input window, operand 2, single buffered']
    #allocation10 [shape = 'u8[98304]{0}', space=vmem, size = 0x18000, scoped, tag = 'input window, operand 4, single buffered']
    #allocation11 [shape = 's32[1]{0}', space=sflag, size = 0x4, scoped, tag = 'scoped memory for tpu_custom_call.1']
    #allocation12 [shape = 'u8[32768]{0}', space=vmem, size = 0x8000, scoped, tag = 'output window, operand 0']
    %11 = vsyncpa [#allocation5], 0
    %s12 = scalar_lea.sflag [#allocation5], 1
    %13 = vsyncpa %s12, 0
    %14 = vsyncpa [#allocation8], 0
    %15 = vsyncpa [#allocation11], 0
    %16 = vsyncpa [#allocation6], 0
    %s17 = scalar_lea.sflag [#allocation6], 1
    %18 = vsyncpa %s17, 0
    loop: start=0, step=1, limit=4
    $region2: #{tpu_custom_call.1} parent=1 // loop_pre_header
      _
    $region3: #{tpu_custom_call.1} parent=1 // loop_header
      %s20 = sphi 0, %s24
      %p21 = scmp.ge.s32.totalorder %s20, 4
      %s27 = sphi 0, %s39
      %s28 = sphi 0, %s35
      %s29 = sphi 0, %s27
      %s30 = sphi 0, %s28
      %s31 = sphi 0, %s29
      %s32 = sphi 0, %s30
      %s44 = sphi 0, %s46
      %s47 = sphi 0, %s44
      %s48 = sphi 0, %s47
      %s64 = sphi 0, %s48
      %s70 = sphi 0, %s72
      %s73 = sphi 0, %s70
      %s74 = sphi 0, %s73
      %s90 = sphi 0, %s74
      %s94 = sphi 0, %s94
      %s96 = sphi 0, %s94
      %s97 = sphi 0, %s96
      %s111 = sphi 0, %s97
      %s115 = sphi 0, %s115
      %s117 = sphi 0, %s115
      %s118 = sphi 0, %s117
      %s132 = sphi 0, %s118
      %s136 = sphi 0, %s136
      %s138 = sphi 0, %s136
      %s139 = sphi 0, %s138
      %s153 = sphi 0, %s139
      %s157 = sphi 0, %s157
      %s159 = sphi 0, %s157
      %s160 = sphi 0, %s159
      %s174 = sphi 0, %s160
      %s182 = sphi 0, %s184
      %s185 = sphi 0, %s182
      %s186 = sphi 0, %s185
      %s202 = sphi 0, %s186
    $region4: #{tpu_custom_call.1} parent=1 // loop_header_branch
      %23 = sbr.rel (%p21) target = $region8
    $region5: #{tpu_custom_call.1} parent=1 // loop_body
      %s25 = ssub.s32 %s20, 1
      %s26 = ssub.s32 %s20, 2
      %s33 = sadd.s32 1, %s28
      %p34 = scmp.ge.s32.totalorder %s33, 2
      %s35 = scalar_select %p34, 0, %s33
      %s36 = sadd.s32 1, %s27
      %s37 = scalar_select %p34, %s36, %s27
      %p38 = scmp.ge.s32.totalorder %s37, 1
      %s39 = scalar_select %p38, 0, %s37
      %s40 = ssub.s32 %s28, %s35
      %s41 = ssub.s32 %s27, %s39
      %s42 = sor.u32 %s40, %s41
      %p43 = scmp.eq.s32.totalorder %s42, 0
      %s45 = sadd.s32 %s44, 1
      %s46 = scalar_select %p43, %s44, %s45
      %p49 = pneg %p43
      %p50 = scmp.eq.s32.totalorder %s20, 1
      %p51 = por %p49, %p50
      %p52 = scmp.ne.s32.totalorder %s44, %s47
      %p53 = scmp.eq.s32.totalorder %s20, 0
      %p54 = por %p52, %p53
      %p55 = scmp.ne.s32.totalorder %s44, %s47
      %p56 = scmp.eq.s32.totalorder %s25, 1
      %p57 = por %p55, %p56
      %p58 = scmp.ne.s32.totalorder %s47, %s48
      %p59 = scmp.eq.s32.totalorder %s25, 0
      %p60 = por %p58, %p59
      %p61 = scmp.ne.s32.totalorder %s47, %s48
      %p62 = scmp.eq.s32.totalorder %s26, 1
      %p63 = por %p61, %p62
      %p65 = scmp.ne.s32.totalorder %s48, %s64
      %p66 = scmp.eq.s32.totalorder %s26, 0
      %p67 = por %p65, %p66
      %s68 = ssub.s32 %s27, %s39
      %p69 = scmp.eq.s32.totalorder %s68, 0
      %s71 = sadd.s32 %s70, 1
      %s72 = scalar_select %p69, %s70, %s71
      %p75 = pneg %p69
      %p76 = scmp.eq.s32.totalorder %s20, 1
      %p77 = por %p75, %p76
      %p78 = scmp.ne.s32.totalorder %s70, %s73
      %p79 = scmp.eq.s32.totalorder %s20, 0
      %p80 = por %p78, %p79
      %p81 = scmp.ne.s32.totalorder %s70, %s73
      %p82 = scmp.eq.s32.totalorder %s25, 1
      %p83 = por %p81, %p82
      %p84 = scmp.ne.s32.totalorder %s73, %s74
      %p85 = scmp.eq.s32.totalorder %s25, 0
      %p86 = por %p84, %p85
      %p87 = scmp.ne.s32.totalorder %s73, %s74
      %p88 = scmp.eq.s32.totalorder %s26, 1
      %p89 = por %p87, %p88
      %p91 = scmp.ne.s32.totalorder %s74, %s90
      %p92 = scmp.eq.s32.totalorder %s26, 0
      %p93 = por %p91, %p92
      %s95 = sadd.s32 %s94, 1
      %p98 = scmp.eq.s32.totalorder %s20, 1
      %p99 = scmp.ne.s32.totalorder %s94, %s96
      %p100 = scmp.eq.s32.totalorder %s20, 0
      %p101 = por %p99, %p100
      %p102 = scmp.ne.s32.totalorder %s94, %s96
      %p103 = scmp.eq.s32.totalorder %s25, 1
      %p104 = por %p102, %p103
      %p105 = scmp.ne.s32.totalorder %s96, %s97
      %p106 = scmp.eq.s32.totalorder %s25, 0
      %p107 = por %p105, %p106
      %p108 = scmp.ne.s32.totalorder %s96, %s97
      %p109 = scmp.eq.s32.totalorder %s26, 1
      %p110 = por %p108, %p109
      %p112 = scmp.ne.s32.totalorder %s97, %s111
      %p113 = scmp.eq.s32.totalorder %s26, 0
      %p114 = por %p112, %p113
      %s116 = sadd.s32 %s115, 1
      %p119 = scmp.eq.s32.totalorder %s20, 1
      %p120 = scmp.ne.s32.totalorder %s115, %s117
      %p121 = scmp.eq.s32.totalorder %s20, 0
      %p122 = por %p120, %p121
      %p123 = scmp.ne.s32.totalorder %s115, %s117
      %p124 = scmp.eq.s32.totalorder %s25, 1
      %p125 = por %p123, %p124
      %p126 = scmp.ne.s32.totalorder %s117, %s118
      %p127 = scmp.eq.s32.totalorder %s25, 0
      %p128 = por %p126, %p127
      %p129 = scmp.ne.s32.totalorder %s117, %s118
      %p130 = scmp.eq.s32.totalorder %s26, 1
      %p131 = por %p129, %p130
      %p133 = scmp.ne.s32.totalorder %s118, %s132
      %p134 = scmp.eq.s32.totalorder %s26, 0
      %p135 = por %p133, %p134
      %s137 = sadd.s32 %s136, 1
      %p140 = scmp.eq.s32.totalorder %s20, 1
      %p141 = scmp.ne.s32.totalorder %s136, %s138
      %p142 = scmp.eq.s32.totalorder %s20, 0
      %p143 = por %p141, %p142
      %p144 = scmp.ne.s32.totalorder %s136, %s138
      %p145 = scmp.eq.s32.totalorder %s25, 1
      %p146 = por %p144, %p145
      %p147 = scmp.ne.s32.totalorder %s138, %s139
      %p148 = scmp.eq.s32.totalorder %s25, 0
      %p149 = por %p147, %p148
      %p150 = scmp.ne.s32.totalorder %s138, %s139
      %p151 = scmp.eq.s32.totalorder %s26, 1
      %p152 = por %p150, %p151
      %p154 = scmp.ne.s32.totalorder %s139, %s153
      %p155 = scmp.eq.s32.totalorder %s26, 0
      %p156 = por %p154, %p155
      %s158 = sadd.s32 %s157, 1
      %p161 = scmp.eq.s32.totalorder %s20, 1
      %p162 = scmp.ne.s32.totalorder %s157, %s159
      %p163 = scmp.eq.s32.totalorder %s20, 0
      %p164 = por %p162, %p163
      %p165 = scmp.ne.s32.totalorder %s157, %s159
      %p166 = scmp.eq.s32.totalorder %s25, 1
      %p167 = por %p165, %p166
      %p168 = scmp.ne.s32.totalorder %s159, %s160
      %p169 = scmp.eq.s32.totalorder %s25, 0
      %p170 = por %p168, %p169
      %p171 = scmp.ne.s32.totalorder %s159, %s160
      %p172 = scmp.eq.s32.totalorder %s26, 1
      %p173 = por %p171, %p172
      %p175 = scmp.ne.s32.totalorder %s160, %s174
      %p176 = scmp.eq.s32.totalorder %s26, 0
      %p177 = por %p175, %p176
      %s178 = ssub.s32 %s27, %s39
      %s179 = ssub.s32 %s28, %s35
      %s180 = sor.u32 %s178, %s179
      %p181 = scmp.eq.s32.totalorder %s180, 0
      %s183 = sadd.s32 %s182, 1
      %s184 = scalar_select %p181, %s182, %s183
      %p187 = pneg %p181
      %p188 = scmp.eq.s32.totalorder %s20, 1
      %p189 = por %p187, %p188
      %p190 = scmp.ne.s32.totalorder %s182, %s185
      %p191 = scmp.eq.s32.totalorder %s20, 0
      %p192 = por %p190, %p191
      %p193 = scmp.ne.s32.totalorder %s182, %s185
      %p194 = scmp.eq.s32.totalorder %s25, 1
      %p195 = por %p193, %p194
      %p196 = scmp.ne.s32.totalorder %s185, %s186
      %p197 = scmp.eq.s32.totalorder %s25, 0
      %p198 = por %p196, %p197
      %p199 = scmp.ne.s32.totalorder %s185, %s186
      %p200 = scmp.eq.s32.totalorder %s26, 1
      %p201 = por %p199, %p200
      %p203 = scmp.ne.s32.totalorder %s186, %s202
      %p204 = scmp.eq.s32.totalorder %s26, 0
      %p205 = por %p203, %p204
      %p206 = scmp.le.s32.totalorder 1, %s20
      %p207 = scmp.lt.s32.totalorder %s20, 3
      %p208 = pnand %p206, %p207
      %p209 = pneg %p208
      // Predicated region
      $region9: #{tpu_custom_call.1} parent=5 // pred_check
        _
      $region10: #{tpu_custom_call.1} parent=5 // pred_check_branch
        %211 = sbr.rel (%p208) target = $region12
      $region11: #{tpu_custom_call.1} parent=5 // pred_region
        %s212 = ssub.s32 %s20, 1
        // Predicated region
        $region13: #{tpu_custom_call.1} parent=11 // pred_check
          %p213 = pneg %p86
        $region14: #{tpu_custom_call.1} parent=11 // pred_check_branch
          %215 = sbr.rel (%p213) target = $region16
        $region15: #{tpu_custom_call.1} parent=11 // pred_region
          %s217 = ssub.s32 64, 64
          %218 = vsyncadd [#allocation8], %s217
          %s219 = smul.addr %s29, 64
          %s220 = scalar_lea.hbm %s1, %s219
          %s222 = sshll.u32 [#allocation7], 4
          %s223 = int_to_ptr.vmem [resolvable:$true] %s222
          %225 = dma.hbm_to_vmem [thread:$0]  %s220, 64, %s223, [#allocation8]
        $region16: #{tpu_custom_call.1} parent=11 // pred_fallthru
          _
        // Predicated region
        $region17: #{tpu_custom_call.1} parent=11 // pred_check
          %p226 = pneg %p107
        $region18: #{tpu_custom_call.1} parent=11 // pred_check_branch
          %228 = sbr.rel (%p226) target = $region20
        $region19: #{tpu_custom_call.1} parent=11 // pred_region
          %s230 = ssub.s32 384, 384
          %231 = vsyncadd [#allocation8], %s230
          %s232 = sshll.u32 [#allocation9], 4
          %s233 = int_to_ptr.vmem [resolvable:$true] %s232
          %238 = dma.hbm_to_vmem [thread:$0]  %s2, 384, %s233, [#allocation8], 192, 192, 12
        $region20: #{tpu_custom_call.1} parent=11 // pred_fallthru
          _
        // Predicated region
        $region21: #{tpu_custom_call.1} parent=11 // pred_check
          %p239 = pneg %p128
        $region22: #{tpu_custom_call.1} parent=11 // pred_check_branch
          %241 = sbr.rel (%p239) target = $region24
        $region23: #{tpu_custom_call.1} parent=11 // pred_region
          _
        $region24: #{tpu_custom_call.1} parent=11 // pred_fallthru
          _
        // Predicated region
        $region25: #{tpu_custom_call.1} parent=11 // pred_check
          %p242 = pneg %p149
        $region26: #{tpu_custom_call.1} parent=11 // pred_check_branch
          %244 = sbr.rel (%p242) target = $region28
        $region27: #{tpu_custom_call.1} parent=11 // pred_region
          %s246 = ssub.s32 3072, 3072
          %247 = vsyncadd [#allocation11], %s246
          %s248 = sshll.u32 [#allocation10], 4
          %s249 = int_to_ptr.vmem [resolvable:$true] %s248
          %254 = dma.hbm_to_vmem [thread:$0]  %s4, 3072, %s249, [#allocation11], 192, 192, 12
        $region28: #{tpu_custom_call.1} parent=11 // pred_fallthru
          _
        // Predicated region
        $region29: #{tpu_custom_call.1} parent=11 // pred_check
          %p255 = pneg %p170
        $region30: #{tpu_custom_call.1} parent=11 // pred_check_branch
          %257 = sbr.rel (%p255) target = $region32
        $region31: #{tpu_custom_call.1} parent=11 // pred_region
          _
        $region32: #{tpu_custom_call.1} parent=11 // pred_fallthru
          _
      $region12: #{tpu_custom_call.1} parent=5 // pred_fallthru
        _
      %p258 = scmp.lt.s32.totalorder %s20, 2
      // Predicated region
      $region33: #{tpu_custom_call.1} parent=5 // pred_check
        %p259 = pneg %p258
      $region34: #{tpu_custom_call.1} parent=5 // pred_check_branch
        %261 = sbr.rel (%p259) target = $region36
      $region35: #{tpu_custom_call.1} parent=5 // pred_region
        // Predicated region
        $region37: #{tpu_custom_call.1} parent=35 // pred_check
          %p262 = pneg %p54
        $region38: #{tpu_custom_call.1} parent=35 // pred_check_branch
          %264 = sbr.rel (%p262) target = $region40
        $region39: #{tpu_custom_call.1} parent=35 // pred_region
          %s265 = sand.u32 %s44, 1
          %s266 = scalar_lea.sflag [#allocation5], %s265
          %s267 = sand.u32 %s44, 1
          %s268 = smul.addr %s267, 16
          %s269 = scalar_lea.vmem [#allocation4], %s268
          %s270 = smul.u32 8, %s28
          %s272 = ssub.s32 256, 256
          %273 = vsyncadd %s266, %s272
          %s274 = sadd.s32 %s27, %s270
          %s275 = smul.addr %s274, 32
          %s276 = scalar_lea.hbm %s0, %s275
          %s277 = sshll.u32 %s269, 4
          %s278 = int_to_ptr.vmem [resolvable:$true] %s277
          %283 = dma.hbm_to_vmem [thread:$0]  %s276, 256, %s278, %s266, 32, 32, 2
        $region40: #{tpu_custom_call.1} parent=35 // pred_fallthru
          _
      $region36: #{tpu_custom_call.1} parent=5 // pred_fallthru
        _
      %p284 = scmp.le.s32.totalorder 1, %s20
      %p285 = scmp.lt.s32.totalorder %s20, 3
      %p286 = pnand %p284, %p285
      %p287 = pneg %p286
      // Predicated region
      $region41: #{tpu_custom_call.1} parent=5 // pred_check
        _
      $region42: #{tpu_custom_call.1} parent=5 // pred_check_branch
        %289 = sbr.rel (%p286) target = $region44
      $region43: #{tpu_custom_call.1} parent=5 // pred_region
        %s290 = ssub.s32 %s20, 1
        %s291 = sand.u32 %s47, 1
        %s292 = scalar_lea.sflag [#allocation5], %s291
        %s293 = sand.u32 %s47, 1
        %s294 = smul.addr %s293, 16
        %s295 = scalar_lea.vmem [#allocation4], %s294
        // Predicated region
        $region45: #{tpu_custom_call.1} parent=43 // pred_check
          %p296 = pneg %p60
        $region46: #{tpu_custom_call.1} parent=43 // pred_check_branch
          %298 = sbr.rel (%p296) target = $region48
        $region47: #{tpu_custom_call.1} parent=43 // pred_region
          %299 = dma.done %s292, 256
        $region48: #{tpu_custom_call.1} parent=43 // pred_fallthru
          _
        // Predicated region
        $region49: #{tpu_custom_call.1} parent=43 // pred_check
          %p300 = pneg %p86
        $region50: #{tpu_custom_call.1} parent=43 // pred_check_branch
          %302 = sbr.rel (%p300) target = $region52
        $region51: #{tpu_custom_call.1} parent=43 // pred_region
          %303 = dma.done [#allocation8], 64
        $region52: #{tpu_custom_call.1} parent=43 // pred_fallthru
          _
        // Predicated region
        $region53: #{tpu_custom_call.1} parent=43 // pred_check
          %p304 = pneg %p107
        $region54: #{tpu_custom_call.1} parent=43 // pred_check_branch
          %306 = sbr.rel (%p304) target = $region56
        $region55: #{tpu_custom_call.1} parent=43 // pred_region
          %307 = dma.done [#allocation8], 384
        $region56: #{tpu_custom_call.1} parent=43 // pred_fallthru
          _
        // Predicated region
        $region57: #{tpu_custom_call.1} parent=43 // pred_check
          %p308 = pneg %p149
        $region58: #{tpu_custom_call.1} parent=43 // pred_check_branch
          %310 = sbr.rel (%p308) target = $region60
        $region59: #{tpu_custom_call.1} parent=43 // pred_region
          %311 = dma.done [#allocation11], 3072
        $region60: #{tpu_custom_call.1} parent=43 // pred_fallthru
          _
        %s312 = sand.u32 %s47, 1
        %s313 = scalar_lea.sflag [#allocation5], %s312
        %s314 = sand.u32 %s47, 1
        %s315 = smul.addr %s314, 16
        %s316 = scalar_lea.vmem [#allocation4], %s315
        %p317 = pneg %p60
        %p318 = pneg %p57
        %p319 = pneg %p86
        %p320 = pneg %p83
        %p321 = pneg %p107
        %p322 = pneg %p104
        %p323 = pneg %p128
        %p324 = pneg %p125
        %p325 = pneg %p149
        %p326 = pneg %p146
        %p327 = pneg %p170
        %p328 = pneg %p167
        %p329 = pneg %p198
        %p330 = pneg %p195
        %s331 = sand.u32 %s185, 1
        %s332 = scalar_lea.sflag [#allocation6], %s331
        %s333 = sand.u32 %s185, 1
        %s334 = smul.addr %s333, 32
        %s335 = scalar_lea.vmem [#allocation12], %s334
        %s336 = smul.u32 8, %s30
        %s337 = smul.u32 4, %s29
        %p339 = scmp.eq.s32.totalorder %s30, 0
        // Predicated region
        $region61: #{tpu_custom_call.1} parent=43 // pred_check
          %p340 = pneg %p339
        $region62: #{tpu_custom_call.1} parent=43 // pred_check_branch
          %342 = sbr.rel (%p340) target = $region64
        $region63: #{tpu_custom_call.1} parent=43 // pred_region
          %v343 = vld [vmem:[#allocation7] sm:$0xf]
          %344 = vst [vmem:[#allocation2] sm:$0xf] %v343
        $region64: #{tpu_custom_call.1} parent=43 // pred_fallthru
          _
        %v345 = vld [vmem:[#allocation9] sm:$0xff]
        %v346 = vld [vmem:[#allocation9 + $0x8] sm:$0xf]
        %v347 = vld [vmem:[#allocation9 + $0xc] sm:$0xff]
        %v348 = vld [vmem:[#allocation9 + $0x14] sm:$0xf]
        %v349 = vld [vmem:[#allocation10] sm:$0xff]
        %v350 = vld [vmem:[#allocation10 + $0x8] sm:$0xf]
        %v351 = vld [vmem:[#allocation10 + $0xc] sm:$0xff]
        %v352 = vld [vmem:[#allocation10 + $0x14] sm:$0xf]
        %v353 = vld [vmem:[#allocation10 + $0x18] sm:$0xff]
        %v354 = vld [vmem:[#allocation10 + $0x20] sm:$0xf]
        %v355 = vld [vmem:[#allocation10 + $0x24] sm:$0xff]
        %v356 = vld [vmem:[#allocation10 + $0x2c] sm:$0xf]
        %v357 = vld [vmem:[#allocation10 + $0x30] sm:$0xff]
        %v358 = vld [vmem:[#allocation10 + $0x38] sm:$0xf]
        %v359 = vld [vmem:[#allocation10 + $0x3c] sm:$0xff]
        %v360 = vld [vmem:[#allocation10 + $0x44] sm:$0xf]
        %v361 = vld [vmem:[#allocation10 + $0x48] sm:$0xff]
        %v362 = vld [vmem:[#allocation10 + $0x50] sm:$0xf]
        %v363 = vld [vmem:[#allocation10 + $0x54] sm:$0xff]
        %v364 = vld [vmem:[#allocation10 + $0x5c] sm:$0xf]
        %v365 = vld [vmem:[#allocation10 + $0x60] sm:$0xff]
        %v366 = vld [vmem:[#allocation10 + $0x68] sm:$0xf]
        %v367 = vld [vmem:[#allocation10 + $0x6c] sm:$0xff]
        %v368 = vld [vmem:[#allocation10 + $0x74] sm:$0xf]
        %v369 = vld [vmem:[#allocation10 + $0x78] sm:$0xff]
        %v370 = vld [vmem:[#allocation10 + $0x80] sm:$0xf]
        %v371 = vld [vmem:[#allocation10 + $0x84] sm:$0xff]
        %v372 = vld [vmem:[#allocation10 + $0x8c] sm:$0xf]
        %v373 = vld [vmem:[#allocation10 + $0x90] sm:$0xff]
        %v374 = vld [vmem:[#allocation10 + $0x98] sm:$0xf]
        %v375 = vld [vmem:[#allocation10 + $0x9c] sm:$0xff]
        %v376 = vld [vmem:[#allocation10 + $0xa4] sm:$0xf]
        %v377 = vld [vmem:[#allocation10 + $0xa8] sm:$0xff]
        %v378 = vld [vmem:[#allocation10 + $0xb0] sm:$0xf]
        %v379 = vld [vmem:[#allocation10 + $0xb4] sm:$0xff]
        %v380 = vld [vmem:[#allocation10 + $0xbc] sm:$0xf]
        %v381 = vld [vmem:[%s3] sm:$0x7]
        %v383 = vlaneseq
        %v384 = vshrl.u32 %v383, 7
        %v385 = vsub.s32 0, %v384
        %v386 = vrot.slane %v381, %v385
        %v387 = vlaneseq
        %v388 = vshrl.u32 %v387, 7
        %v389 = vsub.s32 1, %v388
        %v390 = vrot.slane %v381, %v389
        %v391 = vlaneseq
        %v392 = vshrl.u32 %v391, 7
        %v393 = vsub.s32 2, %v392
        %v394 = vrot.slane %v381, %v393
        %v398 = vld [vmem:[%s5] sm:$0x1]
        %v400 = vlaneseq
        %v401 = vshrl.u32 %v400, 7
        %v402 = vsub.s32 0, %v401
        %v403 = vrot.slane %v398, %v402
        %v405 = vld [vmem:[#allocation2] sm:$0xf]
        %v406 = vld [vmem:[%s295] sm:$0x3]
        %v411 = vunpack.c.l.b16 %v345
        %v412 = vunpack.c.h.b16 %v345
        %v413 = vunpack.c.l.b16 %v346
        %v414 = vunpack.c.l.b16 %v347
        %v415 = vunpack.c.h.b16 %v347
        %v416 = vunpack.c.l.b16 %v348
        %v417 = vpack.c.b16 %v414, %v411
        %v418 = vpack.c.b16 %v415, %v412
        %v419 = vpack.c.b16 %v416, %v413
        %vm423 = vcmask 130048
        %v425 = vsel %vm423, %v406, 0
        %427 = vmatprep.subr.bf16.mxu0 %v418
        %428 = vmatpush1.bf16.msra.mxu0 %v417
        %429 = vmatprep.subr.bf16.mxu0 0
        %430 = vmatpush1.bf16.msra.mxu0 0
        %431 = vmatprep.subr.bf16.mxu0 0
        %432 = vmatpush1.bf16.msra.mxu0 0
        %433 = vmatprep.subr.bf16.mxu0 0
        %434 = vmatpush1.bf16.msra.mxu0 0
        %435 = vmatprep.subr.bf16.mxu0 0
        %436 = vmatpush1.bf16.msra.mxu0 0
        %437 = vmatprep.subr.bf16.mxu0 0
        %438 = vmatpush1.bf16.msra.mxu0 0
        %439 = vmatprep.subr.bf16.mxu0 0
        %440 = vmatpush1.bf16.msra.mxu0 0
        %441 = vmatprep.subr.bf16.mxu0 0
        %442 = vmatpush1.bf16.msra.mxu0 0
        %443 = vmatprep.subr.bf16.mxu0 0
        %444 = vmatpush1.bf16.msra.mxu0 0
        %445 = vmatprep.subr.bf16.mxu0 0
        %446 = vmatpush1.bf16.msra.mxu0 0
        %447 = vmatprep.subr.bf16.mxu0 0
        %448 = vmatpush1.bf16.msra.mxu0 0
        %449 = vmatprep.subr.bf16.mxu0 0
        %450 = vmatpush1.bf16.msra.mxu0 0
        %451 = vmatprep.subr.bf16.mxu0 0
        %452 = vmatpush1.bf16.msra.mxu0 0
        %453 = vmatprep.subr.bf16.mxu0 0
        %454 = vmatpush1.bf16.msra.mxu0 0
        %455 = vmatprep.subr.bf16.mxu0 0
        %456 = vmatpush1.bf16.msra.mxu0 0
        %457 = vmatprep.subr.bf16.mxu0 0
        %458 = vmatpush1.bf16.msra.mxu0 0
        %459 = vmatprep.mubr.bf16.mxu0 0
        %460 = vmatmul.mubr.bf16.gmra.mrb[0].mxu0 %v425
        %v461 = vpop.f32.mrb[0].mxu0
        %v462 = vadd.f32 %v386, %v461
        %v463 = vpop.f32.mrb[0].mxu0
        %v464 = vadd.f32 %v390, %v463
        %v465 = vpop.f32.mrb[0].mxu0
        %v466 = vpop.f32.mrb[0].mxu0
        %467 = vdwg.mxu0
        %468 = vmatprep.subr.bf16.mxu0 0
        %469 = vmatpush1.bf16.msra.mxu0 %v419
        %470 = vmatprep.subr.bf16.mxu0 0
        %471 = vmatpush1.bf16.msra.mxu0 0
        %472 = vmatprep.subr.bf16.mxu0 0
        %473 = vmatpush1.bf16.msra.mxu0 0
        %474 = vmatprep.subr.bf16.mxu0 0
        %475 = vmatpush1.bf16.msra.mxu0 0
        %476 = vmatprep.subr.bf16.mxu0 0
        %477 = vmatpush1.bf16.msra.mxu0 0
        %478 = vmatprep.subr.bf16.mxu0 0
        %479 = vmatpush1.bf16.msra.mxu0 0
        %480 = vmatprep.subr.bf16.mxu0 0
        %481 = vmatpush1.bf16.msra.mxu0 0
        %482 = vmatprep.subr.bf16.mxu0 0
        %483 = vmatpush1.bf16.msra.mxu0 0
        %484 = vmatprep.subr.bf16.mxu0 0
        %485 = vmatpush1.bf16.msra.mxu0 0
        %486 = vmatprep.subr.bf16.mxu0 0
        %487 = vmatpush1.bf16.msra.mxu0 0
        %488 = vmatprep.subr.bf16.mxu0 0
        %489 = vmatpush1.bf16.msra.mxu0 0
        %490 = vmatprep.subr.bf16.mxu0 0
        %491 = vmatpush1.bf16.msra.mxu0 0
        %492 = vmatprep.subr.bf16.mxu0 0
        %493 = vmatpush1.bf16.msra.mxu0 0
        %494 = vmatprep.subr.bf16.mxu0 0
        %495 = vmatpush1.bf16.msra.mxu0 0
        %496 = vmatprep.subr.bf16.mxu0 0
        %497 = vmatpush1.bf16.msra.mxu0 0
        %498 = vmatprep.subr.bf16.mxu0 0
        %499 = vmatpush1.bf16.msra.mxu0 0
        %500 = vmatprep.mubr.bf16.mxu0 0
        %501 = vmatmul.mubr.bf16.gmra.mrb[0].mxu0 %v425
        %v502 = vpop.f32.mrb[0].mxu0
        %v503 = vadd.f32 %v394, %v502
        %v504 = vpop.f32.mrb[0].mxu0
        %v505 = vpop.f32.mrb[0].mxu0
        %v506 = vpop.f32.mrb[0].mxu0
        %507 = vdwg.mxu0
        %v508 = vpack.c.bf16 %v405, %v405
        %v541 = vunpack.c.l.b16 %v349
        %v542 = vunpack.c.h.b16 %v349
        %v543 = vunpack.c.l.b16 %v350
        %v544 = vunpack.c.l.b16 %v351
        %v545 = vunpack.c.h.b16 %v351
        %v546 = vunpack.c.l.b16 %v352
        %v547 = vunpack.c.l.b16 %v353
        %v548 = vunpack.c.h.b16 %v353
        %v549 = vunpack.c.l.b16 %v354
        %v550 = vunpack.c.l.b16 %v355
        %v551 = vunpack.c.h.b16 %v355
        %v552 = vunpack.c.l.b16 %v356
        %v553 = vunpack.c.l.b16 %v357
        %v554 = vunpack.c.h.b16 %v357
        %v555 = vunpack.c.l.b16 %v358
        %v556 = vunpack.c.l.b16 %v359
        %v557 = vunpack.c.h.b16 %v359
        %v558 = vunpack.c.l.b16 %v360
        %v559 = vunpack.c.l.b16 %v361
        %v560 = vunpack.c.h.b16 %v361
        %v561 = vunpack.c.l.b16 %v362
        %v562 = vunpack.c.l.b16 %v363
        %v563 = vunpack.c.h.b16 %v363
        %v564 = vunpack.c.l.b16 %v364
        %v565 = vunpack.c.l.b16 %v365
        %v566 = vunpack.c.h.b16 %v365
        %v567 = vunpack.c.l.b16 %v366
        %v568 = vunpack.c.l.b16 %v367
        %v569 = vunpack.c.h.b16 %v367
        %v570 = vunpack.c.l.b16 %v368
        %v571 = vunpack.c.l.b16 %v369
        %v572 = vunpack.c.h.b16 %v369
        %v573 = vunpack.c.l.b16 %v370
        %v574 = vunpack.c.l.b16 %v371
        %v575 = vunpack.c.h.b16 %v371
        %v576 = vunpack.c.l.b16 %v372
        %v577 = vunpack.c.l.b16 %v373
        %v578 = vunpack.c.h.b16 %v373
        %v579 = vunpack.c.l.b16 %v374
        %v580 = vunpack.c.l.b16 %v375
        %v581 = vunpack.c.h.b16 %v375
        %v582 = vunpack.c.l.b16 %v376
        %v583 = vunpack.c.l.b16 %v377
        %v584 = vunpack.c.h.b16 %v377
        %v585 = vunpack.c.l.b16 %v378
        %v586 = vunpack.c.l.b16 %v379
        %v587 = vunpack.c.h.b16 %v379
        %v588 = vunpack.c.l.b16 %v380
        %v589 = vpack.c.b16 %v544, %v541
        %v590 = vpack.c.b16 %v545, %v542
        %v591 = vpack.c.b16 %v546, %v543
        %v592 = vpack.c.b16 %v550, %v547
        %v593 = vpack.c.b16 %v551, %v548
        %v594 = vpack.c.b16 %v552, %v549
        %v595 = vpack.c.b16 %v556, %v553
        %v596 = vpack.c.b16 %v557, %v554
        %v597 = vpack.c.b16 %v558, %v555
        %v598 = vpack.c.b16 %v562, %v559
        %v599 = vpack.c.b16 %v563, %v560
        %v600 = vpack.c.b16 %v564, %v561
        %v601 = vpack.c.b16 %v568, %v565
        %v602 = vpack.c.b16 %v569, %v566
        %v603 = vpack.c.b16 %v570, %v567
        %v604 = vpack.c.b16 %v574, %v571
        %v605 = vpack.c.b16 %v575, %v572
        %v606 = vpack.c.b16 %v576, %v573
        %v607 = vpack.c.b16 %v580, %v577
        %v608 = vpack.c.b16 %v581, %v578
        %v609 = vpack.c.b16 %v582, %v579
        %v610 = vpack.c.b16 %v586, %v583
        %v611 = vpack.c.b16 %v587, %v584
        %v612 = vpack.c.b16 %v588, %v585
        %637 = vmatprep.subr.bf16.mxu0 %v590
        %638 = vmatpush1.bf16.msra.mxu0 %v589
        %639 = vmatprep.subr.bf16.mxu0 %v593
        %640 = vmatpush1.bf16.msra.mxu0 %v592
        %641 = vmatprep.subr.bf16.mxu0 %v596
        %642 = vmatpush1.bf16.msra.mxu0 %v595
        %643 = vmatprep.subr.bf16.mxu0 %v599
        %644 = vmatpush1.bf16.msra.mxu0 %v598
        %645 = vmatprep.subr.bf16.mxu0 %v602
        %646 = vmatpush1.bf16.msra.mxu0 %v601
        %647 = vmatprep.subr.bf16.mxu0 %v605
        %648 = vmatpush1.bf16.msra.mxu0 %v604
        %649 = vmatprep.subr.bf16.mxu0 %v608
        %650 = vmatpush1.bf16.msra.mxu0 %v607
        %651 = vmatprep.subr.bf16.mxu0 %v611
        %652 = vmatpush1.bf16.msra.mxu0 %v610
        %653 = vmatprep.subr.bf16.mxu0 0
        %654 = vmatpush1.bf16.msra.mxu0 0
        %655 = vmatprep.subr.bf16.mxu0 0
        %656 = vmatpush1.bf16.msra.mxu0 0
        %657 = vmatprep.subr.bf16.mxu0 0
        %658 = vmatpush1.bf16.msra.mxu0 0
        %659 = vmatprep.subr.bf16.mxu0 0
        %660 = vmatpush1.bf16.msra.mxu0 0
        %661 = vmatprep.subr.bf16.mxu0 0
        %662 = vmatpush1.bf16.msra.mxu0 0
        %663 = vmatprep.subr.bf16.mxu0 0
        %664 = vmatpush1.bf16.msra.mxu0 0
        %665 = vmatprep.subr.bf16.mxu0 0
        %666 = vmatpush1.bf16.msra.mxu0 0
        %667 = vmatprep.subr.bf16.mxu0 0
        %668 = vmatpush1.bf16.msra.mxu0 0
        %669 = vmatprep.mubr.bf16.mxu0 0
        %670 = vmatmul.mubr.bf16.gmra.mrb[0].mxu0 %v508
        %v671 = vpop.f32.mrb[0].mxu0
        %v672 = vadd.f32 0.0, %v671
        %v673 = vpop.f32.mrb[0].mxu0
        %v674 = vadd.f32 0.0, %v673
        %v675 = vpop.f32.mrb[0].mxu0
        %v676 = vpop.f32.mrb[0].mxu0
        %677 = vdwg.mxu0
        %678 = vmatprep.subr.bf16.mxu0 0
        %679 = vmatpush1.bf16.msra.mxu0 %v591
        %680 = vmatprep.subr.bf16.mxu0 0
        %681 = vmatpush1.bf16.msra.mxu0 %v594
        %682 = vmatprep.subr.bf16.mxu0 0
        %683 = vmatpush1.bf16.msra.mxu0 %v597
        %684 = vmatprep.subr.bf16.mxu0 0
        %685 = vmatpush1.bf16.msra.mxu0 %v600
        %686 = vmatprep.subr.bf16.mxu0 0
        %687 = vmatpush1.bf16.msra.mxu0 %v603
        %688 = vmatprep.subr.bf16.mxu0 0
        %689 = vmatpush1.bf16.msra.mxu0 %v606
        %690 = vmatprep.subr.bf16.mxu0 0
        %691 = vmatpush1.bf16.msra.mxu0 %v609
        %692 = vmatprep.subr.bf16.mxu0 0
        %693 = vmatpush1.bf16.msra.mxu0 %v612
        %694 = vmatprep.subr.bf16.mxu0 0
        %695 = vmatpush1.bf16.msra.mxu0 0
        %696 = vmatprep.subr.bf16.mxu0 0
        %697 = vmatpush1.bf16.msra.mxu0 0
        %698 = vmatprep.subr.bf16.mxu0 0
        %699 = vmatpush1.bf16.msra.mxu0 0
        %700 = vmatprep.subr.bf16.mxu0 0
        %701 = vmatpush1.bf16.msra.mxu0 0
        %702 = vmatprep.subr.bf16.mxu0 0
        %703 = vmatpush1.bf16.msra.mxu0 0
        %704 = vmatprep.subr.bf16.mxu0 0
        %705 = vmatpush1.bf16.msra.mxu0 0
        %706 = vmatprep.subr.bf16.mxu0 0
        %707 = vmatpush1.bf16.msra.mxu0 0
        %708 = vmatprep.subr.bf16.mxu0 0
        %709 = vmatpush1.bf16.msra.mxu0 0
        %710 = vmatprep.mubr.bf16.mxu0 0
        %711 = vmatmul.mubr.bf16.gmra.mrb[0].mxu0 %v508
        %v712 = vpop.f32.mrb[0].mxu0
        %v713 = vadd.f32 0.0, %v712
        %v714 = vpop.f32.mrb[0].mxu0
        %v715 = vpop.f32.mrb[0].mxu0
        %v716 = vpop.f32.mrb[0].mxu0
        %717 = vdwg.mxu0
        %v718 = vadd.f32 %v462, %v672
        %v719 = vadd.f32 %v464, %v674
        %v720 = vmul.f32 %v718, 0.5
        %v721 = vmul.f32 %v719, 0.5
        %v722 = vtanh.pop %v720
        %v723 = vtanh.pop %v721
        %v724 = vmul.f32 %v722, 0.5
        %v725 = vmul.f32 %v723, 0.5
        %v726 = vadd.f32 %v724, 0.5
        %v727 = vadd.f32 %v725, 0.5
        %v728 = vadd.f32 %v713, %v403
        %v729 = vmul.f32 %v726, %v728
        %v730 = vadd.f32 %v503, %v729
        %v731 = vsub.f32 1.0, %v727
        %v732 = vtanh.pop %v730
        %v733 = vsub.f32 %v732, %v405
        %v734 = vmul.f32 %v731, %v733
        %v735 = vadd.f32 %v405, %v734
        %736 = vst [vmem:[#allocation3] sm:$0xf] %v735
        %s737 = scalar_lea.vmem %s295, 2 [#allocation4]
        %v738 = vld [vmem:[%s737] sm:$0x3]
        %v740 = vsel %vm423, %v738, 0
        %742 = vmatprep.subr.bf16.mxu0 %v418
        %743 = vmatpush1.bf16.msra.mxu0 %v417
        %744 = vmatprep.subr.bf16.mxu0 0
        %745 = vmatpush1.bf16.msra.mxu0 0
        %746 = vmatprep.subr.bf16.mxu0 0
        %747 = vmatpush1.bf16.msra.mxu0 0
        %748 = vmatprep.subr.bf16.mxu0 0
        %749 = vmatpush1.bf16.msra.mxu0 0
        %750 = vmatprep.subr.bf16.mxu0 0
        %751 = vmatpush1.bf16.msra.mxu0 0
        %752 = vmatprep.subr.bf16.mxu0 0
        %753 = vmatpush1.bf16.msra.mxu0 0
        %754 = vmatprep.subr.bf16.mxu0 0
        %755 = vmatpush1.bf16.msra.mxu0 0
        %756 = vmatprep.subr.bf16.mxu0 0
        %757 = vmatpush1.bf16.msra.mxu0 0
        %758 = vmatprep.subr.bf16.mxu0 0
        %759 = vmatpush1.bf16.msra.mxu0 0
        %760 = vmatprep.subr.bf16.mxu0 0
        %761 = vmatpush1.bf16.msra.mxu0 0
        %762 = vmatprep.subr.bf16.mxu0 0
        %763 = vmatpush1.bf16.msra.mxu0 0
        %764 = vmatprep.subr.bf16.mxu0 0
        %765 = vmatpush1.bf16.msra.mxu0 0
        %766 = vmatprep.subr.bf16.mxu0 0
        %767 = vmatpush1.bf16.msra.mxu0 0
        %768 = vmatprep.subr.bf16.mxu0 0
        %769 = vmatpush1.bf16.msra.mxu0 0
        %770 = vmatprep.subr.bf16.mxu0 0
        %771 = vmatpush1.bf16.msra.mxu0 0
        %772 = vmatprep.subr.bf16.mxu0 0
        %773 = vmatpush1.bf16.msra.mxu0 0
        %774 = vmatprep.mubr.bf16.mxu0 0
        %775 = vmatmul.mubr.bf16.gmra.mrb[0].mxu0 %v740
        %v776 = vpop.f32.mrb[0].mxu0
        %v777 = vadd.f32 %v386, %v776
        %v778 = vpop.f32.mrb[0].mxu0
        %v779 = vadd.f32 %v390, %v778
        %v780 = vpop.f32.mrb[0].mxu0
        %v781 = vpop.f32.mrb[0].mxu0
        %782 = vdwg.mxu0
        %783 = vmatprep.subr.bf16.mxu0 0
        %784 = vmatpush1.bf16.msra.mxu0 %v419
        %785 = vmatprep.subr.bf16.mxu0 0
        %786 = vmatpush1.bf16.msra.mxu0 0
        %787 = vmatprep.subr.bf16.mxu0 0
        %788 = vmatpush1.bf16.msra.mxu0 0
        %789 = vmatprep.subr.bf16.mxu0 0
        %790 = vmatpush1.bf16.msra.mxu0 0
        %791 = vmatprep.subr.bf16.mxu0 0
        %792 = vmatpush1.bf16.msra.mxu0 0
        %793 = vmatprep.subr.bf16.mxu0 0
        %794 = vmatpush1.bf16.msra.mxu0 0
        %795 = vmatprep.subr.bf16.mxu0 0
        %796 = vmatpush1.bf16.msra.mxu0 0
        %797 = vmatprep.subr.bf16.mxu0 0
        %798 = vmatpush1.bf16.msra.mxu0 0
        %799 = vmatprep.subr.bf16.mxu0 0
        %800 = vmatpush1.bf16.msra.mxu0 0
        %801 = vmatprep.subr.bf16.mxu0 0
        %802 = vmatpush1.bf16.msra.mxu0 0
        %803 = vmatprep.subr.bf16.mxu0 0
        %804 = vmatpush1.bf16.msra.mxu0 0
        %805 = vmatprep.subr.bf16.mxu0 0
        %806 = vmatpush1.bf16.msra.mxu0 0
        %807 = vmatprep.subr.bf16.mxu0 0
        %808 = vmatpush1.bf16.msra.mxu0 0
        %809 = vmatprep.subr.bf16.mxu0 0
        %810 = vmatpush1.bf16.msra.mxu0 0
        %811 = vmatprep.subr.bf16.mxu0 0
        %812 = vmatpush1.bf16.msra.mxu0 0
        %813 = vmatprep.subr.bf16.mxu0 0
        %814 = vmatpush1.bf16.msra.mxu0 0
        %815 = vmatprep.mubr.bf16.mxu0 0
        %816 = vmatmul.mubr.bf16.gmra.mrb[0].mxu0 %v740
        %v817 = vpop.f32.mrb[0].mxu0
        %v818 = vadd.f32 %v394, %v817
        %v819 = vpop.f32.mrb[0].mxu0
        %v820 = vpop.f32.mrb[0].mxu0
        %v821 = vpop.f32.mrb[0].mxu0
        %822 = vdwg.mxu0
        %v823 = vpack.c.bf16 %v735, %v735
        %824 = vmatprep.subr.bf16.mxu0 %v590
        %825 = vmatpush1.bf16.msra.mxu0 %v589
        %826 = vmatprep.subr.bf16.mxu0 %v593
        %827 = vmatpush1.bf16.msra.mxu0 %v592
        %828 = vmatprep.subr.bf16.mxu0 %v596
        %829 = vmatpush1.bf16.msra.mxu0 %v595
        %830 = vmatprep.subr.bf16.mxu0 %v599
        %831 = vmatpush1.bf16.msra.mxu0 %v598
        %832 = vmatprep.subr.bf16.mxu0 %v602
        %833 = vmatpush1.bf16.msra.mxu0 %v601
        %834 = vmatprep.subr.bf16.mxu0 %v605
        %835 = vmatpush1.bf16.msra.mxu0 %v604
        %836 = vmatprep.subr.bf16.mxu0 %v608
        %837 = vmatpush1.bf16.msra.mxu0 %v607
        %838 = vmatprep.subr.bf16.mxu0 %v611
        %839 = vmatpush1.bf16.msra.mxu0 %v610
        %840 = vmatprep.subr.bf16.mxu0 0
        %841 = vmatpush1.bf16.msra.mxu0 0
        %842 = vmatprep.subr.bf16.mxu0 0
        %843 = vmatpush1.bf16.msra.mxu0 0
        %844 = vmatprep.subr.bf16.mxu0 0
        %845 = vmatpush1.bf16.msra.mxu0 0
        %846 = vmatprep.subr.bf16.mxu0 0
        %847 = vmatpush1.bf16.msra.mxu0 0
        %848 = vmatprep.subr.bf16.mxu0 0
        %849 = vmatpush1.bf16.msra.mxu0 0
        %850 = vmatprep.subr.bf16.mxu0 0
        %851 = vmatpush1.bf16.msra.mxu0 0
        %852 = vmatprep.subr.bf16.mxu0 0
        %853 = vmatpush1.bf16.msra.mxu0 0
        %854 = vmatprep.subr.bf16.mxu0 0
        %855 = vmatpush1.bf16.msra.mxu0 0
        %856 = vmatprep.mubr.bf16.mxu0 0
        %857 = vmatmul.mubr.bf16.gmra.mrb[0].mxu0 %v823
        %v858 = vpop.f32.mrb[0].mxu0
        %v859 = vadd.f32 0.0, %v858
        %v860 = vpop.f32.mrb[0].mxu0
        %v861 = vadd.f32 0.0, %v860
        %v862 = vpop.f32.mrb[0].mxu0
        %v863 = vpop.f32.mrb[0].mxu0
        %864 = vdwg.mxu0
        %865 = vmatprep.subr.bf16.mxu0 0
        %866 = vmatpush1.bf16.msra.mxu0 %v591
        %867 = vmatprep.subr.bf16.mxu0 0
        %868 = vmatpush1.bf16.msra.mxu0 %v594
        %869 = vmatprep.subr.bf16.mxu0 0
        %870 = vmatpush1.bf16.msra.mxu0 %v597
        %871 = vmatprep.subr.bf16.mxu0 0
        %872 = vmatpush1.bf16.msra.mxu0 %v600
        %873 = vmatprep.subr.bf16.mxu0 0
        %874 = vmatpush1.bf16.msra.mxu0 %v603
        %875 = vmatprep.subr.bf16.mxu0 0
        %876 = vmatpush1.bf16.msra.mxu0 %v606
        %877 = vmatprep.subr.bf16.mxu0 0
        %878 = vmatpush1.bf16.msra.mxu0 %v609
        %879 = vmatprep.subr.bf16.mxu0 0
        %880 = vmatpush1.bf16.msra.mxu0 %v612
        %881 = vmatprep.subr.bf16.mxu0 0
        %882 = vmatpush1.bf16.msra.mxu0 0
        %883 = vmatprep.subr.bf16.mxu0 0
        %884 = vmatpush1.bf16.msra.mxu0 0
        %885 = vmatprep.subr.bf16.mxu0 0
        %886 = vmatpush1.bf16.msra.mxu0 0
        %887 = vmatprep.subr.bf16.mxu0 0
        %888 = vmatpush1.bf16.msra.mxu0 0
        %889 = vmatprep.subr.bf16.mxu0 0
        %890 = vmatpush1.bf16.msra.mxu0 0
        %891 = vmatprep.subr.bf16.mxu0 0
        %892 = vmatpush1.bf16.msra.mxu0 0
        %893 = vmatprep.subr.bf16.mxu0 0
        %894 = vmatpush1.bf16.msra.mxu0 0
        %895 = vmatprep.subr.bf16.mxu0 0
        %896 = vmatpush1.bf16.msra.mxu0 0
        %897 = vmatprep.mubr.bf16.mxu0 0
        %898 = vmatmul.mubr.bf16.gmra.mrb[0].mxu0 %v823
        %v899 = vpop.f32.mrb[0].mxu0
        %v900 = vadd.f32 0.0, %v899
        %v901 = vpop.f32.mrb[0].mxu0
        %v902 = vpop.f32.mrb[0].mxu0
        %v903 = vpop.f32.mrb[0].mxu0
        %904 = vdwg.mxu0
        %v905 = vadd.f32 %v777, %v859
        %v906 = vadd.f32 %v779, %v861
        %v907 = vmul.f32 %v905, 0.5
        %v908 = vmul.f32 %v906, 0.5
        %v909 = vtanh.pop %v907
        %v910 = vtanh.pop %v908
        %v911 = vmul.f32 %v909, 0.5
        %v912 = vmul.f32 %v910, 0.5
        %v913 = vadd.f32 %v911, 0.5
        %v914 = vadd.f32 %v912, 0.5
        %v915 = vadd.f32 %v900, %v403
        %v916 = vmul.f32 %v913, %v915
        %v917 = vadd.f32 %v818, %v916
        %v918 = vsub.f32 1.0, %v914
        %v919 = vtanh.pop %v917
        %v920 = vsub.f32 %v919, %v735
        %v921 = vmul.f32 %v918, %v920
        %v922 = vadd.f32 %v735, %v921
        %s923 = scalar_lea.vmem [#allocation3], 4
        %924 = vst [vmem:[%s923] sm:$0xf] %v922
        %s925 = scalar_lea.vmem %s295, 4 [#allocation4]
        %v926 = vld [vmem:[%s925] sm:$0x3]
        %v928 = vsel %vm423, %v926, 0
        %930 = vmatprep.subr.bf16.mxu0 %v418
        %931 = vmatpush1.bf16.msra.mxu0 %v417
        %932 = vmatprep.subr.bf16.mxu0 0
        %933 = vmatpush1.bf16.msra.mxu0 0
        %934 = vmatprep.subr.bf16.mxu0 0
        %935 = vmatpush1.bf16.msra.mxu0 0
        %936 = vmatprep.subr.bf16.mxu0 0
        %937 = vmatpush1.bf16.msra.mxu0 0
        %938 = vmatprep.subr.bf16.mxu0 0
        %939 = vmatpush1.bf16.msra.mxu0 0
        %940 = vmatprep.subr.bf16.mxu0 0
        %941 = vmatpush1.bf16.msra.mxu0 0
        %942 = vmatprep.subr.bf16.mxu0 0
        %943 = vmatpush1.bf16.msra.mxu0 0
        %944 = vmatprep.subr.bf16.mxu0 0
        %945 = vmatpush1.bf16.msra.mxu0 0
        %946 = vmatprep.subr.bf16.mxu0 0
        %947 = vmatpush1.bf16.msra.mxu0 0
        %948 = vmatprep.subr.bf16.mxu0 0
        %949 = vmatpush1.bf16.msra.mxu0 0
        %950 = vmatprep.subr.bf16.mxu0 0
        %951 = vmatpush1.bf16.msra.mxu0 0
        %952 = vmatprep.subr.bf16.mxu0 0
        %953 = vmatpush1.bf16.msra.mxu0 0
        %954 = vmatprep.subr.bf16.mxu0 0
        %955 = vmatpush1.bf16.msra.mxu0 0
        %956 = vmatprep.subr.bf16.mxu0 0
        %957 = vmatpush1.bf16.msra.mxu0 0
        %958 = vmatprep.subr.bf16.mxu0 0
        %959 = vmatpush1.bf16.msra.mxu0 0
        %960 = vmatprep.subr.bf16.mxu0 0
        %961 = vmatpush1.bf16.msra.mxu0 0
        %962 = vmatprep.mubr.bf16.mxu0 0
        %963 = vmatmul.mubr.bf16.gmra.mrb[0].mxu0 %v928
        %v964 = vpop.f32.mrb[0].mxu0
        %v965 = vadd.f32 %v386, %v964
        %v966 = vpop.f32.mrb[0].mxu0
        %v967 = vadd.f32 %v390, %v966
        %v968 = vpop.f32.mrb[0].mxu0
        %v969 = vpop.f32.mrb[0].mxu0
        %970 = vdwg.mxu0
        %971 = vmatprep.subr.bf16.mxu0 0
        %972 = vmatpush1.bf16.msra.mxu0 %v419
        %973 = vmatprep.subr.bf16.mxu0 0
        %974 = vmatpush1.bf16.msra.mxu0 0
        %975 = vmatprep.subr.bf16.mxu0 0
        %976 = vmatpush1.bf16.msra.mxu0 0
        %977 = vmatprep.subr.bf16.mxu0 0
        %978 = vmatpush1.bf16.msra.mxu0 0
        %979 = vmatprep.subr.bf16.mxu0 0
        %980 = vmatpush1.bf16.msra.mxu0 0
        %981 = vmatprep.subr.bf16.mxu0 0
        %982 = vmatpush1.bf16.msra.mxu0 0
        %983 = vmatprep.subr.bf16.mxu0 0
        %984 = vmatpush1.bf16.msra.mxu0 0
        %985 = vmatprep.subr.bf16.mxu0 0
        %986 = vmatpush1.bf16.msra.mxu0 0
        %987 = vmatprep.subr.bf16.mxu0 0
        %988 = vmatpush1.bf16.msra.mxu0 0
        %989 = vmatprep.subr.bf16.mxu0 0
        %990 = vmatpush1.bf16.msra.mxu0 0
        %991 = vmatprep.subr.bf16.mxu0 0
        %992 = vmatpush1.bf16.msra.mxu0 0
        %993 = vmatprep.subr.bf16.mxu0 0
        %994 = vmatpush1.bf16.msra.mxu0 0
        %995 = vmatprep.subr.bf16.mxu0 0
        %996 = vmatpush1.bf16.msra.mxu0 0
        %997 = vmatprep.subr.bf16.mxu0 0
        %998 = vmatpush1.bf16.msra.mxu0 0
        %999 = vmatprep.subr.bf16.mxu0 0
        %1000 = vmatpush1.bf16.msra.mxu0 0
        %1001 = vmatprep.subr.bf16.mxu0 0
        %1002 = vmatpush1.bf16.msra.mxu0 0
        %1003 = vmatprep.mubr.bf16.mxu0 0
        %1004 = vmatmul.mubr.bf16.gmra.mrb[0].mxu0 %v928
        %v1005 = vpop.f32.mrb[0].mxu0
        %v1006 = vadd.f32 %v394, %v1005
        %v1007 = vpop.f32.mrb[0].mxu0
        %v1008 = vpop.f32.mrb[0].mxu0
        %v1009 = vpop.f32.mrb[0].mxu0
        %1010 = vdwg.mxu0
        %v1011 = vpack.c.bf16 %v922, %v922
        %1012 = vmatprep.subr.bf16.mxu0 %v590
        %1013 = vmatpush1.bf16.msra.mxu0 %v589
        %1014 = vmatprep.subr.bf16.mxu0 %v593
        %1015 = vmatpush1.bf16.msra.mxu0 %v592
        %1016 = vmatprep.subr.bf16.mxu0 %v596
        %1017 = vmatpush1.bf16.msra.mxu0 %v595
        %1018 = vmatprep.subr.bf16.mxu0 %v599
        %1019 = vmatpush1.bf16.msra.mxu0 %v598
        %1020 = vmatprep.subr.bf16.mxu0 %v602
        %1021 = vmatpush1.bf16.msra.mxu0 %v601
        %1022 = vmatprep.subr.bf16.mxu0 %v605
        %1023 = vmatpush1.bf16.msra.mxu0 %v604
        %1024 = vmatprep.subr.bf16.mxu0 %v608
        %1025 = vmatpush1.bf16.msra.mxu0 %v607
        %1026 = vmatprep.subr.bf16.mxu0 %v611
        %1027 = vmatpush1.bf16.msra.mxu0 %v610
        %1028 = vmatprep.subr.bf16.mxu0 0
        %1029 = vmatpush1.bf16.msra.mxu0 0
        %1030 = vmatprep.subr.bf16.mxu0 0
        %1031 = vmatpush1.bf16.msra.mxu0 0
        %1032 = vmatprep.subr.bf16.mxu0 0
        %1033 = vmatpush1.bf16.msra.mxu0 0
        %1034 = vmatprep.subr.bf16.mxu0 0
        %1035 = vmatpush1.bf16.msra.mxu0 0
        %1036 = vmatprep.subr.bf16.mxu0 0
        %1037 = vmatpush1.bf16.msra.mxu0 0
        %1038 = vmatprep.subr.bf16.mxu0 0
        %1039 = vmatpush1.bf16.msra.mxu0 0
        %1040 = vmatprep.subr.bf16.mxu0 0
        %1041 = vmatpush1.bf16.msra.mxu0 0
        %1042 = vmatprep.subr.bf16.mxu0 0
        %1043 = vmatpush1.bf16.msra.mxu0 0
        %1044 = vmatprep.mubr.bf16.mxu0 0
        %1045 = vmatmul.mubr.bf16.gmra.mrb[0].mxu0 %v1011
        %v1046 = vpop.f32.mrb[0].mxu0
        %v1047 = vadd.f32 0.0, %v1046
        %v1048 = vpop.f32.mrb[0].mxu0
        %v1049 = vadd.f32 0.0, %v1048
        %v1050 = vpop.f32.mrb[0].mxu0
        %v1051 = vpop.f32.mrb[0].mxu0
        %1052 = vdwg.mxu0
        %1053 = vmatprep.subr.bf16.mxu0 0
        %1054 = vmatpush1.bf16.msra.mxu0 %v591
        %1055 = vmatprep.subr.bf16.mxu0 0
        %1056 = vmatpush1.bf16.msra.mxu0 %v594
        %1057 = vmatprep.subr.bf16.mxu0 0
        %1058 = vmatpush1.bf16.msra.mxu0 %v597
        %1059 = vmatprep.subr.bf16.mxu0 0
        %1060 = vmatpush1.bf16.msra.mxu0 %v600
        %1061 = vmatprep.subr.bf16.mxu0 0
        %1062 = vmatpush1.bf16.msra.mxu0 %v603
        %1063 = vmatprep.subr.bf16.mxu0 0
        %1064 = vmatpush1.bf16.msra.mxu0 %v606
        %1065 = vmatprep.subr.bf16.mxu0 0
        %1066 = vmatpush1.bf16.msra.mxu0 %v609
        %1067 = vmatprep.subr.bf16.mxu0 0
        %1068 = vmatpush1.bf16.msra.mxu0 %v612
        %1069 = vmatprep.subr.bf16.mxu0 0
        %1070 = vmatpush1.bf16.msra.mxu0 0
        %1071 = vmatprep.subr.bf16.mxu0 0
        %1072 = vmatpush1.bf16.msra.mxu0 0
        %1073 = vmatprep.subr.bf16.mxu0 0
        %1074 = vmatpush1.bf16.msra.mxu0 0
        %1075 = vmatprep.subr.bf16.mxu0 0
        %1076 = vmatpush1.bf16.msra.mxu0 0
        %1077 = vmatprep.subr.bf16.mxu0 0
        %1078 = vmatpush1.bf16.msra.mxu0 0
        %1079 = vmatprep.subr.bf16.mxu0 0
        %1080 = vmatpush1.bf16.msra.mxu0 0
        %1081 = vmatprep.subr.bf16.mxu0 0
        %1082 = vmatpush1.bf16.msra.mxu0 0
        %1083 = vmatprep.subr.bf16.mxu0 0
        %1084 = vmatpush1.bf16.msra.mxu0 0
        %1085 = vmatprep.mubr.bf16.mxu0 0
        %1086 = vmatmul.mubr.bf16.gmra.mrb[0].mxu0 %v1011
        %v1087 = vpop.f32.mrb[0].mxu0
        %v1088 = vadd.f32 0.0, %v1087
        %v1089 = vpop.f32.mrb[0].mxu0
        %v1090 = vpop.f32.mrb[0].mxu0
        %v1091 = vpop.f32.mrb[0].mxu0
        %1092 = vdwg.mxu0
        %v1093 = vadd.f32 %v965, %v1047
        %v1094 = vadd.f32 %v967, %v1049
        %v1095 = vmul.f32 %v1093, 0.5
        %v1096 = vmul.f32 %v1094, 0.5
        %v1097 = vtanh.pop %v1095
        %v1098 = vtanh.pop %v1096
        %v1099 = vmul.f32 %v1097, 0.5
        %v1100 = vmul.f32 %v1098, 0.5
        %v1101 = vadd.f32 %v1099, 0.5
        %v1102 = vadd.f32 %v1100, 0.5
        %v1103 = vadd.f32 %v1088, %v403
        %v1104 = vmul.f32 %v1101, %v1103
        %v1105 = vadd.f32 %v1006, %v1104
        %v1106 = vsub.f32 1.0, %v1102
        %v1107 = vtanh.pop %v1105
        %v1108 = vsub.f32 %v1107, %v922
        %v1109 = vmul.f32 %v1106, %v1108
        %v1110 = vadd.f32 %v922, %v1109
        %s1111 = scalar_lea.vmem [#allocation3], 8
        %1112 = vst [vmem:[%s1111] sm:$0xf] %v1110
        %s1113 = scalar_lea.vmem %s295, 6 [#allocation4]
        %v1114 = vld [vmem:[%s1113] sm:$0x3]
        %v1116 = vsel %vm423, %v1114, 0
        %1118 = vmatprep.subr.bf16.mxu0 %v418
        %1119 = vmatpush1.bf16.msra.mxu0 %v417
        %1120 = vmatprep.subr.bf16.mxu0 0
        %1121 = vmatpush1.bf16.msra.mxu0 0
        %1122 = vmatprep.subr.bf16.mxu0 0
        %1123 = vmatpush1.bf16.msra.mxu0 0
        %1124 = vmatprep.subr.bf16.mxu0 0
        %1125 = vmatpush1.bf16.msra.mxu0 0
        %1126 = vmatprep.subr.bf16.mxu0 0
        %1127 = vmatpush1.bf16.msra.mxu0 0
        %1128 = vmatprep.subr.bf16.mxu0 0
        %1129 = vmatpush1.bf16.msra.mxu0 0
        %1130 = vmatprep.subr.bf16.mxu0 0
        %1131 = vmatpush1.bf16.msra.mxu0 0
        %1132 = vmatprep.subr.bf16.mxu0 0
        %1133 = vmatpush1.bf16.msra.mxu0 0
        %1134 = vmatprep.subr.bf16.mxu0 0
        %1135 = vmatpush1.bf16.msra.mxu0 0
        %1136 = vmatprep.subr.bf16.mxu0 0
        %1137 = vmatpush1.bf16.msra.mxu0 0
        %1138 = vmatprep.subr.bf16.mxu0 0
        %1139 = vmatpush1.bf16.msra.mxu0 0
        %1140 = vmatprep.subr.bf16.mxu0 0
        %1141 = vmatpush1.bf16.msra.mxu0 0
        %1142 = vmatprep.subr.bf16.mxu0 0
        %1143 = vmatpush1.bf16.msra.mxu0 0
        %1144 = vmatprep.subr.bf16.mxu0 0
        %1145 = vmatpush1.bf16.msra.mxu0 0
        %1146 = vmatprep.subr.bf16.mxu0 0
        %1147 = vmatpush1.bf16.msra.mxu0 0
        %1148 = vmatprep.subr.bf16.mxu0 0
        %1149 = vmatpush1.bf16.msra.mxu0 0
        %1150 = vmatprep.mubr.bf16.mxu0 0
        %1151 = vmatmul.mubr.bf16.gmra.mrb[0].mxu0 %v1116
        %v1152 = vpop.f32.mrb[0].mxu0
        %v1153 = vadd.f32 %v386, %v1152
        %v1154 = vpop.f32.mrb[0].mxu0
        %v1155 = vadd.f32 %v390, %v1154
        %v1156 = vpop.f32.mrb[0].mxu0
        %v1157 = vpop.f32.mrb[0].mxu0
        %1158 = vdwg.mxu0
        %1159 = vmatprep.subr.bf16.mxu0 0
        %1160 = vmatpush1.bf16.msra.mxu0 %v419
        %1161 = vmatprep.subr.bf16.mxu0 0
        %1162 = vmatpush1.bf16.msra.mxu0 0
        %1163 = vmatprep.subr.bf16.mxu0 0
        %1164 = vmatpush1.bf16.msra.mxu0 0
        %1165 = vmatprep.subr.bf16.mxu0 0
        %1166 = vmatpush1.bf16.msra.mxu0 0
        %1167 = vmatprep.subr.bf16.mxu0 0
        %1168 = vmatpush1.bf16.msra.mxu0 0
        %1169 = vmatprep.subr.bf16.mxu0 0
        %1170 = vmatpush1.bf16.msra.mxu0 0
        %1171 = vmatprep.subr.bf16.mxu0 0
        %1172 = vmatpush1.bf16.msra.mxu0 0
        %1173 = vmatprep.subr.bf16.mxu0 0
        %1174 = vmatpush1.bf16.msra.mxu0 0
        %1175 = vmatprep.subr.bf16.mxu0 0
        %1176 = vmatpush1.bf16.msra.mxu0 0
        %1177 = vmatprep.subr.bf16.mxu0 0
        %1178 = vmatpush1.bf16.msra.mxu0 0
        %1179 = vmatprep.subr.bf16.mxu0 0
        %1180 = vmatpush1.bf16.msra.mxu0 0
        %1181 = vmatprep.subr.bf16.mxu0 0
        %1182 = vmatpush1.bf16.msra.mxu0 0
        %1183 = vmatprep.subr.bf16.mxu0 0
        %1184 = vmatpush1.bf16.msra.mxu0 0
        %1185 = vmatprep.subr.bf16.mxu0 0
        %1186 = vmatpush1.bf16.msra.mxu0 0
        %1187 = vmatprep.subr.bf16.mxu0 0
        %1188 = vmatpush1.bf16.msra.mxu0 0
        %1189 = vmatprep.subr.bf16.mxu0 0
        %1190 = vmatpush1.bf16.msra.mxu0 0
        %1191 = vmatprep.mubr.bf16.mxu0 0
        %1192 = vmatmul.mubr.bf16.gmra.mrb[0].mxu0 %v1116
        %v1193 = vpop.f32.mrb[0].mxu0
        %v1194 = vadd.f32 %v394, %v1193
        %v1195 = vpop.f32.mrb[0].mxu0
        %v1196 = vpop.f32.mrb[0].mxu0
        %v1197 = vpop.f32.mrb[0].mxu0
        %1198 = vdwg.mxu0
        %v1199 = vpack.c.bf16 %v1110, %v1110
        %1200 = vmatprep.subr.bf16.mxu0 %v590
        %1201 = vmatpush1.bf16.msra.mxu0 %v589
        %1202 = vmatprep.subr.bf16.mxu0 %v593
        %1203 = vmatpush1.bf16.msra.mxu0 %v592
        %1204 = vmatprep.subr.bf16.mxu0 %v596
        %1205 = vmatpush1.bf16.msra.mxu0 %v595
        %1206 = vmatprep.subr.bf16.mxu0 %v599
        %1207 = vmatpush1.bf16.msra.mxu0 %v598
        %1208 = vmatprep.subr.bf16.mxu0 %v602
        %1209 = vmatpush1.bf16.msra.mxu0 %v601
        %1210 = vmatprep.subr.bf16.mxu0 %v605
        %1211 = vmatpush1.bf16.msra.mxu0 %v604
        %1212 = vmatprep.subr.bf16.mxu0 %v608
        %1213 = vmatpush1.bf16.msra.mxu0 %v607
        %1214 = vmatprep.subr.bf16.mxu0 %v611
        %1215 = vmatpush1.bf16.msra.mxu0 %v610
        %1216 = vmatprep.subr.bf16.mxu0 0
        %1217 = vmatpush1.bf16.msra.mxu0 0
        %1218 = vmatprep.subr.bf16.mxu0 0
        %1219 = vmatpush1.bf16.msra.mxu0 0
        %1220 = vmatprep.subr.bf16.mxu0 0
        %1221 = vmatpush1.bf16.msra.mxu0 0
        %1222 = vmatprep.subr.bf16.mxu0 0
        %1223 = vmatpush1.bf16.msra.mxu0 0
        %1224 = vmatprep.subr.bf16.mxu0 0
        %1225 = vmatpush1.bf16.msra.mxu0 0
        %1226 = vmatprep.subr.bf16.mxu0 0
        %1227 = vmatpush1.bf16.msra.mxu0 0
        %1228 = vmatprep.subr.bf16.mxu0 0
        %1229 = vmatpush1.bf16.msra.mxu0 0
        %1230 = vmatprep.subr.bf16.mxu0 0
        %1231 = vmatpush1.bf16.msra.mxu0 0
        %1232 = vmatprep.mubr.bf16.mxu0 0
        %1233 = vmatmul.mubr.bf16.gmra.mrb[0].mxu0 %v1199
        %v1234 = vpop.f32.mrb[0].mxu0
        %v1235 = vadd.f32 0.0, %v1234
        %v1236 = vpop.f32.mrb[0].mxu0
        %v1237 = vadd.f32 0.0, %v1236
        %v1238 = vpop.f32.mrb[0].mxu0
        %v1239 = vpop.f32.mrb[0].mxu0
        %1240 = vdwg.mxu0
        %1241 = vmatprep.subr.bf16.mxu0 0
        %1242 = vmatpush1.bf16.msra.mxu0 %v591
        %1243 = vmatprep.subr.bf16.mxu0 0
        %1244 = vmatpush1.bf16.msra.mxu0 %v594
        %1245 = vmatprep.subr.bf16.mxu0 0
        %1246 = vmatpush1.bf16.msra.mxu0 %v597
        %1247 = vmatprep.subr.bf16.mxu0 0
        %1248 = vmatpush1.bf16.msra.mxu0 %v600
        %1249 = vmatprep.subr.bf16.mxu0 0
        %1250 = vmatpush1.bf16.msra.mxu0 %v603
        %1251 = vmatprep.subr.bf16.mxu0 0
        %1252 = vmatpush1.bf16.msra.mxu0 %v606
        %1253 = vmatprep.subr.bf16.mxu0 0
        %1254 = vmatpush1.bf16.msra.mxu0 %v609
        %1255 = vmatprep.subr.bf16.mxu0 0
        %1256 = vmatpush1.bf16.msra.mxu0 %v612
        %1257 = vmatprep.subr.bf16.mxu0 0
        %1258 = vmatpush1.bf16.msra.mxu0 0
        %1259 = vmatprep.subr.bf16.mxu0 0
        %1260 = vmatpush1.bf16.msra.mxu0 0
        %1261 = vmatprep.subr.bf16.mxu0 0
        %1262 = vmatpush1.bf16.msra.mxu0 0
        %1263 = vmatprep.subr.bf16.mxu0 0
        %1264 = vmatpush1.bf16.msra.mxu0 0
        %1265 = vmatprep.subr.bf16.mxu0 0
        %1266 = vmatpush1.bf16.msra.mxu0 0
        %1267 = vmatprep.subr.bf16.mxu0 0
        %1268 = vmatpush1.bf16.msra.mxu0 0
        %1269 = vmatprep.subr.bf16.mxu0 0
        %1270 = vmatpush1.bf16.msra.mxu0 0
        %1271 = vmatprep.subr.bf16.mxu0 0
        %1272 = vmatpush1.bf16.msra.mxu0 0
        %1273 = vmatprep.mubr.bf16.mxu0 0
        %1274 = vmatmul.mubr.bf16.gmra.mrb[0].mxu0 %v1199
        %v1275 = vpop.f32.mrb[0].mxu0
        %v1276 = vadd.f32 0.0, %v1275
        %v1277 = vpop.f32.mrb[0].mxu0
        %v1278 = vpop.f32.mrb[0].mxu0
        %v1279 = vpop.f32.mrb[0].mxu0
        %1280 = vdwg.mxu0
        %v1281 = vadd.f32 %v1153, %v1235
        %v1282 = vadd.f32 %v1155, %v1237
        %v1283 = vmul.f32 %v1281, 0.5
        %v1284 = vmul.f32 %v1282, 0.5
        %v1285 = vtanh.pop %v1283
        %v1286 = vtanh.pop %v1284
        %v1287 = vmul.f32 %v1285, 0.5
        %v1288 = vmul.f32 %v1286, 0.5
        %v1289 = vadd.f32 %v1287, 0.5
        %v1290 = vadd.f32 %v1288, 0.5
        %v1291 = vadd.f32 %v1276, %v403
        %v1292 = vmul.f32 %v1289, %v1291
        %v1293 = vadd.f32 %v1194, %v1292
        %v1294 = vsub.f32 1.0, %v1290
        %v1295 = vtanh.pop %v1293
        %v1296 = vsub.f32 %v1295, %v1110
        %v1297 = vmul.f32 %v1294, %v1296
        %v1298 = vadd.f32 %v1110, %v1297
        %s1299 = scalar_lea.vmem [#allocation3], 12
        %1300 = vst [vmem:[%s1299] sm:$0xf] %v1298
        %s1301 = scalar_lea.vmem %s295, 8 [#allocation4]
        %v1302 = vld [vmem:[%s1301] sm:$0x3]
        %v1304 = vsel %vm423, %v1302, 0
        %1306 = vmatprep.subr.bf16.mxu0 %v418
        %1307 = vmatpush1.bf16.msra.mxu0 %v417
        %1308 = vmatprep.subr.bf16.mxu0 0
        %1309 = vmatpush1.bf16.msra.mxu0 0
        %1310 = vmatprep.subr.bf16.mxu0 0
        %1311 = vmatpush1.bf16.msra.mxu0 0
        %1312 = vmatprep.subr.bf16.mxu0 0
        %1313 = vmatpush1.bf16.msra.mxu0 0
        %1314 = vmatprep.subr.bf16.mxu0 0
        %1315 = vmatpush1.bf16.msra.mxu0 0
        %1316 = vmatprep.subr.bf16.mxu0 0
        %1317 = vmatpush1.bf16.msra.mxu0 0
        %1318 = vmatprep.subr.bf16.mxu0 0
        %1319 = vmatpush1.bf16.msra.mxu0 0
        %1320 = vmatprep.subr.bf16.mxu0 0
        %1321 = vmatpush1.bf16.msra.mxu0 0
        %1322 = vmatprep.subr.bf16.mxu0 0
        %1323 = vmatpush1.bf16.msra.mxu0 0
        %1324 = vmatprep.subr.bf16.mxu0 0
        %1325 = vmatpush1.bf16.msra.mxu0 0
        %1326 = vmatprep.subr.bf16.mxu0 0
        %1327 = vmatpush1.bf16.msra.mxu0 0
        %1328 = vmatprep.subr.bf16.mxu0 0
        %1329 = vmatpush1.bf16.msra.mxu0 0
        %1330 = vmatprep.subr.bf16.mxu0 0
        %1331 = vmatpush1.bf16.msra.mxu0 0
        %1332 = vmatprep.subr.bf16.mxu0 0
        %1333 = vmatpush1.bf16.msra.mxu0 0
        %1334 = vmatprep.subr.bf16.mxu0 0
        %1335 = vmatpush1.bf16.msra.mxu0 0
        %1336 = vmatprep.subr.bf16.mxu0 0
        %1337 = vmatpush1.bf16.msra.mxu0 0
        %1338 = vmatprep.mubr.bf16.mxu0 0
        %1339 = vmatmul.mubr.bf16.gmra.mrb[0].mxu0 %v1304
        %v1340 = vpop.f32.mrb[0].mxu0
        %v1341 = vadd.f32 %v386, %v1340
        %v1342 = vpop.f32.mrb[0].mxu0
        %v1343 = vadd.f32 %v390, %v1342
        %v1344 = vpop.f32.mrb[0].mxu0
        %v1345 = vpop.f32.mrb[0].mxu0
        %1346 = vdwg.mxu0
        %1347 = vmatprep.subr.bf16.mxu0 0
        %1348 = vmatpush1.bf16.msra.mxu0 %v419
        %1349 = vmatprep.subr.bf16.mxu0 0
        %1350 = vmatpush1.bf16.msra.mxu0 0
        %1351 = vmatprep.subr.bf16.mxu0 0
        %1352 = vmatpush1.bf16.msra.mxu0 0
        %1353 = vmatprep.subr.bf16.mxu0 0
        %1354 = vmatpush1.bf16.msra.mxu0 0
        %1355 = vmatprep.subr.bf16.mxu0 0
        %1356 = vmatpush1.bf16.msra.mxu0 0
        %1357 = vmatprep.subr.bf16.mxu0 0
        %1358 = vmatpush1.bf16.msra.mxu0 0
        %1359 = vmatprep.subr.bf16.mxu0 0
        %1360 = vmatpush1.bf16.msra.mxu0 0
        %1361 = vmatprep.subr.bf16.mxu0 0
        %1362 = vmatpush1.bf16.msra.mxu0 0
        %1363 = vmatprep.subr.bf16.mxu0 0
        %1364 = vmatpush1.bf16.msra.mxu0 0
        %1365 = vmatprep.subr.bf16.mxu0 0
        %1366 = vmatpush1.bf16.msra.mxu0 0
        %1367 = vmatprep.subr.bf16.mxu0 0
        %1368 = vmatpush1.bf16.msra.mxu0 0
        %1369 = vmatprep.subr.bf16.mxu0 0
        %1370 = vmatpush1.bf16.msra.mxu0 0
        %1371 = vmatprep.subr.bf16.mxu0 0
        %1372 = vmatpush1.bf16.msra.mxu0 0
        %1373 = vmatprep.subr.bf16.mxu0 0
        %1374 = vmatpush1.bf16.msra.mxu0 0
        %1375 = vmatprep.subr.bf16.mxu0 0
        %1376 = vmatpush1.bf16.msra.mxu0 0
        %1377 = vmatprep.subr.bf16.mxu0 0
        %1378 = vmatpush1.bf16.msra.mxu0 0
        %1379 = vmatprep.mubr.bf16.mxu0 0
        %1380 = vmatmul.mubr.bf16.gmra.mrb[0].mxu0 %v1304
        %v1381 = vpop.f32.mrb[0].mxu0
        %v1382 = vadd.f32 %v394, %v1381
        %v1383 = vpop.f32.mrb[0].mxu0
        %v1384 = vpop.f32.mrb[0].mxu0
        %v1385 = vpop.f32.mrb[0].mxu0
        %1386 = vdwg.mxu0
        %v1387 = vpack.c.bf16 %v1298, %v1298
        %1388 = vmatprep.subr.bf16.mxu0 %v590
        %1389 = vmatpush1.bf16.msra.mxu0 %v589
        %1390 = vmatprep.subr.bf16.mxu0 %v593
        %1391 = vmatpush1.bf16.msra.mxu0 %v592
        %1392 = vmatprep.subr.bf16.mxu0 %v596
        %1393 = vmatpush1.bf16.msra.mxu0 %v595
        %1394 = vmatprep.subr.bf16.mxu0 %v599
        %1395 = vmatpush1.bf16.msra.mxu0 %v598
        %1396 = vmatprep.subr.bf16.mxu0 %v602
        %1397 = vmatpush1.bf16.msra.mxu0 %v601
        %1398 = vmatprep.subr.bf16.mxu0 %v605
        %1399 = vmatpush1.bf16.msra.mxu0 %v604
        %1400 = vmatprep.subr.bf16.mxu0 %v608
        %1401 = vmatpush1.bf16.msra.mxu0 %v607
        %1402 = vmatprep.subr.bf16.mxu0 %v611
        %1403 = vmatpush1.bf16.msra.mxu0 %v610
        %1404 = vmatprep.subr.bf16.mxu0 0
        %1405 = vmatpush1.bf16.msra.mxu0 0
        %1406 = vmatprep.subr.bf16.mxu0 0
        %1407 = vmatpush1.bf16.msra.mxu0 0
        %1408 = vmatprep.subr.bf16.mxu0 0
        %1409 = vmatpush1.bf16.msra.mxu0 0
        %1410 = vmatprep.subr.bf16.mxu0 0
        %1411 = vmatpush1.bf16.msra.mxu0 0
        %1412 = vmatprep.subr.bf16.mxu0 0
        %1413 = vmatpush1.bf16.msra.mxu0 0
        %1414 = vmatprep.subr.bf16.mxu0 0
        %1415 = vmatpush1.bf16.msra.mxu0 0
        %1416 = vmatprep.subr.bf16.mxu0 0
        %1417 = vmatpush1.bf16.msra.mxu0 0
        %1418 = vmatprep.subr.bf16.mxu0 0
        %1419 = vmatpush1.bf16.msra.mxu0 0
        %1420 = vmatprep.mubr.bf16.mxu0 0
        %1421 = vmatmul.mubr.bf16.gmra.mrb[0].mxu0 %v1387
        %v1422 = vpop.f32.mrb[0].mxu0
        %v1423 = vadd.f32 0.0, %v1422
        %v1424 = vpop.f32.mrb[0].mxu0
        %v1425 = vadd.f32 0.0, %v1424
        %v1426 = vpop.f32.mrb[0].mxu0
        %v1427 = vpop.f32.mrb[0].mxu0
        %1428 = vdwg.mxu0
        %1429 = vmatprep.subr.bf16.mxu0 0
        %1430 = vmatpush1.bf16.msra.mxu0 %v591
        %1431 = vmatprep.subr.bf16.mxu0 0
        %1432 = vmatpush1.bf16.msra.mxu0 %v594
        %1433 = vmatprep.subr.bf16.mxu0 0
        %1434 = vmatpush1.bf16.msra.mxu0 %v597
        %1435 = vmatprep.subr.bf16.mxu0 0
        %1436 = vmatpush1.bf16.msra.mxu0 %v600
        %1437 = vmatprep.subr.bf16.mxu0 0
        %1438 = vmatpush1.bf16.msra.mxu0 %v603
        %1439 = vmatprep.subr.bf16.mxu0 0
        %1440 = vmatpush1.bf16.msra.mxu0 %v606
        %1441 = vmatprep.subr.bf16.mxu0 0
        %1442 = vmatpush1.bf16.msra.mxu0 %v609
        %1443 = vmatprep.subr.bf16.mxu0 0
        %1444 = vmatpush1.bf16.msra.mxu0 %v612
        %1445 = vmatprep.subr.bf16.mxu0 0
        %1446 = vmatpush1.bf16.msra.mxu0 0
        %1447 = vmatprep.subr.bf16.mxu0 0
        %1448 = vmatpush1.bf16.msra.mxu0 0
        %1449 = vmatprep.subr.bf16.mxu0 0
        %1450 = vmatpush1.bf16.msra.mxu0 0
        %1451 = vmatprep.subr.bf16.mxu0 0
        %1452 = vmatpush1.bf16.msra.mxu0 0
        %1453 = vmatprep.subr.bf16.mxu0 0
        %1454 = vmatpush1.bf16.msra.mxu0 0
        %1455 = vmatprep.subr.bf16.mxu0 0
        %1456 = vmatpush1.bf16.msra.mxu0 0
        %1457 = vmatprep.subr.bf16.mxu0 0
        %1458 = vmatpush1.bf16.msra.mxu0 0
        %1459 = vmatprep.subr.bf16.mxu0 0
        %1460 = vmatpush1.bf16.msra.mxu0 0
        %1461 = vmatprep.mubr.bf16.mxu0 0
        %1462 = vmatmul.mubr.bf16.gmra.mrb[0].mxu0 %v1387
        %v1463 = vpop.f32.mrb[0].mxu0
        %v1464 = vadd.f32 0.0, %v1463
        %v1465 = vpop.f32.mrb[0].mxu0
        %v1466 = vpop.f32.mrb[0].mxu0
        %v1467 = vpop.f32.mrb[0].mxu0
        %1468 = vdwg.mxu0
        %v1469 = vadd.f32 %v1341, %v1423
        %v1470 = vadd.f32 %v1343, %v1425
        %v1471 = vmul.f32 %v1469, 0.5
        %v1472 = vmul.f32 %v1470, 0.5
        %v1473 = vtanh.pop %v1471
        %v1474 = vtanh.pop %v1472
        %v1475 = vmul.f32 %v1473, 0.5
        %v1476 = vmul.f32 %v1474, 0.5
        %v1477 = vadd.f32 %v1475, 0.5
        %v1478 = vadd.f32 %v1476, 0.5
        %v1479 = vadd.f32 %v1464, %v403
        %v1480 = vmul.f32 %v1477, %v1479
        %v1481 = vadd.f32 %v1382, %v1480
        %v1482 = vsub.f32 1.0, %v1478
        %v1483 = vtanh.pop %v1481
        %v1484 = vsub.f32 %v1483, %v1298
        %v1485 = vmul.f32 %v1482, %v1484
        %v1486 = vadd.f32 %v1298, %v1485
        %s1487 = scalar_lea.vmem [#allocation3], 16
        %1488 = vst [vmem:[%s1487] sm:$0xf] %v1486
        %s1489 = scalar_lea.vmem %s295, 10 [#allocation4]
        %v1490 = vld [vmem:[%s1489] sm:$0x3]
        %v1492 = vsel %vm423, %v1490, 0
        %1494 = vmatprep.subr.bf16.mxu0 %v418
        %1495 = vmatpush1.bf16.msra.mxu0 %v417
        %1496 = vmatprep.subr.bf16.mxu0 0
        %1497 = vmatpush1.bf16.msra.mxu0 0
        %1498 = vmatprep.subr.bf16.mxu0 0
        %1499 = vmatpush1.bf16.msra.mxu0 0
        %1500 = vmatprep.subr.bf16.mxu0 0
        %1501 = vmatpush1.bf16.msra.mxu0 0
        %1502 = vmatprep.subr.bf16.mxu0 0
        %1503 = vmatpush1.bf16.msra.mxu0 0
        %1504 = vmatprep.subr.bf16.mxu0 0
        %1505 = vmatpush1.bf16.msra.mxu0 0
        %1506 = vmatprep.subr.bf16.mxu0 0
        %1507 = vmatpush1.bf16.msra.mxu0 0
        %1508 = vmatprep.subr.bf16.mxu0 0
        %1509 = vmatpush1.bf16.msra.mxu0 0
        %1510 = vmatprep.subr.bf16.mxu0 0
        %1511 = vmatpush1.bf16.msra.mxu0 0
        %1512 = vmatprep.subr.bf16.mxu0 0
        %1513 = vmatpush1.bf16.msra.mxu0 0
        %1514 = vmatprep.subr.bf16.mxu0 0
        %1515 = vmatpush1.bf16.msra.mxu0 0
        %1516 = vmatprep.subr.bf16.mxu0 0
        %1517 = vmatpush1.bf16.msra.mxu0 0
        %1518 = vmatprep.subr.bf16.mxu0 0
        %1519 = vmatpush1.bf16.msra.mxu0 0
        %1520 = vmatprep.subr.bf16.mxu0 0
        %1521 = vmatpush1.bf16.msra.mxu0 0
        %1522 = vmatprep.subr.bf16.mxu0 0
        %1523 = vmatpush1.bf16.msra.mxu0 0
        %1524 = vmatprep.subr.bf16.mxu0 0
        %1525 = vmatpush1.bf16.msra.mxu0 0
        %1526 = vmatprep.mubr.bf16.mxu0 0
        %1527 = vmatmul.mubr.bf16.gmra.mrb[0].mxu0 %v1492
        %v1528 = vpop.f32.mrb[0].mxu0
        %v1529 = vadd.f32 %v386, %v1528
        %v1530 = vpop.f32.mrb[0].mxu0
        %v1531 = vadd.f32 %v390, %v1530
        %v1532 = vpop.f32.mrb[0].mxu0
        %v1533 = vpop.f32.mrb[0].mxu0
        %1534 = vdwg.mxu0
        %1535 = vmatprep.subr.bf16.mxu0 0
        %1536 = vmatpush1.bf16.msra.mxu0 %v419
        %1537 = vmatprep.subr.bf16.mxu0 0
        %1538 = vmatpush1.bf16.msra.mxu0 0
        %1539 = vmatprep.subr.bf16.mxu0 0
        %1540 = vmatpush1.bf16.msra.mxu0 0
        %1541 = vmatprep.subr.bf16.mxu0 0
        %1542 = vmatpush1.bf16.msra.mxu0 0
        %1543 = vmatprep.subr.bf16.mxu0 0
        %1544 = vmatpush1.bf16.msra.mxu0 0
        %1545 = vmatprep.subr.bf16.mxu0 0
        %1546 = vmatpush1.bf16.msra.mxu0 0
        %1547 = vmatprep.subr.bf16.mxu0 0
        %1548 = vmatpush1.bf16.msra.mxu0 0
        %1549 = vmatprep.subr.bf16.mxu0 0
        %1550 = vmatpush1.bf16.msra.mxu0 0
        %1551 = vmatprep.subr.bf16.mxu0 0
        %1552 = vmatpush1.bf16.msra.mxu0 0
        %1553 = vmatprep.subr.bf16.mxu0 0
        %1554 = vmatpush1.bf16.msra.mxu0 0
        %1555 = vmatprep.subr.bf16.mxu0 0
        %1556 = vmatpush1.bf16.msra.mxu0 0
        %1557 = vmatprep.subr.bf16.mxu0 0
        %1558 = vmatpush1.bf16.msra.mxu0 0
        %1559 = vmatprep.subr.bf16.mxu0 0
        %1560 = vmatpush1.bf16.msra.mxu0 0
        %1561 = vmatprep.subr.bf16.mxu0 0
        %1562 = vmatpush1.bf16.msra.mxu0 0
        %1563 = vmatprep.subr.bf16.mxu0 0
        %1564 = vmatpush1.bf16.msra.mxu0 0
        %1565 = vmatprep.subr.bf16.mxu0 0
        %1566 = vmatpush1.bf16.msra.mxu0 0
        %1567 = vmatprep.mubr.bf16.mxu0 0
        %1568 = vmatmul.mubr.bf16.gmra.mrb[0].mxu0 %v1492
        %v1569 = vpop.f32.mrb[0].mxu0
        %v1570 = vadd.f32 %v394, %v1569
        %v1571 = vpop.f32.mrb[0].mxu0
        %v1572 = vpop.f32.mrb[0].mxu0
        %v1573 = vpop.f32.mrb[0].mxu0
        %1574 = vdwg.mxu0
        %v1575 = vpack.c.bf16 %v1486, %v1486
        %1576 = vmatprep.subr.bf16.mxu0 %v590
        %1577 = vmatpush1.bf16.msra.mxu0 %v589
        %1578 = vmatprep.subr.bf16.mxu0 %v593
        %1579 = vmatpush1.bf16.msra.mxu0 %v592
        %1580 = vmatprep.subr.bf16.mxu0 %v596
        %1581 = vmatpush1.bf16.msra.mxu0 %v595
        %1582 = vmatprep.subr.bf16.mxu0 %v599
        %1583 = vmatpush1.bf16.msra.mxu0 %v598
        %1584 = vmatprep.subr.bf16.mxu0 %v602
        %1585 = vmatpush1.bf16.msra.mxu0 %v601
        %1586 = vmatprep.subr.bf16.mxu0 %v605
        %1587 = vmatpush1.bf16.msra.mxu0 %v604
        %1588 = vmatprep.subr.bf16.mxu0 %v608
        %1589 = vmatpush1.bf16.msra.mxu0 %v607
        %1590 = vmatprep.subr.bf16.mxu0 %v611
        %1591 = vmatpush1.bf16.msra.mxu0 %v610
        %1592 = vmatprep.subr.bf16.mxu0 0
        %1593 = vmatpush1.bf16.msra.mxu0 0
        %1594 = vmatprep.subr.bf16.mxu0 0
        %1595 = vmatpush1.bf16.msra.mxu0 0
        %1596 = vmatprep.subr.bf16.mxu0 0
        %1597 = vmatpush1.bf16.msra.mxu0 0
        %1598 = vmatprep.subr.bf16.mxu0 0
        %1599 = vmatpush1.bf16.msra.mxu0 0
        %1600 = vmatprep.subr.bf16.mxu0 0
        %1601 = vmatpush1.bf16.msra.mxu0 0
        %1602 = vmatprep.subr.bf16.mxu0 0
        %1603 = vmatpush1.bf16.msra.mxu0 0
        %1604 = vmatprep.subr.bf16.mxu0 0
        %1605 = vmatpush1.bf16.msra.mxu0 0
        %1606 = vmatprep.subr.bf16.mxu0 0
        %1607 = vmatpush1.bf16.msra.mxu0 0
        %1608 = vmatprep.mubr.bf16.mxu0 0
        %1609 = vmatmul.mubr.bf16.gmra.mrb[0].mxu0 %v1575
        %v1610 = vpop.f32.mrb[0].mxu0
        %v1611 = vadd.f32 0.0, %v1610
        %v1612 = vpop.f32.mrb[0].mxu0
        %v1613 = vadd.f32 0.0, %v1612
        %v1614 = vpop.f32.mrb[0].mxu0
        %v1615 = vpop.f32.mrb[0].mxu0
        %1616 = vdwg.mxu0
        %1617 = vmatprep.subr.bf16.mxu0 0
        %1618 = vmatpush1.bf16.msra.mxu0 %v591
        %1619 = vmatprep.subr.bf16.mxu0 0
        %1620 = vmatpush1.bf16.msra.mxu0 %v594
        %1621 = vmatprep.subr.bf16.mxu0 0
        %1622 = vmatpush1.bf16.msra.mxu0 %v597
        %1623 = vmatprep.subr.bf16.mxu0 0
        %1624 = vmatpush1.bf16.msra.mxu0 %v600
        %1625 = vmatprep.subr.bf16.mxu0 0
        %1626 = vmatpush1.bf16.msra.mxu0 %v603
        %1627 = vmatprep.subr.bf16.mxu0 0
        %1628 = vmatpush1.bf16.msra.mxu0 %v606
        %1629 = vmatprep.subr.bf16.mxu0 0
        %1630 = vmatpush1.bf16.msra.mxu0 %v609
        %1631 = vmatprep.subr.bf16.mxu0 0
        %1632 = vmatpush1.bf16.msra.mxu0 %v612
        %1633 = vmatprep.subr.bf16.mxu0 0
        %1634 = vmatpush1.bf16.msra.mxu0 0
        %1635 = vmatprep.subr.bf16.mxu0 0
        %1636 = vmatpush1.bf16.msra.mxu0 0
        %1637 = vmatprep.subr.bf16.mxu0 0
        %1638 = vmatpush1.bf16.msra.mxu0 0
        %1639 = vmatprep.subr.bf16.mxu0 0
        %1640 = vmatpush1.bf16.msra.mxu0 0
        %1641 = vmatprep.subr.bf16.mxu0 0
        %1642 = vmatpush1.bf16.msra.mxu0 0
        %1643 = vmatprep.subr.bf16.mxu0 0
        %1644 = vmatpush1.bf16.msra.mxu0 0
        %1645 = vmatprep.subr.bf16.mxu0 0
        %1646 = vmatpush1.bf16.msra.mxu0 0
        %1647 = vmatprep.subr.bf16.mxu0 0
        %1648 = vmatpush1.bf16.msra.mxu0 0
        %1649 = vmatprep.mubr.bf16.mxu0 0
        %1650 = vmatmul.mubr.bf16.gmra.mrb[0].mxu0 %v1575
        %v1651 = vpop.f32.mrb[0].mxu0
        %v1652 = vadd.f32 0.0, %v1651
        %v1653 = vpop.f32.mrb[0].mxu0
        %v1654 = vpop.f32.mrb[0].mxu0
        %v1655 = vpop.f32.mrb[0].mxu0
        %1656 = vdwg.mxu0
        %v1657 = vadd.f32 %v1529, %v1611
        %v1658 = vadd.f32 %v1531, %v1613
        %v1659 = vmul.f32 %v1657, 0.5
        %v1660 = vmul.f32 %v1658, 0.5
        %v1661 = vtanh.pop %v1659
        %v1662 = vtanh.pop %v1660
        %v1663 = vmul.f32 %v1661, 0.5
        %v1664 = vmul.f32 %v1662, 0.5
        %v1665 = vadd.f32 %v1663, 0.5
        %v1666 = vadd.f32 %v1664, 0.5
        %v1667 = vadd.f32 %v1652, %v403
        %v1668 = vmul.f32 %v1665, %v1667
        %v1669 = vadd.f32 %v1570, %v1668
        %v1670 = vsub.f32 1.0, %v1666
        %v1671 = vtanh.pop %v1669
        %v1672 = vsub.f32 %v1671, %v1486
        %v1673 = vmul.f32 %v1670, %v1672
        %v1674 = vadd.f32 %v1486, %v1673
        %s1675 = scalar_lea.vmem [#allocation3], 20
        %1676 = vst [vmem:[%s1675] sm:$0xf] %v1674
        %s1677 = scalar_lea.vmem %s295, 12 [#allocation4]
        %v1678 = vld [vmem:[%s1677] sm:$0x3]
        %v1680 = vsel %vm423, %v1678, 0
        %1682 = vmatprep.subr.bf16.mxu0 %v418
        %1683 = vmatpush1.bf16.msra.mxu0 %v417
        %1684 = vmatprep.subr.bf16.mxu0 0
        %1685 = vmatpush1.bf16.msra.mxu0 0
        %1686 = vmatprep.subr.bf16.mxu0 0
        %1687 = vmatpush1.bf16.msra.mxu0 0
        %1688 = vmatprep.subr.bf16.mxu0 0
        %1689 = vmatpush1.bf16.msra.mxu0 0
        %1690 = vmatprep.subr.bf16.mxu0 0
        %1691 = vmatpush1.bf16.msra.mxu0 0
        %1692 = vmatprep.subr.bf16.mxu0 0
        %1693 = vmatpush1.bf16.msra.mxu0 0
        %1694 = vmatprep.subr.bf16.mxu0 0
        %1695 = vmatpush1.bf16.msra.mxu0 0
        %1696 = vmatprep.subr.bf16.mxu0 0
        %1697 = vmatpush1.bf16.msra.mxu0 0
        %1698 = vmatprep.subr.bf16.mxu0 0
        %1699 = vmatpush1.bf16.msra.mxu0 0
        %1700 = vmatprep.subr.bf16.mxu0 0
        %1701 = vmatpush1.bf16.msra.mxu0 0
        %1702 = vmatprep.subr.bf16.mxu0 0
        %1703 = vmatpush1.bf16.msra.mxu0 0
        %1704 = vmatprep.subr.bf16.mxu0 0
        %1705 = vmatpush1.bf16.msra.mxu0 0
        %1706 = vmatprep.subr.bf16.mxu0 0
        %1707 = vmatpush1.bf16.msra.mxu0 0
        %1708 = vmatprep.subr.bf16.mxu0 0
        %1709 = vmatpush1.bf16.msra.mxu0 0
        %1710 = vmatprep.subr.bf16.mxu0 0
        %1711 = vmatpush1.bf16.msra.mxu0 0
        %1712 = vmatprep.subr.bf16.mxu0 0
        %1713 = vmatpush1.bf16.msra.mxu0 0
        %1714 = vmatprep.mubr.bf16.mxu0 0
        %1715 = vmatmul.mubr.bf16.gmra.mrb[0].mxu0 %v1680
        %v1716 = vpop.f32.mrb[0].mxu0
        %v1717 = vadd.f32 %v386, %v1716
        %v1718 = vpop.f32.mrb[0].mxu0
        %v1719 = vadd.f32 %v390, %v1718
        %v1720 = vpop.f32.mrb[0].mxu0
        %v1721 = vpop.f32.mrb[0].mxu0
        %1722 = vdwg.mxu0
        %1723 = vmatprep.subr.bf16.mxu0 0
        %1724 = vmatpush1.bf16.msra.mxu0 %v419
        %1725 = vmatprep.subr.bf16.mxu0 0
        %1726 = vmatpush1.bf16.msra.mxu0 0
        %1727 = vmatprep.subr.bf16.mxu0 0
        %1728 = vmatpush1.bf16.msra.mxu0 0
        %1729 = vmatprep.subr.bf16.mxu0 0
        %1730 = vmatpush1.bf16.msra.mxu0 0
        %1731 = vmatprep.subr.bf16.mxu0 0
        %1732 = vmatpush1.bf16.msra.mxu0 0
        %1733 = vmatprep.subr.bf16.mxu0 0
        %1734 = vmatpush1.bf16.msra.mxu0 0
        %1735 = vmatprep.subr.bf16.mxu0 0
        %1736 = vmatpush1.bf16.msra.mxu0 0
        %1737 = vmatprep.subr.bf16.mxu0 0
        %1738 = vmatpush1.bf16.msra.mxu0 0
        %1739 = vmatprep.subr.bf16.mxu0 0
        %1740 = vmatpush1.bf16.msra.mxu0 0
        %1741 = vmatprep.subr.bf16.mxu0 0
        %1742 = vmatpush1.bf16.msra.mxu0 0
        %1743 = vmatprep.subr.bf16.mxu0 0
        %1744 = vmatpush1.bf16.msra.mxu0 0
        %1745 = vmatprep.subr.bf16.mxu0 0
        %1746 = vmatpush1.bf16.msra.mxu0 0
        %1747 = vmatprep.subr.bf16.mxu0 0
        %1748 = vmatpush1.bf16.msra.mxu0 0
        %1749 = vmatprep.subr.bf16.mxu0 0
        %1750 = vmatpush1.bf16.msra.mxu0 0
        %1751 = vmatprep.subr.bf16.mxu0 0
        %1752 = vmatpush1.bf16.msra.mxu0 0
        %1753 = vmatprep.subr.bf16.mxu0 0
        %1754 = vmatpush1.bf16.msra.mxu0 0
        %1755 = vmatprep.mubr.bf16.mxu0 0
        %1756 = vmatmul.mubr.bf16.gmra.mrb[0].mxu0 %v1680
        %v1757 = vpop.f32.mrb[0].mxu0
        %v1758 = vadd.f32 %v394, %v1757
        %v1759 = vpop.f32.mrb[0].mxu0
        %v1760 = vpop.f32.mrb[0].mxu0
        %v1761 = vpop.f32.mrb[0].mxu0
        %1762 = vdwg.mxu0
        %v1763 = vpack.c.bf16 %v1674, %v1674
        %1764 = vmatprep.subr.bf16.mxu0 %v590
        %1765 = vmatpush1.bf16.msra.mxu0 %v589
        %1766 = vmatprep.subr.bf16.mxu0 %v593
        %1767 = vmatpush1.bf16.msra.mxu0 %v592
        %1768 = vmatprep.subr.bf16.mxu0 %v596
        %1769 = vmatpush1.bf16.msra.mxu0 %v595
        %1770 = vmatprep.subr.bf16.mxu0 %v599
        %1771 = vmatpush1.bf16.msra.mxu0 %v598
        %1772 = vmatprep.subr.bf16.mxu0 %v602
        %1773 = vmatpush1.bf16.msra.mxu0 %v601
        %1774 = vmatprep.subr.bf16.mxu0 %v605
        %1775 = vmatpush1.bf16.msra.mxu0 %v604
        %1776 = vmatprep.subr.bf16.mxu0 %v608
        %1777 = vmatpush1.bf16.msra.mxu0 %v607
        %1778 = vmatprep.subr.bf16.mxu0 %v611
        %1779 = vmatpush1.bf16.msra.mxu0 %v610
        %1780 = vmatprep.subr.bf16.mxu0 0
        %1781 = vmatpush1.bf16.msra.mxu0 0
        %1782 = vmatprep.subr.bf16.mxu0 0
        %1783 = vmatpush1.bf16.msra.mxu0 0
        %1784 = vmatprep.subr.bf16.mxu0 0
        %1785 = vmatpush1.bf16.msra.mxu0 0
        %1786 = vmatprep.subr.bf16.mxu0 0
        %1787 = vmatpush1.bf16.msra.mxu0 0
        %1788 = vmatprep.subr.bf16.mxu0 0
        %1789 = vmatpush1.bf16.msra.mxu0 0
        %1790 = vmatprep.subr.bf16.mxu0 0
        %1791 = vmatpush1.bf16.msra.mxu0 0
        %1792 = vmatprep.subr.bf16.mxu0 0
        %1793 = vmatpush1.bf16.msra.mxu0 0
        %1794 = vmatprep.subr.bf16.mxu0 0
        %1795 = vmatpush1.bf16.msra.mxu0 0
        %1796 = vmatprep.mubr.bf16.mxu0 0
        %1797 = vmatmul.mubr.bf16.gmra.mrb[0].mxu0 %v1763
        %v1798 = vpop.f32.mrb[0].mxu0
        %v1799 = vadd.f32 0.0, %v1798
        %v1800 = vpop.f32.mrb[0].mxu0
        %v1801 = vadd.f32 0.0, %v1800
        %v1802 = vpop.f32.mrb[0].mxu0
        %v1803 = vpop.f32.mrb[0].mxu0
        %1804 = vdwg.mxu0
        %1805 = vmatprep.subr.bf16.mxu0 0
        %1806 = vmatpush1.bf16.msra.mxu0 %v591
        %1807 = vmatprep.subr.bf16.mxu0 0
        %1808 = vmatpush1.bf16.msra.mxu0 %v594
        %1809 = vmatprep.subr.bf16.mxu0 0
        %1810 = vmatpush1.bf16.msra.mxu0 %v597
        %1811 = vmatprep.subr.bf16.mxu0 0
        %1812 = vmatpush1.bf16.msra.mxu0 %v600
        %1813 = vmatprep.subr.bf16.mxu0 0
        %1814 = vmatpush1.bf16.msra.mxu0 %v603
        %1815 = vmatprep.subr.bf16.mxu0 0
        %1816 = vmatpush1.bf16.msra.mxu0 %v606
        %1817 = vmatprep.subr.bf16.mxu0 0
        %1818 = vmatpush1.bf16.msra.mxu0 %v609
        %1819 = vmatprep.subr.bf16.mxu0 0
        %1820 = vmatpush1.bf16.msra.mxu0 %v612
        %1821 = vmatprep.subr.bf16.mxu0 0
        %1822 = vmatpush1.bf16.msra.mxu0 0
        %1823 = vmatprep.subr.bf16.mxu0 0
        %1824 = vmatpush1.bf16.msra.mxu0 0
        %1825 = vmatprep.subr.bf16.mxu0 0
        %1826 = vmatpush1.bf16.msra.mxu0 0
        %1827 = vmatprep.subr.bf16.mxu0 0
        %1828 = vmatpush1.bf16.msra.mxu0 0
        %1829 = vmatprep.subr.bf16.mxu0 0
        %1830 = vmatpush1.bf16.msra.mxu0 0
        %1831 = vmatprep.subr.bf16.mxu0 0
        %1832 = vmatpush1.bf16.msra.mxu0 0
        %1833 = vmatprep.subr.bf16.mxu0 0
        %1834 = vmatpush1.bf16.msra.mxu0 0
        %1835 = vmatprep.subr.bf16.mxu0 0
        %1836 = vmatpush1.bf16.msra.mxu0 0
        %1837 = vmatprep.mubr.bf16.mxu0 0
        %1838 = vmatmul.mubr.bf16.gmra.mrb[0].mxu0 %v1763
        %v1839 = vpop.f32.mrb[0].mxu0
        %v1840 = vadd.f32 0.0, %v1839
        %v1841 = vpop.f32.mrb[0].mxu0
        %v1842 = vpop.f32.mrb[0].mxu0
        %v1843 = vpop.f32.mrb[0].mxu0
        %1844 = vdwg.mxu0
        %v1845 = vadd.f32 %v1717, %v1799
        %v1846 = vadd.f32 %v1719, %v1801
        %v1847 = vmul.f32 %v1845, 0.5
        %v1848 = vmul.f32 %v1846, 0.5
        %v1849 = vtanh.pop %v1847
        %v1850 = vtanh.pop %v1848
        %v1851 = vmul.f32 %v1849, 0.5
        %v1852 = vmul.f32 %v1850, 0.5
        %v1853 = vadd.f32 %v1851, 0.5
        %v1854 = vadd.f32 %v1852, 0.5
        %v1855 = vadd.f32 %v1840, %v403
        %v1856 = vmul.f32 %v1853, %v1855
        %v1857 = vadd.f32 %v1758, %v1856
        %v1858 = vsub.f32 1.0, %v1854
        %v1859 = vtanh.pop %v1857
        %v1860 = vsub.f32 %v1859, %v1674
        %v1861 = vmul.f32 %v1858, %v1860
        %v1862 = vadd.f32 %v1674, %v1861
        %s1863 = scalar_lea.vmem [#allocation3], 24
        %1864 = vst [vmem:[%s1863] sm:$0xf] %v1862
        %s1865 = scalar_lea.vmem %s295, 14 [#allocation4]
        %v1866 = vld [vmem:[%s1865] sm:$0x3]
        %v1868 = vsel %vm423, %v1866, 0
        %1870 = vmatprep.subr.bf16.mxu0 %v418
        %1871 = vmatpush1.bf16.msra.mxu0 %v417
        %1872 = vmatprep.subr.bf16.mxu0 0
        %1873 = vmatpush1.bf16.msra.mxu0 0
        %1874 = vmatprep.subr.bf16.mxu0 0
        %1875 = vmatpush1.bf16.msra.mxu0 0
        %1876 = vmatprep.subr.bf16.mxu0 0
        %1877 = vmatpush1.bf16.msra.mxu0 0
        %1878 = vmatprep.subr.bf16.mxu0 0
        %1879 = vmatpush1.bf16.msra.mxu0 0
        %1880 = vmatprep.subr.bf16.mxu0 0
        %1881 = vmatpush1.bf16.msra.mxu0 0
        %1882 = vmatprep.subr.bf16.mxu0 0
        %1883 = vmatpush1.bf16.msra.mxu0 0
        %1884 = vmatprep.subr.bf16.mxu0 0
        %1885 = vmatpush1.bf16.msra.mxu0 0
        %1886 = vmatprep.subr.bf16.mxu0 0
        %1887 = vmatpush1.bf16.msra.mxu0 0
        %1888 = vmatprep.subr.bf16.mxu0 0
        %1889 = vmatpush1.bf16.msra.mxu0 0
        %1890 = vmatprep.subr.bf16.mxu0 0
        %1891 = vmatpush1.bf16.msra.mxu0 0
        %1892 = vmatprep.subr.bf16.mxu0 0
        %1893 = vmatpush1.bf16.msra.mxu0 0
        %1894 = vmatprep.subr.bf16.mxu0 0
        %1895 = vmatpush1.bf16.msra.mxu0 0
        %1896 = vmatprep.subr.bf16.mxu0 0
        %1897 = vmatpush1.bf16.msra.mxu0 0
        %1898 = vmatprep.subr.bf16.mxu0 0
        %1899 = vmatpush1.bf16.msra.mxu0 0
        %1900 = vmatprep.subr.bf16.mxu0 0
        %1901 = vmatpush1.bf16.msra.mxu0 0
        %1902 = vmatprep.mubr.bf16.mxu0 0
        %1903 = vmatmul.mubr.bf16.gmra.mrb[0].mxu0 %v1868
        %v1904 = vpop.f32.mrb[0].mxu0
        %v1905 = vadd.f32 %v386, %v1904
        %v1906 = vpop.f32.mrb[0].mxu0
        %v1907 = vadd.f32 %v390, %v1906
        %v1908 = vpop.f32.mrb[0].mxu0
        %v1909 = vpop.f32.mrb[0].mxu0
        %1910 = vdwg.mxu0
        %1911 = vmatprep.subr.bf16.mxu0 0
        %1912 = vmatpush1.bf16.msra.mxu0 %v419
        %1913 = vmatprep.subr.bf16.mxu0 0
        %1914 = vmatpush1.bf16.msra.mxu0 0
        %1915 = vmatprep.subr.bf16.mxu0 0
        %1916 = vmatpush1.bf16.msra.mxu0 0
        %1917 = vmatprep.subr.bf16.mxu0 0
        %1918 = vmatpush1.bf16.msra.mxu0 0
        %1919 = vmatprep.subr.bf16.mxu0 0
        %1920 = vmatpush1.bf16.msra.mxu0 0
        %1921 = vmatprep.subr.bf16.mxu0 0
        %1922 = vmatpush1.bf16.msra.mxu0 0
        %1923 = vmatprep.subr.bf16.mxu0 0
        %1924 = vmatpush1.bf16.msra.mxu0 0
        %1925 = vmatprep.subr.bf16.mxu0 0
        %1926 = vmatpush1.bf16.msra.mxu0 0
        %1927 = vmatprep.subr.bf16.mxu0 0
        %1928 = vmatpush1.bf16.msra.mxu0 0
        %1929 = vmatprep.subr.bf16.mxu0 0
        %1930 = vmatpush1.bf16.msra.mxu0 0
        %1931 = vmatprep.subr.bf16.mxu0 0
        %1932 = vmatpush1.bf16.msra.mxu0 0
        %1933 = vmatprep.subr.bf16.mxu0 0
        %1934 = vmatpush1.bf16.msra.mxu0 0
        %1935 = vmatprep.subr.bf16.mxu0 0
        %1936 = vmatpush1.bf16.msra.mxu0 0
        %1937 = vmatprep.subr.bf16.mxu0 0
        %1938 = vmatpush1.bf16.msra.mxu0 0
        %1939 = vmatprep.subr.bf16.mxu0 0
        %1940 = vmatpush1.bf16.msra.mxu0 0
        %1941 = vmatprep.subr.bf16.mxu0 0
        %1942 = vmatpush1.bf16.msra.mxu0 0
        %1943 = vmatprep.mubr.bf16.mxu0 0
        %1944 = vmatmul.mubr.bf16.gmra.mrb[0].mxu0 %v1868
        %v1945 = vpop.f32.mrb[0].mxu0
        %v1946 = vadd.f32 %v394, %v1945
        %v1947 = vpop.f32.mrb[0].mxu0
        %v1948 = vpop.f32.mrb[0].mxu0
        %v1949 = vpop.f32.mrb[0].mxu0
        %1950 = vdwg.mxu0
        %v1951 = vpack.c.bf16 %v1862, %v1862
        %1952 = vmatprep.subr.bf16.mxu0 %v590
        %1953 = vmatpush1.bf16.msra.mxu0 %v589
        %1954 = vmatprep.subr.bf16.mxu0 %v593
        %1955 = vmatpush1.bf16.msra.mxu0 %v592
        %1956 = vmatprep.subr.bf16.mxu0 %v596
        %1957 = vmatpush1.bf16.msra.mxu0 %v595
        %1958 = vmatprep.subr.bf16.mxu0 %v599
        %1959 = vmatpush1.bf16.msra.mxu0 %v598
        %1960 = vmatprep.subr.bf16.mxu0 %v602
        %1961 = vmatpush1.bf16.msra.mxu0 %v601
        %1962 = vmatprep.subr.bf16.mxu0 %v605
        %1963 = vmatpush1.bf16.msra.mxu0 %v604
        %1964 = vmatprep.subr.bf16.mxu0 %v608
        %1965 = vmatpush1.bf16.msra.mxu0 %v607
        %1966 = vmatprep.subr.bf16.mxu0 %v611
        %1967 = vmatpush1.bf16.msra.mxu0 %v610
        %1968 = vmatprep.subr.bf16.mxu0 0
        %1969 = vmatpush1.bf16.msra.mxu0 0
        %1970 = vmatprep.subr.bf16.mxu0 0
        %1971 = vmatpush1.bf16.msra.mxu0 0
        %1972 = vmatprep.subr.bf16.mxu0 0
        %1973 = vmatpush1.bf16.msra.mxu0 0
        %1974 = vmatprep.subr.bf16.mxu0 0
        %1975 = vmatpush1.bf16.msra.mxu0 0
        %1976 = vmatprep.subr.bf16.mxu0 0
        %1977 = vmatpush1.bf16.msra.mxu0 0
        %1978 = vmatprep.subr.bf16.mxu0 0
        %1979 = vmatpush1.bf16.msra.mxu0 0
        %1980 = vmatprep.subr.bf16.mxu0 0
        %1981 = vmatpush1.bf16.msra.mxu0 0
        %1982 = vmatprep.subr.bf16.mxu0 0
        %1983 = vmatpush1.bf16.msra.mxu0 0
        %1984 = vmatprep.mubr.bf16.mxu0 0
        %1985 = vmatmul.mubr.bf16.gmra.mrb[0].mxu0 %v1951
        %v1986 = vpop.f32.mrb[0].mxu0
        %v1987 = vadd.f32 0.0, %v1986
        %v1988 = vpop.f32.mrb[0].mxu0
        %v1989 = vadd.f32 0.0, %v1988
        %v1990 = vpop.f32.mrb[0].mxu0
        %v1991 = vpop.f32.mrb[0].mxu0
        %1992 = vdwg.mxu0
        %1993 = vmatprep.subr.bf16.mxu0 0
        %1994 = vmatpush1.bf16.msra.mxu0 %v591
        %1995 = vmatprep.subr.bf16.mxu0 0
        %1996 = vmatpush1.bf16.msra.mxu0 %v594
        %1997 = vmatprep.subr.bf16.mxu0 0
        %1998 = vmatpush1.bf16.msra.mxu0 %v597
        %1999 = vmatprep.subr.bf16.mxu0 0
        %2000 = vmatpush1.bf16.msra.mxu0 %v600
        %2001 = vmatprep.subr.bf16.mxu0 0
        %2002 = vmatpush1.bf16.msra.mxu0 %v603
        %2003 = vmatprep.subr.bf16.mxu0 0
        %2004 = vmatpush1.bf16.msra.mxu0 %v606
        %2005 = vmatprep.subr.bf16.mxu0 0
        %2006 = vmatpush1.bf16.msra.mxu0 %v609
        %2007 = vmatprep.subr.bf16.mxu0 0
        %2008 = vmatpush1.bf16.msra.mxu0 %v612
        %2009 = vmatprep.subr.bf16.mxu0 0
        %2010 = vmatpush1.bf16.msra.mxu0 0
        %2011 = vmatprep.subr.bf16.mxu0 0
        %2012 = vmatpush1.bf16.msra.mxu0 0
        %2013 = vmatprep.subr.bf16.mxu0 0
        %2014 = vmatpush1.bf16.msra.mxu0 0
        %2015 = vmatprep.subr.bf16.mxu0 0
        %2016 = vmatpush1.bf16.msra.mxu0 0
        %2017 = vmatprep.subr.bf16.mxu0 0
        %2018 = vmatpush1.bf16.msra.mxu0 0
        %2019 = vmatprep.subr.bf16.mxu0 0
        %2020 = vmatpush1.bf16.msra.mxu0 0
        %2021 = vmatprep.subr.bf16.mxu0 0
        %2022 = vmatpush1.bf16.msra.mxu0 0
        %2023 = vmatprep.subr.bf16.mxu0 0
        %2024 = vmatpush1.bf16.msra.mxu0 0
        %2025 = vmatprep.mubr.bf16.mxu0 0
        %2026 = vmatmul.mubr.bf16.gmra.mrb[0].mxu0 %v1951
        %v2027 = vpop.f32.mrb[0].mxu0
        %v2028 = vadd.f32 0.0, %v2027
        %v2029 = vpop.f32.mrb[0].mxu0
        %v2030 = vpop.f32.mrb[0].mxu0
        %v2031 = vpop.f32.mrb[0].mxu0
        %2032 = vdwg.mxu0
        %v2033 = vadd.f32 %v1905, %v1987
        %v2034 = vadd.f32 %v1907, %v1989
        %v2035 = vmul.f32 %v2033, 0.5
        %v2036 = vmul.f32 %v2034, 0.5
        %v2037 = vtanh.pop %v2035
        %v2038 = vtanh.pop %v2036
        %v2039 = vmul.f32 %v2037, 0.5
        %v2040 = vmul.f32 %v2038, 0.5
        %v2041 = vadd.f32 %v2039, 0.5
        %v2042 = vadd.f32 %v2040, 0.5
        %v2043 = vadd.f32 %v2028, %v403
        %v2044 = vmul.f32 %v2041, %v2043
        %v2045 = vadd.f32 %v1946, %v2044
        %v2046 = vsub.f32 1.0, %v2042
        %v2047 = vtanh.pop %v2045
        %v2048 = vsub.f32 %v2047, %v1862
        %v2049 = vmul.f32 %v2046, %v2048
        %v2050 = vadd.f32 %v1862, %v2049
        %s2051 = scalar_lea.vmem [#allocation3], 28
        %2052 = vst [vmem:[%s2051] sm:$0xf] %v2050
        %2053 = vst [vmem:[#allocation2] sm:$0xf] %v2050
        %v2054 = vld [vmem:[#allocation3] sm:$0xf]
        %v2057 = vunpack.c.l.s4 1966171168
        %v2058 = vunpack.c.0.s8 %v2057
        %v2059 = vlaneseq
        %v2060 = vshrl.u32 %v2059, 7
        %v2061 = vsub.s32 %v2058, %v2060
        %v2062 = vrot.slane %v2054, %v2061
        %v2063 = vcombine.high %v2062, %v2062
        %v2065 = vunpack.c.l.s4 1966171168
        %v2066 = vunpack.c.0.s8 %v2065
        %v2067 = vlaneseq
        %v2068 = vshrl.u32 %v2067, 7
        %v2069 = vsub.s32 %v2066, %v2068
        %v2070 = vrot.slane %v2062, %v2069
        %v2072 = vunpack.c.l.s4 1966171168
        %v2073 = vunpack.c.0.s8 %v2072
        %v2074 = vlaneseq
        %v2075 = vshrl.u32 %v2074, 7
        %v2076 = vsub.s32 %v2073, %v2075
        %v2077 = vrot.slane %v2063, %v2076
        %v2078 = vcombine.high %v2070, %v2070
        %v2079 = vcombine.high %v2077, %v2077
        %2084 = vst [vmem:[%s335] sm:$0x1] %v2070
        %2085 = vst [vmem:[%s335 + $0x8] sm:$0x1] %v2077
        %2086 = vst [vmem:[%s335 + $0x10] sm:$0x1] %v2078
        %2087 = vst [vmem:[%s335 + $0x18] sm:$0x1] %v2079
        %v2088 = vld [vmem:[%s923] sm:$0xf]
        %v2091 = vunpack.c.l.s4 1966171168
        %v2092 = vunpack.c.0.s8 %v2091
        %v2093 = vlaneseq
        %v2094 = vshrl.u32 %v2093, 7
        %v2095 = vsub.s32 %v2092, %v2094
        %v2096 = vrot.slane %v2088, %v2095
        %v2097 = vcombine.high %v2096, %v2096
        %v2099 = vunpack.c.l.s4 1966171168
        %v2100 = vunpack.c.0.s8 %v2099
        %v2101 = vlaneseq
        %v2102 = vshrl.u32 %v2101, 7
        %v2103 = vsub.s32 %v2100, %v2102
        %v2104 = vrot.slane %v2096, %v2103
        %v2106 = vunpack.c.l.s4 1966171168
        %v2107 = vunpack.c.0.s8 %v2106
        %v2108 = vlaneseq
        %v2109 = vshrl.u32 %v2108, 7
        %v2110 = vsub.s32 %v2107, %v2109
        %v2111 = vrot.slane %v2097, %v2110
        %v2112 = vcombine.high %v2104, %v2104
        %v2113 = vcombine.high %v2111, %v2111
        %2118 = vst [vmem:[%s335 + $0x1] sm:$0x1] %v2104
        %2119 = vst [vmem:[%s335 + $0x9] sm:$0x1] %v2111
        %2120 = vst [vmem:[%s335 + $0x11] sm:$0x1] %v2112
        %2121 = vst [vmem:[%s335 + $0x19] sm:$0x1] %v2113
        %v2122 = vld [vmem:[%s1111] sm:$0xf]
        %v2125 = vunpack.c.l.s4 1966171168
        %v2126 = vunpack.c.0.s8 %v2125
        %v2127 = vlaneseq
        %v2128 = vshrl.u32 %v2127, 7
        %v2129 = vsub.s32 %v2126, %v2128
        %v2130 = vrot.slane %v2122, %v2129
        %v2131 = vcombine.high %v2130, %v2130
        %v2133 = vunpack.c.l.s4 1966171168
        %v2134 = vunpack.c.0.s8 %v2133
        %v2135 = vlaneseq
        %v2136 = vshrl.u32 %v2135, 7
        %v2137 = vsub.s32 %v2134, %v2136
        %v2138 = vrot.slane %v2130, %v2137
        %v2140 = vunpack.c.l.s4 1966171168
        %v2141 = vunpack.c.0.s8 %v2140
        %v2142 = vlaneseq
        %v2143 = vshrl.u32 %v2142, 7
        %v2144 = vsub.s32 %v2141, %v2143
        %v2145 = vrot.slane %v2131, %v2144
        %v2146 = vcombine.high %v2138, %v2138
        %v2147 = vcombine.high %v2145, %v2145
        %2152 = vst [vmem:[%s335 + $0x2] sm:$0x1] %v2138
        %2153 = vst [vmem:[%s335 + $0xa] sm:$0x1] %v2145
        %2154 = vst [vmem:[%s335 + $0x12] sm:$0x1] %v2146
        %2155 = vst [vmem:[%s335 + $0x1a] sm:$0x1] %v2147
        %v2156 = vld [vmem:[%s1299] sm:$0xf]
        %v2159 = vunpack.c.l.s4 1966171168
        %v2160 = vunpack.c.0.s8 %v2159
        %v2161 = vlaneseq
        %v2162 = vshrl.u32 %v2161, 7
        %v2163 = vsub.s32 %v2160, %v2162
        %v2164 = vrot.slane %v2156, %v2163
        %v2165 = vcombine.high %v2164, %v2164
        %v2167 = vunpack.c.l.s4 1966171168
        %v2168 = vunpack.c.0.s8 %v2167
        %v2169 = vlaneseq
        %v2170 = vshrl.u32 %v2169, 7
        %v2171 = vsub.s32 %v2168, %v2170
        %v2172 = vrot.slane %v2164, %v2171
        %v2174 = vunpack.c.l.s4 1966171168
        %v2175 = vunpack.c.0.s8 %v2174
        %v2176 = vlaneseq
        %v2177 = vshrl.u32 %v2176, 7
        %v2178 = vsub.s32 %v2175, %v2177
        %v2179 = vrot.slane %v2165, %v2178
        %v2180 = vcombine.high %v2172, %v2172
        %v2181 = vcombine.high %v2179, %v2179
        %2186 = vst [vmem:[%s335 + $0x3] sm:$0x1] %v2172
        %2187 = vst [vmem:[%s335 + $0xb] sm:$0x1] %v2179
        %2188 = vst [vmem:[%s335 + $0x13] sm:$0x1] %v2180
        %2189 = vst [vmem:[%s335 + $0x1b] sm:$0x1] %v2181
        %v2190 = vld [vmem:[%s1487] sm:$0xf]
        %v2193 = vunpack.c.l.s4 1966171168
        %v2194 = vunpack.c.0.s8 %v2193
        %v2195 = vlaneseq
        %v2196 = vshrl.u32 %v2195, 7
        %v2197 = vsub.s32 %v2194, %v2196
        %v2198 = vrot.slane %v2190, %v2197
        %v2199 = vcombine.high %v2198, %v2198
        %v2201 = vunpack.c.l.s4 1966171168
        %v2202 = vunpack.c.0.s8 %v2201
        %v2203 = vlaneseq
        %v2204 = vshrl.u32 %v2203, 7
        %v2205 = vsub.s32 %v2202, %v2204
        %v2206 = vrot.slane %v2198, %v2205
        %v2208 = vunpack.c.l.s4 1966171168
        %v2209 = vunpack.c.0.s8 %v2208
        %v2210 = vlaneseq
        %v2211 = vshrl.u32 %v2210, 7
        %v2212 = vsub.s32 %v2209, %v2211
        %v2213 = vrot.slane %v2199, %v2212
        %v2214 = vcombine.high %v2206, %v2206
        %v2215 = vcombine.high %v2213, %v2213
        %2220 = vst [vmem:[%s335 + $0x4] sm:$0x1] %v2206
        %2221 = vst [vmem:[%s335 + $0xc] sm:$0x1] %v2213
        %2222 = vst [vmem:[%s335 + $0x14] sm:$0x1] %v2214
        %2223 = vst [vmem:[%s335 + $0x1c] sm:$0x1] %v2215
        %v2224 = vld [vmem:[%s1675] sm:$0xf]
        %v2227 = vunpack.c.l.s4 1966171168
        %v2228 = vunpack.c.0.s8 %v2227
        %v2229 = vlaneseq
        %v2230 = vshrl.u32 %v2229, 7
        %v2231 = vsub.s32 %v2228, %v2230
        %v2232 = vrot.slane %v2224, %v2231
        %v2233 = vcombine.high %v2232, %v2232
        %v2235 = vunpack.c.l.s4 1966171168
        %v2236 = vunpack.c.0.s8 %v2235
        %v2237 = vlaneseq
        %v2238 = vshrl.u32 %v2237, 7
        %v2239 = vsub.s32 %v2236, %v2238
        %v2240 = vrot.slane %v2232, %v2239
        %v2242 = vunpack.c.l.s4 1966171168
        %v2243 = vunpack.c.0.s8 %v2242
        %v2244 = vlaneseq
        %v2245 = vshrl.u32 %v2244, 7
        %v2246 = vsub.s32 %v2243, %v2245
        %v2247 = vrot.slane %v2233, %v2246
        %v2248 = vcombine.high %v2240, %v2240
        %v2249 = vcombine.high %v2247, %v2247
        %2254 = vst [vmem:[%s335 + $0x5] sm:$0x1] %v2240
        %2255 = vst [vmem:[%s335 + $0xd] sm:$0x1] %v2247
        %2256 = vst [vmem:[%s335 + $0x15] sm:$0x1] %v2248
        %2257 = vst [vmem:[%s335 + $0x1d] sm:$0x1] %v2249
        %v2258 = vld [vmem:[%s1863] sm:$0xf]
        %v2261 = vunpack.c.l.s4 1966171168
        %v2262 = vunpack.c.0.s8 %v2261
        %v2263 = vlaneseq
        %v2264 = vshrl.u32 %v2263, 7
        %v2265 = vsub.s32 %v2262, %v2264
        %v2266 = vrot.slane %v2258, %v2265
        %v2267 = vcombine.high %v2266, %v2266
        %v2269 = vunpack.c.l.s4 1966171168
        %v2270 = vunpack.c.0.s8 %v2269
        %v2271 = vlaneseq
        %v2272 = vshrl.u32 %v2271, 7
        %v2273 = vsub.s32 %v2270, %v2272
        %v2274 = vrot.slane %v2266, %v2273
        %v2276 = vunpack.c.l.s4 1966171168
        %v2277 = vunpack.c.0.s8 %v2276
        %v2278 = vlaneseq
        %v2279 = vshrl.u32 %v2278, 7
        %v2280 = vsub.s32 %v2277, %v2279
        %v2281 = vrot.slane %v2267, %v2280
        %v2282 = vcombine.high %v2274, %v2274
        %v2283 = vcombine.high %v2281, %v2281
        %2288 = vst [vmem:[%s335 + $0x6] sm:$0x1] %v2274
        %2289 = vst [vmem:[%s335 + $0xe] sm:$0x1] %v2281
        %2290 = vst [vmem:[%s335 + $0x16] sm:$0x1] %v2282
        %2291 = vst [vmem:[%s335 + $0x1e] sm:$0x1] %v2283
        %v2292 = vld [vmem:[%s2051] sm:$0xf]
        %v2295 = vunpack.c.l.s4 1966171168
        %v2296 = vunpack.c.0.s8 %v2295
        %v2297 = vlaneseq
        %v2298 = vshrl.u32 %v2297, 7
        %v2299 = vsub.s32 %v2296, %v2298
        %v2300 = vrot.slane %v2292, %v2299
        %v2301 = vcombine.high %v2300, %v2300
        %v2303 = vunpack.c.l.s4 1966171168
        %v2304 = vunpack.c.0.s8 %v2303
        %v2305 = vlaneseq
        %v2306 = vshrl.u32 %v2305, 7
        %v2307 = vsub.s32 %v2304, %v2306
        %v2308 = vrot.slane %v2300, %v2307
        %v2310 = vunpack.c.l.s4 1966171168
        %v2311 = vunpack.c.0.s8 %v2310
        %v2312 = vlaneseq
        %v2313 = vshrl.u32 %v2312, 7
        %v2314 = vsub.s32 %v2311, %v2313
        %v2315 = vrot.slane %v2301, %v2314
        %v2316 = vcombine.high %v2308, %v2308
        %v2317 = vcombine.high %v2315, %v2315
        %2322 = vst [vmem:[%s335 + $0x7] sm:$0x1] %v2308
        %2323 = vst [vmem:[%s335 + $0xf] sm:$0x1] %v2315
        %2324 = vst [vmem:[%s335 + $0x17] sm:$0x1] %v2316
        %2325 = vst [vmem:[%s335 + $0x1f] sm:$0x1] %v2317
        %s2326 = sand.u32 %s185, 1
        %s2327 = scalar_lea.sflag [#allocation6], %s2326
        %s2328 = sand.u32 %s185, 1
        %s2329 = smul.addr %s2328, 32
        %s2330 = scalar_lea.vmem [#allocation12], %s2329
        // Predicated region
        $region65: #{tpu_custom_call.1} parent=43 // pred_check
          %p2331 = pneg %p195
        $region66: #{tpu_custom_call.1} parent=43 // pred_check_branch
          %2333 = sbr.rel (%p2331) target = $region68
        $region67: #{tpu_custom_call.1} parent=43 // pred_region
          %s2334 = smul.u32 4, %s29
          %s2336 = ssub.s32 512, 512
          %2337 = vsyncadd %s2327, %s2336
          %s2338 = smul.addr %s2334, 2
          %s2339 = sadd.s32 %s30, %s2338
          %s2340 = smul.addr %s2339, 128
          %s2341 = scalar_lea.hbm %s6, %s2340
          %s2342 = sshll.u32 %s2330, 4
          %s2343 = int_to_ptr.vmem [resolvable:$true] %s2342
          %2348 = dma.vmem_to_hbm [thread:$0]  %s2343, 512, %s2341, %s2327, 128, 256, 8
        $region68: #{tpu_custom_call.1} parent=43 // pred_fallthru
          _
      $region44: #{tpu_custom_call.1} parent=5 // pred_fallthru
        _
      %p2349 = scmp.le.s32.totalorder 2, %s20
      // Predicated region
      $region69: #{tpu_custom_call.1} parent=5 // pred_check
        %p2350 = pneg %p2349
      $region70: #{tpu_custom_call.1} parent=5 // pred_check_branch
        %2352 = sbr.rel (%p2350) target = $region72
      $region71: #{tpu_custom_call.1} parent=5 // pred_region
        %s2353 = ssub.s32 %s20, 2
        // Predicated region
        $region73: #{tpu_custom_call.1} parent=71 // pred_check
          %p2354 = pneg %p201
        $region74: #{tpu_custom_call.1} parent=71 // pred_check_branch
          %2356 = sbr.rel (%p2354) target = $region76
        $region75: #{tpu_custom_call.1} parent=71 // pred_region
          %s2357 = sand.u32 %s186, 1
          %s2358 = scalar_lea.sflag [#allocation6], %s2357
          %s2359 = sand.u32 %s186, 1
          %s2360 = smul.addr %s2359, 32
          %s2361 = scalar_lea.vmem [#allocation12], %s2360
          %2362 = dma.done %s2358, 512
        $region76: #{tpu_custom_call.1} parent=71 // pred_fallthru
          _
      $region72: #{tpu_custom_call.1} parent=5 // pred_fallthru
        _
    $region6: #{tpu_custom_call.1} parent=1 // loop_footer
      %s24 = sadd.s32 1, %s20
    $region7: #{tpu_custom_call.1} parent=1 // loop_footer_branch
      %19 = sbr.rel target = $region3
    $region8: #{tpu_custom_call.1} parent=1 // loop_exit
      _
    %2363 = vsyncpa [#allocation5], 1
    %s2364 = scalar_lea.sflag [#allocation5], 1
    %2365 = vsyncpa %s2364, 1
    %2366 = vsyncpa [#allocation8], 1
    %2367 = vsyncpa [#allocation11], 1
    %2368 = vsyncpa [#allocation6], 1
    %s2369 = scalar_lea.sflag [#allocation6], 1
    %2370 = vsyncpa %s2369, 1

// kernel: tpu_custom_call.1
$region0: #{tpu_custom_call.1}
  #allocation0 [shape = 'u32[]', space=smem, size = 0x4, offset = 0x4, fixed_abs, tag = 'smem constant byte address 0x4 - core index']
  #allocation1 [shape = 'u32[144,128]{1,0:T(1,128)}', space=vmem, size = 0x12000, scoped, tag = 'internal scratch']
  #allocation2 [shape = 'f32[4,128]{1,0:T(4,128)}', space=vmem, size = 0x800, scoped, tag = 'scratch operand']
  #allocation3 [shape = 'f32[8,4,128]{2,1,0:T(4,128)}', space=vmem, size = 0x4000, scoped, tag = 'scratch operand']
  %s0 = inlined_call_operand.hbm [shape: bf16[16,4,16], index: 0, kind: input, shape index: {}]
  %s1 = inlined_call_operand.hbm [shape: f32[4,128], index: 1, kind: input, shape index: {}]
  %s2 = inlined_call_operand.hbm [shape: bf16[16,384], index: 2, kind: input, shape index: {}]
  %s3 = inlined_call_operand.vmem [shape: f32[1,384], index: 3, kind: input, shape index: {}]
  %s4 = inlined_call_operand.hbm [shape: bf16[128,384], index: 4, kind: input, shape index: {}]
  %s5 = inlined_call_operand.vmem [shape: f32[1,128], index: 5, kind: input, shape index: {}]
  %s6 = inlined_call_operand.hbm [shape: f32[4,16,128], index: 6, kind: output, shape index: {}]
  %s7 = sld [smem:[#allocation0]]
  $region77: #{tpu_custom_call.1} parent=0
    _
  %s9 = ssub.s32 1, %s7
  %s10 = scalar_select 0, %s9, %s7
  $region1: #{tpu_custom_call.1} parent=0
    #allocation4 [shape = 'u8[16384]{0}', space=vmem, size = 0x4000, scoped, tag = 'input window, operand 0']
    #allocation5 [shape = 's32[2]{0}', space=sflag, size = 0x8, scoped, tag = 'scoped memory for tpu_custom_call.1']
    #allocation6 [shape = 's32[2]{0}', space=sflag, size = 0x8, scoped, tag = 'scoped memory for tpu_custom_call.1']
    #allocation7 [shape = 'u8[2048]{0}', space=vmem, size = 0x800, scoped, tag = 'input window, operand 1, single buffered']
    #allocation8 [shape = 's32[1]{0}', space=sflag, size = 0x4, scoped, tag = 'scoped memory for tpu_custom_call.1']
    #allocation9 [shape = 'u8[12288]{0}', space=vmem, size = 0x3000, scoped, tag = 'input window, operand 2, single buffered']
    #allocation10 [shape = 'u8[98304]{0}', space=vmem, size = 0x18000, scoped, tag = 'input window, operand 4, single buffered']
    #allocation11 [shape = 's32[1]{0}', space=sflag, size = 0x4, scoped, tag = 'scoped memory for tpu_custom_call.1']
    #allocation12 [shape = 'u8[32768]{0}', space=vmem, size = 0x8000, scoped, tag = 'output window, operand 0']
    %11 = vsyncpa [#allocation5], 0
    %s12 = scalar_lea.sflag [#allocation5], 1
    %13 = vsyncpa %s12, 0
    %14 = vsyncpa [#allocation8], 0
    %15 = vsyncpa [#allocation11], 0
    %16 = vsyncpa [#allocation6], 0
    %s17 = scalar_lea.sflag [#allocation6], 1
    %18 = vsyncpa %s17, 0
    loop: start=0, step=1, limit=4
    $region2: #{tpu_custom_call.1} parent=1 // loop_pre_header
      _
    $region3: #{tpu_custom_call.1} parent=1 // loop_header
      %s20 = sphi 0, %s24
      %p21 = scmp.ge.s32.totalorder %s20, 4
      %s27 = sphi 0, %s39
      %s28 = sphi 0, %s35
      %s29 = sphi 0, %s27
      %s30 = sphi 0, %s28
      %s31 = sphi 0, %s29
      %s32 = sphi 0, %s30
      %s44 = sphi 0, %s46
      %s47 = sphi 0, %s44
      %s48 = sphi 0, %s47
      %s64 = sphi 0, %s48
      %s70 = sphi 0, %s72
      %s73 = sphi 0, %s70
      %s74 = sphi 0, %s73
      %s90 = sphi 0, %s74
      %s94 = sphi 0, %s94
      %s96 = sphi 0, %s94
      %s97 = sphi 0, %s96
      %s111 = sphi 0, %s97
      %s115 = sphi 0, %s115
      %s117 = sphi 0, %s115
      %s118 = sphi 0, %s117
      %s132 = sphi 0, %s118
      %s136 = sphi 0, %s136
      %s138 = sphi 0, %s136
      %s139 = sphi 0, %s138
      %s153 = sphi 0, %s139
      %s157 = sphi 0, %s157
      %s159 = sphi 0, %s157
      %s160 = sphi 0, %s159
      %s174 = sphi 0, %s160
      %s182 = sphi 0, %s184
      %s185 = sphi 0, %s182
      %s186 = sphi 0, %s185
      %s202 = sphi 0, %s186
    $region4: #{tpu_custom_call.1} parent=1 // loop_header_branch
      %23 = sbr.rel (%p21) target = $region8
    $region5: #{tpu_custom_call.1} parent=1 // loop_body
      %s25 = ssub.s32 %s20, 1
      %s26 = ssub.s32 %s20, 2
      %s33 = sadd.s32 1, %s28
      %p34 = scmp.ge.s32.totalorder %s33, 2
      %s35 = scalar_select %p34, 0, %s33
      %s36 = sadd.s32 1, %s27
      %s37 = scalar_select %p34, %s36, %s27
      %p38 = scmp.ge.s32.totalorder %s37, 1
      %s39 = scalar_select %p38, 0, %s37
      %s40 = ssub.s32 %s28, %s35
      %s41 = ssub.s32 %s27, %s39
      %s42 = sor.u32 %s40, %s41
      %p43 = scmp.eq.s32.totalorder %s42, 0
      %s45 = sadd.s32 %s44, 1
      %s46 = scalar_select %p43, %s44, %s45
      %p49 = pneg %p43
      %p50 = scmp.eq.s32.totalorder %s20, 1
      %p51 = por %p49, %p50
      %p52 = scmp.ne.s32.totalorder %s44, %s47
      %p53 = scmp.eq.s32.totalorder %s20, 0
      %p54 = por %p52, %p53
      %p55 = scmp.ne.s32.totalorder %s44, %s47
      %p56 = scmp.eq.s32.totalorder %s25, 1
      %p57 = por %p55, %p56
      %p58 = scmp.ne.s32.totalorder %s47, %s48
      %p59 = scmp.eq.s32.totalorder %s25, 0
      %p60 = por %p58, %p59
      %p61 = scmp.ne.s32.totalorder %s47, %s48
      %p62 = scmp.eq.s32.totalorder %s26, 1
      %p63 = por %p61, %p62
      %p65 = scmp.ne.s32.totalorder %s48, %s64
      %p66 = scmp.eq.s32.totalorder %s26, 0
      %p67 = por %p65, %p66
      %s68 = ssub.s32 %s27, %s39
      %p69 = scmp.eq.s32.totalorder %s68, 0
      %s71 = sadd.s32 %s70, 1
      %s72 = scalar_select %p69, %s70, %s71
      %p75 = pneg %p69
      %p76 = scmp.eq.s32.totalorder %s20, 1
      %p77 = por %p75, %p76
      %p78 = scmp.ne.s32.totalorder %s70, %s73
      %p79 = scmp.eq.s32.totalorder %s20, 0
      %p80 = por %p78, %p79
      %p81 = scmp.ne.s32.totalorder %s70, %s73
      %p82 = scmp.eq.s32.totalorder %s25, 1
      %p83 = por %p81, %p82
      %p84 = scmp.ne.s32.totalorder %s73, %s74
      %p85 = scmp.eq.s32.totalorder %s25, 0
      %p86 = por %p84, %p85
      %p87 = scmp.ne.s32.totalorder %s73, %s74
      %p88 = scmp.eq.s32.totalorder %s26, 1
      %p89 = por %p87, %p88
      %p91 = scmp.ne.s32.totalorder %s74, %s90
      %p92 = scmp.eq.s32.totalorder %s26, 0
      %p93 = por %p91, %p92
      %s95 = sadd.s32 %s94, 1
      %p98 = scmp.eq.s32.totalorder %s20, 1
      %p99 = scmp.ne.s32.totalorder %s94, %s96
      %p100 = scmp.eq.s32.totalorder %s20, 0
      %p101 = por %p99, %p100
      %p102 = scmp.ne.s32.totalorder %s94, %s96
      %p103 = scmp.eq.s32.totalorder %s25, 1
      %p104 = por %p102, %p103
      %p105 = scmp.ne.s32.totalorder %s96, %s97
      %p106 = scmp.eq.s32.totalorder %s25, 0
      %p107 = por %p105, %p106
      %p108 = scmp.ne.s32.totalorder %s96, %s97
      %p109 = scmp.eq.s32.totalorder %s26, 1
      %p110 = por %p108, %p109
      %p112 = scmp.ne.s32.totalorder %s97, %s111
      %p113 = scmp.eq.s32.totalorder %s26, 0
      %p114 = por %p112, %p113
      %s116 = sadd.s32 %s115, 1
      %p119 = scmp.eq.s32.totalorder %s20, 1
      %p120 = scmp.ne.s32.totalorder %s115, %s117
      %p121 = scmp.eq.s32.totalorder %s20, 0
      %p122 = por %p120, %p121
      %p123 = scmp.ne.s32.totalorder %s115, %s117
      %p124 = scmp.eq.s32.totalorder %s25, 1
      %p125 = por %p123, %p124
      %p126 = scmp.ne.s32.totalorder %s117, %s118
      %p127 = scmp.eq.s32.totalorder %s25, 0
      %p128 = por %p126, %p127
      %p129 = scmp.ne.s32.totalorder %s117, %s118
      %p130 = scmp.eq.s32.totalorder %s26, 1
      %p131 = por %p129, %p130
      %p133 = scmp.ne.s32.totalorder %s118, %s132
      %p134 = scmp.eq.s32.totalorder %s26, 0
      %p135 = por %p133, %p134
      %s137 = sadd.s32 %s136, 1
      %p140 = scmp.eq.s32.totalorder %s20, 1
      %p141 = scmp.ne.s32.totalorder %s136, %s138
      %p142 = scmp.eq.s32.totalorder %s20, 0
      %p143 = por %p141, %p142
      %p144 = scmp.ne.s32.totalorder %s136, %s138
      %p145 = scmp.eq.s32.totalorder %s25, 1
      %p146 = por %p144, %p145
      %p147 = scmp.ne.s32.totalorder %s138, %s139
      %p148 = scmp.eq.s32.totalorder %s25, 0
      %p149 = por %p147, %p148
      %p150 = scmp.ne.s32.totalorder %s138, %s139
      %p151 = scmp.eq.s32.totalorder %s26, 1
      %p152 = por %p150, %p151
      %p154 = scmp.ne.s32.totalorder %s139, %s153
      %p155 = scmp.eq.s32.totalorder %s26, 0
      %p156 = por %p154, %p155
      %s158 = sadd.s32 %s157, 1
      %p161 = scmp.eq.s32.totalorder %s20, 1
      %p162 = scmp.ne.s32.totalorder %s157, %s159
      %p163 = scmp.eq.s32.totalorder %s20, 0
      %p164 = por %p162, %p163
      %p165 = scmp.ne.s32.totalorder %s157, %s159
      %p166 = scmp.eq.s32.totalorder %s25, 1
      %p167 = por %p165, %p166
      %p168 = scmp.ne.s32.totalorder %s159, %s160
      %p169 = scmp.eq.s32.totalorder %s25, 0
      %p170 = por %p168, %p169
      %p171 = scmp.ne.s32.totalorder %s159, %s160
      %p172 = scmp.eq.s32.totalorder %s26, 1
      %p173 = por %p171, %p172
      %p175 = scmp.ne.s32.totalorder %s160, %s174
      %p176 = scmp.eq.s32.totalorder %s26, 0
      %p177 = por %p175, %p176
      %s178 = ssub.s32 %s27, %s39
      %s179 = ssub.s32 %s28, %s35
      %s180 = sor.u32 %s178, %s179
      %p181 = scmp.eq.s32.totalorder %s180, 0
      %s183 = sadd.s32 %s182, 1
      %s184 = scalar_select %p181, %s182, %s183
      %p187 = pneg %p181
      %p188 = scmp.eq.s32.totalorder %s20, 1
      %p189 = por %p187, %p188
      %p190 = scmp.ne.s32.totalorder %s182, %s185
      %p191 = scmp.eq.s32.totalorder %s20, 0
      %p192 = por %p190, %p191
      %p193 = scmp.ne.s32.totalorder %s182, %s185
      %p194 = scmp.eq.s32.totalorder %s25, 1
      %p195 = por %p193, %p194
      %p196 = scmp.ne.s32.totalorder %s185, %s186
      %p197 = scmp.eq.s32.totalorder %s25, 0
      %p198 = por %p196, %p197
      %p199 = scmp.ne.s32.totalorder %s185, %s186
      %p200 = scmp.eq.s32.totalorder %s26, 1
      %p201 = por %p199, %p200
      %p203 = scmp.ne.s32.totalorder %s186, %s202
      %p204 = scmp.eq.s32.totalorder %s26, 0
      %p205 = por %p203, %p204
      %p206 = scmp.le.s32.totalorder 1, %s20
      %p207 = scmp.lt.s32.totalorder %s20, 3
      %p208 = pnand %p206, %p207
      %p209 = pneg %p208
      // Predicated region
      $region9: #{tpu_custom_call.1} parent=5 // pred_check
        _
      $region10: #{tpu_custom_call.1} parent=5 // pred_check_branch
        %211 = sbr.rel (%p208) target = $region12
      $region11: #{tpu_custom_call.1} parent=5 // pred_region
        %s212 = ssub.s32 %s20, 1
        // Predicated region
        $region13: #{tpu_custom_call.1} parent=11 // pred_check
          %p213 = pneg %p86
        $region14: #{tpu_custom_call.1} parent=11 // pred_check_branch
          %215 = sbr.rel (%p213) target = $region16
        $region15: #{tpu_custom_call.1} parent=11 // pred_region
          %s217 = ssub.s32 64, 64
          %218 = vsyncadd [#allocation8], %s217
          %s219 = smul.addr %s29, 64
          %s220 = scalar_lea.hbm %s1, %s219
          %s222 = sshll.u32 [#allocation7], 4
          %s223 = int_to_ptr.vmem [resolvable:$true] %s222
          %225 = dma.hbm_to_vmem [thread:$0]  %s220, 64, %s223, [#allocation8]
        $region16: #{tpu_custom_call.1} parent=11 // pred_fallthru
          _
        // Predicated region
        $region17: #{tpu_custom_call.1} parent=11 // pred_check
          %p226 = pneg %p107
        $region18: #{tpu_custom_call.1} parent=11 // pred_check_branch
          %228 = sbr.rel (%p226) target = $region20
        $region19: #{tpu_custom_call.1} parent=11 // pred_region
          %s230 = ssub.s32 384, 384
          %231 = vsyncadd [#allocation8], %s230
          %s232 = sshll.u32 [#allocation9], 4
          %s233 = int_to_ptr.vmem [resolvable:$true] %s232
          %238 = dma.hbm_to_vmem [thread:$0]  %s2, 384, %s233, [#allocation8], 192, 192, 12
        $region20: #{tpu_custom_call.1} parent=11 // pred_fallthru
          _
        // Predicated region
        $region21: #{tpu_custom_call.1} parent=11 // pred_check
          %p239 = pneg %p128
        $region22: #{tpu_custom_call.1} parent=11 // pred_check_branch
          %241 = sbr.rel (%p239) target = $region24
        $region23: #{tpu_custom_call.1} parent=11 // pred_region
          _
        $region24: #{tpu_custom_call.1} parent=11 // pred_fallthru
          _
        // Predicated region
        $region25: #{tpu_custom_call.1} parent=11 // pred_check
          %p242 = pneg %p149
        $region26: #{tpu_custom_call.1} parent=11 // pred_check_branch
          %244 = sbr.rel (%p242) target = $region28
        $region27: #{tpu_custom_call.1} parent=11 // pred_region
          %s246 = ssub.s32 3072, 3072
          %247 = vsyncadd [#allocation11], %s246
          %s248 = sshll.u32 [#allocation10], 4
          %s249 = int_to_ptr.vmem [resolvable:$true] %s248
          %254 = dma.hbm_to_vmem [thread:$0]  %s4, 3072, %s249, [#allocation11], 192, 192, 12
        $region28: #{tpu_custom_call.1} parent=11 // pred_fallthru
          _
        // Predicated region
        $region29: #{tpu_custom_call.1} parent=11 // pred_check
          %p255 = pneg %p170
        $region30: #{tpu_custom_call.1} parent=11 // pred_check_branch
          %257 = sbr.rel (%p255) target = $region32
        $region31: #{tpu_custom_call.1} parent=11 // pred_region
          _
        $region32: #{tpu_custom_call.1} parent=11 // pred_fallthru
          _
      $region12: #{tpu_custom_call.1} parent=5 // pred_fallthru
        _
      %p258 = scmp.lt.s32.totalorder %s20, 2
      // Predicated region
      $region33: #{tpu_custom_call.1} parent=5 // pred_check
        %p259 = pneg %p258
      $region34: #{tpu_custom_call.1} parent=5 // pred_check_branch
        %261 = sbr.rel (%p259) target = $region36
      $region35: #{tpu_custom_call.1} parent=5 // pred_region
        // Predicated region
        $region37: #{tpu_custom_call.1} parent=35 // pred_check
          %p262 = pneg %p54
        $region38: #{tpu_custom_call.1} parent=35 // pred_check_branch
          %264 = sbr.rel (%p262) target = $region40
        $region39: #{tpu_custom_call.1} parent=35 // pred_region
          %s265 = sand.u32 %s44, 1
          %s266 = scalar_lea.sflag [#allocation5], %s265
          %s267 = sand.u32 %s44, 1
          %s268 = smul.addr %s267, 16
          %s269 = scalar_lea.vmem [#allocation4], %s268
          %s270 = smul.u32 8, %s28
          %s272 = ssub.s32 256, 256
          %273 = vsyncadd %s266, %s272
          %s274 = sadd.s32 %s27, %s270
          %s275 = smul.addr %s274, 32
          %s276 = scalar_lea.hbm %s0, %s275
          %s277 = sshll.u32 %s269, 4
          %s278 = int_to_ptr.vmem [resolvable:$true] %s277
          %283 = dma.hbm_to_vmem [thread:$0]  %s276, 256, %s278, %s266, 32, 32, 2
        $region40: #{tpu_custom_call.1} parent=35 // pred_fallthru
          _
      $region36: #{tpu_custom_call.1} parent=5 // pred_fallthru
        _
      %p284 = scmp.le.s32.totalorder 1, %s20
      %p285 = scmp.lt.s32.totalorder %s20, 3
      %p286 = pnand %p284, %p285
      %p287 = pneg %p286
      // Predicated region
      $region41: #{tpu_custom_call.1} parent=5 // pred_check
        _
      $region42: #{tpu_custom_call.1} parent=5 // pred_check_branch
        %289 = sbr.rel (%p286) target = $region44
      $region43: #{tpu_custom_call.1} parent=5 // pred_region
        %s290 = ssub.s32 %s20, 1
        %s291 = sand.u32 %s47, 1
        %s292 = scalar_lea.sflag [#allocation5], %s291
        %s293 = sand.u32 %s47, 1
        %s294 = smul.addr %s293, 16
        %s295 = scalar_lea.vmem [#allocation4], %s294
        // Predicated region
        $region45: #{tpu_custom_call.1} parent=43 // pred_check
          %p296 = pneg %p60
        $region46: #{tpu_custom_call.1} parent=43 // pred_check_branch
          %298 = sbr.rel (%p296) target = $region48
        $region47: #{tpu_custom_call.1} parent=43 // pred_region
          %299 = dma.done %s292, 256
        $region48: #{tpu_custom_call.1} parent=43 // pred_fallthru
          _
        // Predicated region
        $region49: #{tpu_custom_call.1} parent=43 // pred_check
          %p300 = pneg %p86
        $region50: #{tpu_custom_call.1} parent=43 // pred_check_branch
          %302 = sbr.rel (%p300) target = $region52
        $region51: #{tpu_custom_call.1} parent=43 // pred_region
          %303 = dma.done [#allocation8], 64
        $region52: #{tpu_custom_call.1} parent=43 // pred_fallthru
          _
        // Predicated region
        $region53: #{tpu_custom_call.1} parent=43 // pred_check
          %p304 = pneg %p107
        $region54: #{tpu_custom_call.1} parent=43 // pred_check_branch
          %306 = sbr.rel (%p304) target = $region56
        $region55: #{tpu_custom_call.1} parent=43 // pred_region
          %307 = dma.done [#allocation8], 384
        $region56: #{tpu_custom_call.1} parent=43 // pred_fallthru
          _
        // Predicated region
        $region57: #{tpu_custom_call.1} parent=43 // pred_check
          %p308 = pneg %p149
        $region58: #{tpu_custom_call.1} parent=43 // pred_check_branch
          %310 = sbr.rel (%p308) target = $region60
        $region59: #{tpu_custom_call.1} parent=43 // pred_region
          %311 = dma.done [#allocation11], 3072
        $region60: #{tpu_custom_call.1} parent=43 // pred_fallthru
          _
        %s312 = sand.u32 %s47, 1
        %s313 = scalar_lea.sflag [#allocation5], %s312
        %s314 = sand.u32 %s47, 1
        %s315 = smul.addr %s314, 16
        %s316 = scalar_lea.vmem [#allocation4], %s315
        %p317 = pneg %p60
        %p318 = pneg %p57
        %p319 = pneg %p86
        %p320 = pneg %p83
        %p321 = pneg %p107
        %p322 = pneg %p104
        %p323 = pneg %p128
        %p324 = pneg %p125
        %p325 = pneg %p149
        %p326 = pneg %p146
        %p327 = pneg %p170
        %p328 = pneg %p167
        %p329 = pneg %p198
        %p330 = pneg %p195
        %s331 = sand.u32 %s185, 1
        %s332 = scalar_lea.sflag [#allocation6], %s331
        %s333 = sand.u32 %s185, 1
        %s334 = smul.addr %s333, 32
        %s335 = scalar_lea.vmem [#allocation12], %s334
        %s336 = smul.u32 8, %s30
        %s337 = smul.u32 4, %s29
        %p339 = scmp.eq.s32.totalorder %s30, 0
        // Predicated region
        $region61: #{tpu_custom_call.1} parent=43 // pred_check
          %p340 = pneg %p339
        $region62: #{tpu_custom_call.1} parent=43 // pred_check_branch
          %342 = sbr.rel (%p340) target = $region64
        $region63: #{tpu_custom_call.1} parent=43 // pred_region
          %v343 = vld [vmem:[#allocation7] sm:$0xf]
          %344 = vst [vmem:[#allocation2] sm:$0xf] %v343
        $region64: #{tpu_custom_call.1} parent=43 // pred_fallthru
          _
        %v345 = vld [vmem:[#allocation9] sm:$0xff]
        %v346 = vld [vmem:[#allocation9 + $0x8] sm:$0xf]
        %v347 = vld [vmem:[#allocation9 + $0xc] sm:$0xff]
        %v348 = vld [vmem:[#allocation9 + $0x14] sm:$0xf]
        %v349 = vld [vmem:[#allocation10] sm:$0xff]
        %v350 = vld [vmem:[#allocation10 + $0x8] sm:$0xf]
        %v351 = vld [vmem:[#allocation10 + $0xc] sm:$0xff]
        %v352 = vld [vmem:[#allocation10 + $0x14] sm:$0xf]
        %v353 = vld [vmem:[#allocation10 + $0x18] sm:$0xff]
        %v354 = vld [vmem:[#allocation10 + $0x20] sm:$0xf]
        %v355 = vld [vmem:[#allocation10 + $0x24] sm:$0xff]
        %v356 = vld [vmem:[#allocation10 + $0x2c] sm:$0xf]
        %v357 = vld [vmem:[#allocation10 + $0x30] sm:$0xff]
        %v358 = vld [vmem:[#allocation10 + $0x38] sm:$0xf]
        %v359 = vld [vmem:[#allocation10 + $0x3c] sm:$0xff]
        %v360 = vld [vmem:[#allocation10 + $0x44] sm:$0xf]
        %v361 = vld [vmem:[#allocation10 + $0x48] sm:$0xff]
        %v362 = vld [vmem:[#allocation10 + $0x50] sm:$0xf]
        %v363 = vld [vmem:[#allocation10 + $0x54] sm:$0xff]
        %v364 = vld [vmem:[#allocation10 + $0x5c] sm:$0xf]
        %v365 = vld [vmem:[#allocation10 + $0x60] sm:$0xff]
        %v366 = vld [vmem:[#allocation10 + $0x68] sm:$0xf]
        %v367 = vld [vmem:[#allocation10 + $0x6c] sm:$0xff]
        %v368 = vld [vmem:[#allocation10 + $0x74] sm:$0xf]
        %v369 = vld [vmem:[#allocation10 + $0x78] sm:$0xff]
        %v370 = vld [vmem:[#allocation10 + $0x80] sm:$0xf]
        %v371 = vld [vmem:[#allocation10 + $0x84] sm:$0xff]
        %v372 = vld [vmem:[#allocation10 + $0x8c] sm:$0xf]
        %v373 = vld [vmem:[#allocation10 + $0x90] sm:$0xff]
        %v374 = vld [vmem:[#allocation10 + $0x98] sm:$0xf]
        %v375 = vld [vmem:[#allocation10 + $0x9c] sm:$0xff]
        %v376 = vld [vmem:[#allocation10 + $0xa4] sm:$0xf]
        %v377 = vld [vmem:[#allocation10 + $0xa8] sm:$0xff]
        %v378 = vld [vmem:[#allocation10 + $0xb0] sm:$0xf]
        %v379 = vld [vmem:[#allocation10 + $0xb4] sm:$0xff]
        %v380 = vld [vmem:[#allocation10 + $0xbc] sm:$0xf]
        %v381 = vld [vmem:[%s3] sm:$0x7]
        %v383 = vlaneseq
        %v384 = vshrl.u32 %v383, 7
        %v385 = vsub.s32 0, %v384
        %v386 = vrot.slane %v381, %v385
        %v387 = vlaneseq
        %v388 = vshrl.u32 %v387, 7
        %v389 = vsub.s32 1, %v388
        %v390 = vrot.slane %v381, %v389
        %v391 = vlaneseq
        %v392 = vshrl.u32 %v391, 7
        %v393 = vsub.s32 2, %v392
        %v394 = vrot.slane %v381, %v393
        %v398 = vld [vmem:[%s5] sm:$0x1]
        %v400 = vlaneseq
        %v401 = vshrl.u32 %v400, 7
        %v402 = vsub.s32 0, %v401
        %v403 = vrot.slane %v398, %v402
        %v405 = vld [vmem:[#allocation2] sm:$0xf]
        %v406 = vld [vmem:[%s295] sm:$0x3]
        %v411 = vunpack.c.l.b16 %v345
        %v412 = vunpack.c.h.b16 %v345
        %v413 = vunpack.c.l.b16 %v346
        %v414 = vunpack.c.l.b16 %v347
        %v415 = vunpack.c.h.b16 %v347
        %v416 = vunpack.c.l.b16 %v348
        %v417 = vpack.c.b16 %v414, %v411
        %v418 = vpack.c.b16 %v415, %v412
        %v419 = vpack.c.b16 %v416, %v413
        %vm423 = vcmask 130048
        %v425 = vsel %vm423, %v406, 0
        %427 = vmatprep.subr.bf16.mxu0 %v418
        %428 = vmatpush1.bf16.msra.mxu0 %v417
        %429 = vmatprep.subr.bf16.mxu0 0
        %430 = vmatpush1.bf16.msra.mxu0 0
        %431 = vmatprep.subr.bf16.mxu0 0
        %432 = vmatpush1.bf16.msra.mxu0 0
        %433 = vmatprep.subr.bf16.mxu0 0
        %434 = vmatpush1.bf16.msra.mxu0 0
        %435 = vmatprep.subr.bf16.mxu0 0
        %436 = vmatpush1.bf16.msra.mxu0 0
        %437 = vmatprep.subr.bf16.mxu0 0
        %438 = vmatpush1.bf16.msra.mxu0 0
        %439 = vmatprep.subr.bf16.mxu0 0
        %440 = vmatpush1.bf16.msra.mxu0 0
        %441 = vmatprep.subr.bf16.mxu0 0
        %442 = vmatpush1.bf16.msra.mxu0 0
        %443 = vmatprep.subr.bf16.mxu0 0
        %444 = vmatpush1.bf16.msra.mxu0 0
        %445 = vmatprep.subr.bf16.mxu0 0
        %446 = vmatpush1.bf16.msra.mxu0 0
        %447 = vmatprep.subr.bf16.mxu0 0
        %448 = vmatpush1.bf16.msra.mxu0 0
        %449 = vmatprep.subr.bf16.mxu0 0
        %450 = vmatpush1.bf16.msra.mxu0 0
        %451 = vmatprep.subr.bf16.mxu0 0
        %452 = vmatpush1.bf16.msra.mxu0 0
        %453 = vmatprep.subr.bf16.mxu0 0
        %454 = vmatpush1.bf16.msra.mxu0 0
        %455 = vmatprep.subr.bf16.mxu0 0
        %456 = vmatpush1.bf16.msra.mxu0 0
        %457 = vmatprep.subr.bf16.mxu0 0
        %458 = vmatpush1.bf16.msra.mxu0 0
        %459 = vmatprep.mubr.bf16.mxu0 0
        %460 = vmatmul.mubr.bf16.gmra.mrb[0].mxu0 %v425
        %v461 = vpop.f32.mrb[0].mxu0
        %v462 = vadd.f32 %v386, %v461
        %v463 = vpop.f32.mrb[0].mxu0
        %v464 = vadd.f32 %v390, %v463
        %v465 = vpop.f32.mrb[0].mxu0
        %v466 = vpop.f32.mrb[0].mxu0
        %467 = vdwg.mxu0
        %468 = vmatprep.subr.bf16.mxu0 0
        %469 = vmatpush1.bf16.msra.mxu0 %v419
        %470 = vmatprep.subr.bf16.mxu0 0
        %471 = vmatpush1.bf16.msra.mxu0 0
        %472 = vmatprep.subr.bf16.mxu0 0
        %473 = vmatpush1.bf16.msra.mxu0 0
        %474 = vmatprep.subr.bf16.mxu0 0
        %475 = vmatpush1.bf16.msra.mxu0 0
        %476 = vmatprep.subr.bf16.mxu0 0
        %477 = vmatpush1.bf16.msra.mxu0 0
        %478 = vmatprep.subr.bf16.mxu0 0
        %479 = vmatpush1.bf16.msra.mxu0 0
        %480 = vmatprep.subr.bf16.mxu0 0
        %481 = vmatpush1.bf16.msra.mxu0 0
        %482 = vmatprep.subr.bf16.mxu0 0
        %483 = vmatpush1.bf16.msra.mxu0 0
        %484 = vmatprep.subr.bf16.mxu0 0
        %485 = vmatpush1.bf16.msra.mxu0 0
        %486 = vmatprep.subr.bf16.mxu0 0
        %487 = vmatpush1.bf16.msra.mxu0 0
        %488 = vmatprep.subr.bf16.mxu0 0
        %489 = vmatpush1.bf16.msra.mxu0 0
        %490 = vmatprep.subr.bf16.mxu0 0
        %491 = vmatpush1.bf16.msra.mxu0 0
        %492 = vmatprep.subr.bf16.mxu0 0
        %493 = vmatpush1.bf16.msra.mxu0 0
        %494 = vmatprep.subr.bf16.mxu0 0
        %495 = vmatpush1.bf16.msra.mxu0 0
        %496 = vmatprep.subr.bf16.mxu0 0
        %497 = vmatpush1.bf16.msra.mxu0 0
        %498 = vmatprep.subr.bf16.mxu0 0
        %499 = vmatpush1.bf16.msra.mxu0 0
        %500 = vmatprep.mubr.bf16.mxu0 0
        %501 = vmatmul.mubr.bf16.gmra.mrb[0].mxu0 %v425
        %v502 = vpop.f32.mrb[0].mxu0
        %v503 = vadd.f32 %v394, %v502
        %v504 = vpop.f32.mrb[0].mxu0
        %v505 = vpop.f32.mrb[0].mxu0
        %v506 = vpop.f32.mrb[0].mxu0
        %507 = vdwg.mxu0
        %v508 = vpack.c.bf16 %v405, %v405
        %v541 = vunpack.c.l.b16 %v349
        %v542 = vunpack.c.h.b16 %v349
        %v543 = vunpack.c.l.b16 %v350
        %v544 = vunpack.c.l.b16 %v351
        %v545 = vunpack.c.h.b16 %v351
        %v546 = vunpack.c.l.b16 %v352
        %v547 = vunpack.c.l.b16 %v353
        %v548 = vunpack.c.h.b16 %v353
        %v549 = vunpack.c.l.b16 %v354
        %v550 = vunpack.c.l.b16 %v355
        %v551 = vunpack.c.h.b16 %v355
        %v552 = vunpack.c.l.b16 %v356
        %v553 = vunpack.c.l.b16 %v357
        %v554 = vunpack.c.h.b16 %v357
        %v555 = vunpack.c.l.b16 %v358
        %v556 = vunpack.c.l.b16 %v359
        %v557 = vunpack.c.h.b16 %v359
        %v558 = vunpack.c.l.b16 %v360
        %v559 = vunpack.c.l.b16 %v361
        %v560 = vunpack.c.h.b16 %v361
        %v561 = vunpack.c.l.b16 %v362
        %v562 = vunpack.c.l.b16 %v363
        %v563 = vunpack.c.h.b16 %v363
        %v564 = vunpack.c.l.b16 %v364
        %v565 = vunpack.c.l.b16 %v365
        %v566 = vunpack.c.h.b16 %v365
        %v567 = vunpack.c.l.b16 %v366
        %v568 = vunpack.c.l.b16 %v367
        %v569 = vunpack.c.h.b16 %v367
        %v570 = vunpack.c.l.b16 %v368
        %v571 = vunpack.c.l.b16 %v369
        %v572 = vunpack.c.h.b16 %v369
        %v573 = vunpack.c.l.b16 %v370
        %v574 = vunpack.c.l.b16 %v371
        %v575 = vunpack.c.h.b16 %v371
        %v576 = vunpack.c.l.b16 %v372
        %v577 = vunpack.c.l.b16 %v373
        %v578 = vunpack.c.h.b16 %v373
        %v579 = vunpack.c.l.b16 %v374
        %v580 = vunpack.c.l.b16 %v375
        %v581 = vunpack.c.h.b16 %v375
        %v582 = vunpack.c.l.b16 %v376
        %v583 = vunpack.c.l.b16 %v377
        %v584 = vunpack.c.h.b16 %v377
        %v585 = vunpack.c.l.b16 %v378
        %v586 = vunpack.c.l.b16 %v379
        %v587 = vunpack.c.h.b16 %v379
        %v588 = vunpack.c.l.b16 %v380
        %v589 = vpack.c.b16 %v544, %v541
        %v590 = vpack.c.b16 %v545, %v542
        %v591 = vpack.c.b16 %v546, %v543
        %v592 = vpack.c.b16 %v550, %v547
        %v593 = vpack.c.b16 %v551, %v548
        %v594 = vpack.c.b16 %v552, %v549
        %v595 = vpack.c.b16 %v556, %v553
        %v596 = vpack.c.b16 %v557, %v554
        %v597 = vpack.c.b16 %v558, %v555
        %v598 = vpack.c.b16 %v562, %v559
        %v599 = vpack.c.b16 %v563, %v560
        %v600 = vpack.c.b16 %v564, %v561
        %v601 = vpack.c.b16 %v568, %v565
        %v602 = vpack.c.b16 %v569, %v566
        %v603 = vpack.c.b16 %v570, %v567
        %v604 = vpack.c.b16 %v574, %v571
        %v605 = vpack.c.b16 %v575, %v572
        %v606 = vpack.c.b16 %v576, %v573
        %v607 = vpack.c.b16 %v580, %v577
        %v608 = vpack.c.b16 %v581, %v578
        %v609 = vpack.c.b16 %v582, %v579
        %v610 = vpack.c.b16 %v586, %v583
        %v611 = vpack.c.b16 %v587, %v584
        %v612 = vpack.c.b16 %v588, %v585
        %637 = vmatprep.subr.bf16.mxu0 %v590
        %638 = vmatpush1.bf16.msra.mxu0 %v589
        %639 = vmatprep.subr.bf16.mxu0 %v593
        %640 = vmatpush1.bf16.msra.mxu0 %v592
        %641 = vmatprep.subr.bf16.mxu0 %v596
        %642 = vmatpush1.bf16.msra.mxu0 %v595
        %643 = vmatprep.subr.bf16.mxu0 %v599
        %644 = vmatpush1.bf16.msra.mxu0 %v598
        %645 = vmatprep.subr.bf16.mxu0 %v602
        %646 = vmatpush1.bf16.msra.mxu0 %v601
        %647 = vmatprep.subr.bf16.mxu0 %v605
        %648 = vmatpush1.bf16.msra.mxu0 %v604
        %649 = vmatprep.subr.bf16.mxu0 %v608
        %650 = vmatpush1.bf16.msra.mxu0 %v607
        %651 = vmatprep.subr.bf16.mxu0 %v611
        %652 = vmatpush1.bf16.msra.mxu0 %v610
        %653 = vmatprep.subr.bf16.mxu0 0
        %654 = vmatpush1.bf16.msra.mxu0 0
        %655 = vmatprep.subr.bf16.mxu0 0
        %656 = vmatpush1.bf16.msra.mxu0 0
        %657 = vmatprep.subr.bf16.mxu0 0
        %658 = vmatpush1.bf16.msra.mxu0 0
        %659 = vmatprep.subr.bf16.mxu0 0
        %660 = vmatpush1.bf16.msra.mxu0 0
        %661 = vmatprep.subr.bf16.mxu0 0
        %662 = vmatpush1.bf16.msra.mxu0 0
        %663 = vmatprep.subr.bf16.mxu0 0
        %664 = vmatpush1.bf16.msra.mxu0 0
        %665 = vmatprep.subr.bf16.mxu0 0
        %666 = vmatpush1.bf16.msra.mxu0 0
        %667 = vmatprep.subr.bf16.mxu0 0
        %668 = vmatpush1.bf16.msra.mxu0 0
        %669 = vmatprep.mubr.bf16.mxu0 0
        %670 = vmatmul.mubr.bf16.gmra.mrb[0].mxu0 %v508
        %v671 = vpop.f32.mrb[0].mxu0
        %v672 = vadd.f32 0.0, %v671
        %v673 = vpop.f32.mrb[0].mxu0
        %v674 = vadd.f32 0.0, %v673
        %v675 = vpop.f32.mrb[0].mxu0
        %v676 = vpop.f32.mrb[0].mxu0
        %677 = vdwg.mxu0
        %678 = vmatprep.subr.bf16.mxu0 0
        %679 = vmatpush1.bf16.msra.mxu0 %v591
        %680 = vmatprep.subr.bf16.mxu0 0
        %681 = vmatpush1.bf16.msra.mxu0 %v594
        %682 = vmatprep.subr.bf16.mxu0 0
        %683 = vmatpush1.bf16.msra.mxu0 %v597
        %684 = vmatprep.subr.bf16.mxu0 0
        %685 = vmatpush1.bf16.msra.mxu0 %v600
        %686 = vmatprep.subr.bf16.mxu0 0
        %687 = vmatpush1.bf16.msra.mxu0 %v603
        %688 = vmatprep.subr.bf16.mxu0 0
        %689 = vmatpush1.bf16.msra.mxu0 %v606
        %690 = vmatprep.subr.bf16.mxu0 0
        %691 = vmatpush1.bf16.msra.mxu0 %v609
        %692 = vmatprep.subr.bf16.mxu0 0
        %693 = vmatpush1.bf16.msra.mxu0 %v612
        %694 = vmatprep.subr.bf16.mxu0 0
        %695 = vmatpush1.bf16.msra.mxu0 0
        %696 = vmatprep.subr.bf16.mxu0 0
        %697 = vmatpush1.bf16.msra.mxu0 0
        %698 = vmatprep.subr.bf16.mxu0 0
        %699 = vmatpush1.bf16.msra.mxu0 0
        %700 = vmatprep.subr.bf16.mxu0 0
        %701 = vmatpush1.bf16.msra.mxu0 0
        %702 = vmatprep.subr.bf16.mxu0 0
        %703 = vmatpush1.bf16.msra.mxu0 0
        %704 = vmatprep.subr.bf16.mxu0 0
        %705 = vmatpush1.bf16.msra.mxu0 0
        %706 = vmatprep.subr.bf16.mxu0 0
        %707 = vmatpush1.bf16.msra.mxu0 0
        %708 = vmatprep.subr.bf16.mxu0 0
        %709 = vmatpush1.bf16.msra.mxu0 0
        %710 = vmatprep.mubr.bf16.mxu0 0
        %711 = vmatmul.mubr.bf16.gmra.mrb[0].mxu0 %v508
        %v712 = vpop.f32.mrb[0].mxu0
        %v713 = vadd.f32 0.0, %v712
        %v714 = vpop.f32.mrb[0].mxu0
        %v715 = vpop.f32.mrb[0].mxu0
        %v716 = vpop.f32.mrb[0].mxu0
        %717 = vdwg.mxu0
        %v718 = vadd.f32 %v462, %v672
        %v719 = vadd.f32 %v464, %v674
        %v720 = vmul.f32 %v718, 0.5
        %v721 = vmul.f32 %v719, 0.5
        %v722 = vtanh.pop %v720
        %v723 = vtanh.pop %v721
        %v724 = vmul.f32 %v722, 0.5
        %v725 = vmul.f32 %v723, 0.5
        %v726 = vadd.f32 %v724, 0.5
        %v727 = vadd.f32 %v725, 0.5
        %v728 = vadd.f32 %v713, %v403
        %v729 = vmul.f32 %v726, %v728
        %v730 = vadd.f32 %v503, %v729
        %v731 = vsub.f32 1.0, %v727
        %v732 = vtanh.pop %v730
        %v733 = vsub.f32 %v732, %v405
        %v734 = vmul.f32 %v731, %v733
        %v735 = vadd.f32 %v405, %v734
        %736 = vst [vmem:[#allocation3] sm:$0xf] %v735
        %s737 = scalar_lea.vmem %s295, 2 [#allocation4]
        %v738 = vld [vmem:[%s737] sm:$0x3]
        %v740 = vsel %vm423, %v738, 0
        %742 = vmatprep.subr.bf16.mxu0 %v418
        %743 = vmatpush1.bf16.msra.mxu0 %v417
        %744 = vmatprep.subr.bf16.mxu0 0
        %745 = vmatpush1.bf16.msra.mxu0 0
        %746 = vmatprep.subr.bf16.mxu0 0
        %747 = vmatpush1.bf16.msra.mxu0 0
        %748 = vmatprep.subr.bf16.mxu0 0
        %749 = vmatpush1.bf16.msra.mxu0 0
        %750 = vmatprep.subr.bf16.mxu0 0
        %751 = vmatpush1.bf16.msra.mxu0 0
        %752 = vmatprep.subr.bf16.mxu0 0
        %753 = vmatpush1.bf16.msra.mxu0 0
        %754 = vmatprep.subr.bf16.mxu0 0
        %755 = vmatpush1.bf16.msra.mxu0 0
        %756 = vmatprep.subr.bf16.mxu0 0
        %757 = vmatpush1.bf16.msra.mxu0 0
        %758 = vmatprep.subr.bf16.mxu0 0
        %759 = vmatpush1.bf16.msra.mxu0 0
        %760 = vmatprep.subr.bf16.mxu0 0
        %761 = vmatpush1.bf16.msra.mxu0 0
        %762 = vmatprep.subr.bf16.mxu0 0
        %763 = vmatpush1.bf16.msra.mxu0 0
        %764 = vmatprep.subr.bf16.mxu0 0
        %765 = vmatpush1.bf16.msra.mxu0 0
        %766 = vmatprep.subr.bf16.mxu0 0
        %767 = vmatpush1.bf16.msra.mxu0 0
        %768 = vmatprep.subr.bf16.mxu0 0
        %769 = vmatpush1.bf16.msra.mxu0 0
        %770 = vmatprep.subr.bf16.mxu0 0
        %771 = vmatpush1.bf16.msra.mxu0 0
        %772 = vmatprep.subr.bf16.mxu0 0
        %773 = vmatpush1.bf16.msra.mxu0 0
        %774 = vmatprep.mubr.bf16.mxu0 0
        %775 = vmatmul.mubr.bf16.gmra.mrb[0].mxu0 %v740
        %v776 = vpop.f32.mrb[0].mxu0
        %v777 = vadd.f32 %v386, %v776
        %v778 = vpop.f32.mrb[0].mxu0
        %v779 = vadd.f32 %v390, %v778
        %v780 = vpop.f32.mrb[0].mxu0
        %v781 = vpop.f32.mrb[0].mxu0
        %782 = vdwg.mxu0
        %783 = vmatprep.subr.bf16.mxu0 0
        %784 = vmatpush1.bf16.msra.mxu0 %v419
        %785 = vmatprep.subr.bf16.mxu0 0
        %786 = vmatpush1.bf16.msra.mxu0 0
        %787 = vmatprep.subr.bf16.mxu0 0
        %788 = vmatpush1.bf16.msra.mxu0 0
        %789 = vmatprep.subr.bf16.mxu0 0
        %790 = vmatpush1.bf16.msra.mxu0 0
        %791 = vmatprep.subr.bf16.mxu0 0
        %792 = vmatpush1.bf16.msra.mxu0 0
        %793 = vmatprep.subr.bf16.mxu0 0
        %794 = vmatpush1.bf16.msra.mxu0 0
        %795 = vmatprep.subr.bf16.mxu0 0
        %796 = vmatpush1.bf16.msra.mxu0 0
        %797 = vmatprep.subr.bf16.mxu0 0
        %798 = vmatpush1.bf16.msra.mxu0 0
        %799 = vmatprep.subr.bf16.mxu0 0
        %800 = vmatpush1.bf16.msra.mxu0 0
        %801 = vmatprep.subr.bf16.mxu0 0
        %802 = vmatpush1.bf16.msra.mxu0 0
        %803 = vmatprep.subr.bf16.mxu0 0
        %804 = vmatpush1.bf16.msra.mxu0 0
        %805 = vmatprep.subr.bf16.mxu0 0
        %806 = vmatpush1.bf16.msra.mxu0 0
        %807 = vmatprep.subr.bf16.mxu0 0
        %808 = vmatpush1.bf16.msra.mxu0 0
        %809 = vmatprep.subr.bf16.mxu0 0
        %810 = vmatpush1.bf16.msra.mxu0 0
        %811 = vmatprep.subr.bf16.mxu0 0
        %812 = vmatpush1.bf16.msra.mxu0 0
        %813 = vmatprep.subr.bf16.mxu0 0
        %814 = vmatpush1.bf16.msra.mxu0 0
        %815 = vmatprep.mubr.bf16.mxu0 0
        %816 = vmatmul.mubr.bf16.gmra.mrb[0].mxu0 %v740
        %v817 = vpop.f32.mrb[0].mxu0
        %v818 = vadd.f32 %v394, %v817
        %v819 = vpop.f32.mrb[0].mxu0
        %v820 = vpop.f32.mrb[0].mxu0
        %v821 = vpop.f32.mrb[0].mxu0
        %822 = vdwg.mxu0
        %v823 = vpack.c.bf16 %v735, %v735
        %824 = vmatprep.subr.bf16.mxu0 %v590
        %825 = vmatpush1.bf16.msra.mxu0 %v589
        %826 = vmatprep.subr.bf16.mxu0 %v593
        %827 = vmatpush1.bf16.msra.mxu0 %v592
        %828 = vmatprep.subr.bf16.mxu0 %v596
        %829 = vmatpush1.bf16.msra.mxu0 %v595
        %830 = vmatprep.subr.bf16.mxu0 %v599
        %831 = vmatpush1.bf16.msra.mxu0 %v598
        %832 = vmatprep.subr.bf16.mxu0 %v602
        %833 = vmatpush1.bf16.msra.mxu0 %v601
        %834 = vmatprep.subr.bf16.mxu0 %v605
        %835 = vmatpush1.bf16.msra.mxu0 %v604
        %836 = vmatprep.subr.bf16.mxu0 %v608
        %837 = vmatpush1.bf16.msra.mxu0 %v607
        %838 = vmatprep.subr.bf16.mxu0 %v611
        %839 = vmatpush1.bf16.msra.mxu0 %v610
        %840 = vmatprep.subr.bf16.mxu0 0
        %841 = vmatpush1.bf16.msra.mxu0 0
        %842 = vmatprep.subr.bf16.mxu0 0
        %843 = vmatpush1.bf16.msra.mxu0 0
        %844 = vmatprep.subr.bf16.mxu0 0
        %845 = vmatpush1.bf16.msra.mxu0 0
        %846 = vmatprep.subr.bf16.mxu0 0
        %847 = vmatpush1.bf16.msra.mxu0 0
        %848 = vmatprep.subr.bf16.mxu0 0
        %849 = vmatpush1.bf16.msra.mxu0 0
        %850 = vmatprep.subr.bf16.mxu0 0
        %851 = vmatpush1.bf16.msra.mxu0 0
        %852 = vmatprep.subr.bf16.mxu0 0
        %853 = vmatpush1.bf16.msra.mxu0 0
        %854 = vmatprep.subr.bf16.mxu0 0
        %855 = vmatpush1.bf16.msra.mxu0 0
        %856 = vmatprep.mubr.bf16.mxu0 0
        %857 = vmatmul.mubr.bf16.gmra.mrb[0].mxu0 %v823
        %v858 = vpop.f32.mrb[0].mxu0
        %v859 = vadd.f32 0.0, %v858
        %v860 = vpop.f32.mrb[0].mxu0
        %v861 = vadd.f32 0.0, %v860
        %v862 = vpop.f32.mrb[0].mxu0
        %v863 = vpop.f32.mrb[0].mxu0
        %864 = vdwg.mxu0
        %865 = vmatprep.subr.bf16.mxu0 0
        %866 = vmatpush1.bf16.msra.mxu0 %v591
        %867 = vmatprep.subr.bf16.mxu0 0
        %868 = vmatpush1.bf16.msra.mxu0 %v594
        %869 = vmatprep.subr.bf16.mxu0 0
        %870 = vmatpush1.bf16.msra.mxu0 %v597
        %871 = vmatprep.subr.bf16.mxu0 0
        %872 = vmatpush1.bf16.msra.mxu0 %v600
        %873 = vmatprep.subr.bf16.mxu0 0
        %874 = vmatpush1.bf16.msra.mxu0 %v603
        %875 = vmatprep.subr.bf16.mxu0 0
        %876 = vmatpush1.bf16.msra.mxu0 %v606
        %877 = vmatprep.subr.bf16.mxu0 0
        %878 = vmatpush1.bf16.msra.mxu0 %v609
        %879 = vmatprep.subr.bf16.mxu0 0
        %880 = vmatpush1.bf16.msra.mxu0 %v612
        %881 = vmatprep.subr.bf16.mxu0 0
        %882 = vmatpush1.bf16.msra.mxu0 0
        %883 = vmatprep.subr.bf16.mxu0 0
        %884 = vmatpush1.bf16.msra.mxu0 0
        %885 = vmatprep.subr.bf16.mxu0 0
        %886 = vmatpush1.bf16.msra.mxu0 0
        %887 = vmatprep.subr.bf16.mxu0 0
        %888 = vmatpush1.bf16.msra.mxu0 0
        %889 = vmatprep.subr.bf16.mxu0 0
        %890 = vmatpush1.bf16.msra.mxu0 0
        %891 = vmatprep.subr.bf16.mxu0 0
        %892 = vmatpush1.bf16.msra.mxu0 0
        %893 = vmatprep.subr.bf16.mxu0 0
        %894 = vmatpush1.bf16.msra.mxu0 0
        %895 = vmatprep.subr.bf16.mxu0 0
        %896 = vmatpush1.bf16.msra.mxu0 0
        %897 = vmatprep.mubr.bf16.mxu0 0
        %898 = vmatmul.mubr.bf16.gmra.mrb[0].mxu0 %v823
        %v899 = vpop.f32.mrb[0].mxu0
        %v900 = vadd.f32 0.0, %v899
        %v901 = vpop.f32.mrb[0].mxu0
        %v902 = vpop.f32.mrb[0].mxu0
        %v903 = vpop.f32.mrb[0].mxu0
        %904 = vdwg.mxu0
        %v905 = vadd.f32 %v777, %v859
        %v906 = vadd.f32 %v779, %v861
        %v907 = vmul.f32 %v905, 0.5
        %v908 = vmul.f32 %v906, 0.5
        %v909 = vtanh.pop %v907
        %v910 = vtanh.pop %v908
        %v911 = vmul.f32 %v909, 0.5
        %v912 = vmul.f32 %v910, 0.5
        %v913 = vadd.f32 %v911, 0.5
        %v914 = vadd.f32 %v912, 0.5
        %v915 = vadd.f32 %v900, %v403
        %v916 = vmul.f32 %v913, %v915
        %v917 = vadd.f32 %v818, %v916
        %v918 = vsub.f32 1.0, %v914
        %v919 = vtanh.pop %v917
        %v920 = vsub.f32 %v919, %v735
        %v921 = vmul.f32 %v918, %v920
        %v922 = vadd.f32 %v735, %v921
        %s923 = scalar_lea.vmem [#allocation3], 4
        %924 = vst [vmem:[%s923] sm:$0xf] %v922
        %s925 = scalar_lea.vmem %s295, 4 [#allocation4]
        %v926 = vld [vmem:[%s925] sm:$0x3]
        %v928 = vsel %vm423, %v926, 0
        %930 = vmatprep.subr.bf16.mxu0 %v418
        %931 = vmatpush1.bf16.msra.mxu0 %v417
        %932 = vmatprep.subr.bf16.mxu0 0
        %933 = vmatpush1.bf16.msra.mxu0 0
        %934 = vmatprep.subr.bf16.mxu0 0
        %935 = vmatpush1.bf16.msra.mxu0 0
        %936 = vmatprep.subr.bf16.mxu0 0
        %937 = vmatpush1.bf16.msra.mxu0 0
        %938 = vmatprep.subr.bf16.mxu0 0
        %939 = vmatpush1.bf16.msra.mxu0 0
        %940 = vmatprep.subr.bf16.mxu0 0
        %941 = vmatpush1.bf16.msra.mxu0 0
        %942 = vmatprep.subr.bf16.mxu0 0
        %943 = vmatpush1.bf16.msra.mxu0 0
        %944 = vmatprep.subr.bf16.mxu0 0
        %945 = vmatpush1.bf16.msra.mxu0 0
        %946 = vmatprep.subr.bf16.mxu0 0
        %947 = vmatpush1.bf16.msra.mxu0 0
        %948 = vmatprep.subr.bf16.mxu0 0
        %949 = vmatpush1.bf16.msra.mxu0 0
        %950 = vmatprep.subr.bf16.mxu0 0
        %951 = vmatpush1.bf16.msra.mxu0 0
        %952 = vmatprep.subr.bf16.mxu0 0
        %953 = vmatpush1.bf16.msra.mxu0 0
        %954 = vmatprep.subr.bf16.mxu0 0
        %955 = vmatpush1.bf16.msra.mxu0 0
        %956 = vmatprep.subr.bf16.mxu0 0
        %957 = vmatpush1.bf16.msra.mxu0 0
        %958 = vmatprep.subr.bf16.mxu0 0
        %959 = vmatpush1.bf16.msra.mxu0 0
        %960 = vmatprep.subr.bf16.mxu0 0
        %961 = vmatpush1.bf16.msra.mxu0 0
        %962 = vmatprep.mubr.bf16.mxu0 0
        %963 = vmatmul.mubr.bf16.gmra.mrb[0].mxu0 %v928
        %v964 = vpop.f32.mrb[0].mxu0
        %v965 = vadd.f32 %v386, %v964
        %v966 = vpop.f32.mrb[0].mxu0
        %v967 = vadd.f32 %v390, %v966
        %v968 = vpop.f32.mrb[0].mxu0
        %v969 = vpop.f32.mrb[0].mxu0
        %970 = vdwg.mxu0
        %971 = vmatprep.subr.bf16.mxu0 0
        %972 = vmatpush1.bf16.msra.mxu0 %v419
        %973 = vmatprep.subr.bf16.mxu0 0
        %974 = vmatpush1.bf16.msra.mxu0 0
        %975 = vmatprep.subr.bf16.mxu0 0
        %976 = vmatpush1.bf16.msra.mxu0 0
        %977 = vmatprep.subr.bf16.mxu0 0
        %978 = vmatpush1.bf16.msra.mxu0 0
        %979 = vmatprep.subr.bf16.mxu0 0
        %980 = vmatpush1.bf16.msra.mxu0 0
        %981 = vmatprep.subr.bf16.mxu0 0
        %982 = vmatpush1.bf16.msra.mxu0 0
        %983 = vmatprep.subr.bf16.mxu0 0
        %984 = vmatpush1.bf16.msra.mxu0 0
        %985 = vmatprep.subr.bf16.mxu0 0
        %986 = vmatpush1.bf16.msra.mxu0 0
        %987 = vmatprep.subr.bf16.mxu0 0
        %988 = vmatpush1.bf16.msra.mxu0 0
        %989 = vmatprep.subr.bf16.mxu0 0
        %990 = vmatpush1.bf16.msra.mxu0 0
        %991 = vmatprep.subr.bf16.mxu0 0
        %992 = vmatpush1.bf16.msra.mxu0 0
        %993 = vmatprep.subr.bf16.mxu0 0
        %994 = vmatpush1.bf16.msra.mxu0 0
        %995 = vmatprep.subr.bf16.mxu0 0
        %996 = vmatpush1.bf16.msra.mxu0 0
        %997 = vmatprep.subr.bf16.mxu0 0
        %998 = vmatpush1.bf16.msra.mxu0 0
        %999 = vmatprep.subr.bf16.mxu0 0
        %1000 = vmatpush1.bf16.msra.mxu0 0
        %1001 = vmatprep.subr.bf16.mxu0 0
        %1002 = vmatpush1.bf16.msra.mxu0 0
        %1003 = vmatprep.mubr.bf16.mxu0 0
        %1004 = vmatmul.mubr.bf16.gmra.mrb[0].mxu0 %v928
        %v1005 = vpop.f32.mrb[0].mxu0
        %v1006 = vadd.f32 %v394, %v1005
        %v1007 = vpop.f32.mrb[0].mxu0
        %v1008 = vpop.f32.mrb[0].mxu0
        %v1009 = vpop.f32.mrb[0].mxu0
        %1010 = vdwg.mxu0
        %v1011 = vpack.c.bf16 %v922, %v922
        %1012 = vmatprep.subr.bf16.mxu0 %v590
        %1013 = vmatpush1.bf16.msra.mxu0 %v589
        %1014 = vmatprep.subr.bf16.mxu0 %v593
        %1015 = vmatpush1.bf16.msra.mxu0 %v592
        %1016 = vmatprep.subr.bf16.mxu0 %v596
        %1017 = vmatpush1.bf16.msra.mxu0 %v595
        %1018 = vmatprep.subr.bf16.mxu0 %v599
        %1019 = vmatpush1.bf16.msra.mxu0 %v598
        %1020 = vmatprep.subr.bf16.mxu0 %v602
        %1021 = vmatpush1.bf16.msra.mxu0 %v601
        %1022 = vmatprep.subr.bf16.mxu0 %v605
        %1023 = vmatpush1.bf16.msra.mxu0 %v604
        %1024 = vmatprep.subr.bf16.mxu0 %v608
        %1025 = vmatpush1.bf16.msra.mxu0 %v607
        %1026 = vmatprep.subr.bf16.mxu0 %v611
        %1027 = vmatpush1.bf16.msra.mxu0 %v610
        %1028 = vmatprep.subr.bf16.mxu0 0
        %1029 = vmatpush1.bf16.msra.mxu0 0
        %1030 = vmatprep.subr.bf16.mxu0 0
        %1031 = vmatpush1.bf16.msra.mxu0 0
        %1032 = vmatprep.subr.bf16.mxu0 0
        %1033 = vmatpush1.bf16.msra.mxu0 0
        %1034 = vmatprep.subr.bf16.mxu0 0
        %1035 = vmatpush1.bf16.msra.mxu0 0
        %1036 = vmatprep.subr.bf16.mxu0 0
        %1037 = vmatpush1.bf16.msra.mxu0 0
        %1038 = vmatprep.subr.bf16.mxu0 0
        %1039 = vmatpush1.bf16.msra.mxu0 0
        %1040 = vmatprep.subr.bf16.mxu0 0
        %1041 = vmatpush1.bf16.msra.mxu0 0
        %1042 = vmatprep.subr.bf16.mxu0 0
        %1043 = vmatpush1.bf16.msra.mxu0 0
        %1044 = vmatprep.mubr.bf16.mxu0 0
        %1045 = vmatmul.mubr.bf16.gmra.mrb[0].mxu0 %v1011
        %v1046 = vpop.f32.mrb[0].mxu0
        %v1047 = vadd.f32 0.0, %v1046
        %v1048 = vpop.f32.mrb[0].mxu0
        %v1049 = vadd.f32 0.0, %v1048
        %v1050 = vpop.f32.mrb[0].mxu0
        %v1051 = vpop.f32.mrb[0].mxu0
        %1052 = vdwg.mxu0
        %1053 = vmatprep.subr.bf16.mxu0 0
        %1054 = vmatpush1.bf16.msra.mxu0 %v591
        %1055 = vmatprep.subr.bf16.mxu0 0
        %1056 = vmatpush1.bf16.msra.mxu0 %v594
        %1057 = vmatprep.subr.bf16.mxu0 0
        %1058 = vmatpush1.bf16.msra.mxu0 %v597
        %1059 = vmatprep.subr.bf16.mxu0 0
        %1060 = vmatpush1.bf16.msra.mxu0 %v600
        %1061 = vmatprep.subr.bf16.mxu0 0
        %1062 = vmatpush1.bf16.msra.mxu0 %v603
        %1063 = vmatprep.subr.bf16.mxu0 0
        %1064 = vmatpush1.bf16.msra.mxu0 %v606
        %1065 = vmatprep.subr.bf16.mxu0 0
        %1066 = vmatpush1.bf16.msra.mxu0 %v609
        %1067 = vmatprep.subr.bf16.mxu0 0
        %1068 = vmatpush1.bf16.msra.mxu0 %v612
        %1069 = vmatprep.subr.bf16.mxu0 0
        %1070 = vmatpush1.bf16.msra.mxu0 0
        %1071 = vmatprep.subr.bf16.mxu0 0
        %1072 = vmatpush1.bf16.msra.mxu0 0
        %1073 = vmatprep.subr.bf16.mxu0 0
        %1074 = vmatpush1.bf16.msra.mxu0 0
        %1075 = vmatprep.subr.bf16.mxu0 0
        %1076 = vmatpush1.bf16.msra.mxu0 0
        %1077 = vmatprep.subr.bf16.mxu0 0
        %1078 = vmatpush1.bf16.msra.mxu0 0
        %1079 = vmatprep.subr.bf16.mxu0 0
        %1080 = vmatpush1.bf16.msra.mxu0 0
        %1081 = vmatprep.subr.bf16.mxu0 0
        %1082 = vmatpush1.bf16.msra.mxu0 0
        %1083 = vmatprep.subr.bf16.mxu0 0
        %1084 = vmatpush1.bf16.msra.mxu0 0
        %1085 = vmatprep.mubr.bf16.mxu0 0
        %1086 = vmatmul.mubr.bf16.gmra.mrb[0].mxu0 %v1011
        %v1087 = vpop.f32.mrb[0].mxu0
        %v1088 = vadd.f32 0.0, %v1087
        %v1089 = vpop.f32.mrb[0].mxu0
        %v1090 = vpop.f32.mrb[0].mxu0
        %v1091 = vpop.f32.mrb[0].mxu0
        %1092 = vdwg.mxu0
        %v1093 = vadd.f32 %v965, %v1047
        %v1094 = vadd.f32 %v967, %v1049
        %v1095 = vmul.f32 %v1093, 0.5
        %v1096 = vmul.f32 %v1094, 0.5
        %v1097 = vtanh.pop %v1095
        %v1098 = vtanh.pop %v1096
        %v1099 = vmul.f32 %v1097, 0.5
        %v1100 = vmul.f32 %v1098, 0.5
        %v1101 = vadd.f32 %v1099, 0.5
        %v1102 = vadd.f32 %v1100, 0.5
        %v1103 = vadd.f32 %v1088, %v403
        %v1104 = vmul.f32 %v1101, %v1103
        %v1105 = vadd.f32 %v1006, %v1104
        %v1106 = vsub.f32 1.0, %v1102
        %v1107 = vtanh.pop %v1105
        %v1108 = vsub.f32 %v1107, %v922
        %v1109 = vmul.f32 %v1106, %v1108
        %v1110 = vadd.f32 %v922, %v1109
        %s1111 = scalar_lea.vmem [#allocation3], 8
        %1112 = vst [vmem:[%s1111] sm:$0xf] %v1110
        %s1113 = scalar_lea.vmem %s295, 6 [#allocation4]
        %v1114 = vld [vmem:[%s1113] sm:$0x3]
        %v1116 = vsel %vm423, %v1114, 0
        %1118 = vmatprep.subr.bf16.mxu0 %v418
        %1119 = vmatpush1.bf16.msra.mxu0 %v417
        %1120 = vmatprep.subr.bf16.mxu0 0
        %1121 = vmatpush1.bf16.msra.mxu0 0
        %1122 = vmatprep.subr.bf16.mxu0 0
        %1123 = vmatpush1.bf16.msra.mxu0 0
        %1124 = vmatprep.subr.bf16.mxu0 0
        %1125 = vmatpush1.bf16.msra.mxu0 0
        %1126 = vmatprep.subr.bf16.mxu0 0
        %1127 = vmatpush1.bf16.msra.mxu0 0
        %1128 = vmatprep.subr.bf16.mxu0 0
        %1129 = vmatpush1.bf16.msra.mxu0 0
        %1130 = vmatprep.subr.bf16.mxu0 0
        %1131 = vmatpush1.bf16.msra.mxu0 0
        %1132 = vmatprep.subr.bf16.mxu0 0
        %1133 = vmatpush1.bf16.msra.mxu0 0
        %1134 = vmatprep.subr.bf16.mxu0 0
        %1135 = vmatpush1.bf16.msra.mxu0 0
        %1136 = vmatprep.subr.bf16.mxu0 0
        %1137 = vmatpush1.bf16.msra.mxu0 0
        %1138 = vmatprep.subr.bf16.mxu0 0
        %1139 = vmatpush1.bf16.msra.mxu0 0
        %1140 = vmatprep.subr.bf16.mxu0 0
        %1141 = vmatpush1.bf16.msra.mxu0 0
        %1142 = vmatprep.subr.bf16.mxu0 0
        %1143 = vmatpush1.bf16.msra.mxu0 0
        %1144 = vmatprep.subr.bf16.mxu0 0
        %1145 = vmatpush1.bf16.msra.mxu0 0
        %1146 = vmatprep.subr.bf16.mxu0 0
        %1147 = vmatpush1.bf16.msra.mxu0 0
        %1148 = vmatprep.subr.bf16.mxu0 0
        %1149 = vmatpush1.bf16.msra.mxu0 0
        %1150 = vmatprep.mubr.bf16.mxu0 0
        %1151 = vmatmul.mubr.bf16.gmra.mrb[0].mxu0 %v1116
        %v1152 = vpop.f32.mrb[0].mxu0
        %v1153 = vadd.f32 %v386, %v1152
        %v1154 = vpop.f32.mrb[0].mxu0
        %v1155 = vadd.f32 %v390, %v1154
        %v1156 = vpop.f32.mrb[0].mxu0
        %v1157 = vpop.f32.mrb[0].mxu0
        %1158 = vdwg.mxu0
        %1159 = vmatprep.subr.bf16.mxu0 0
        %1160 = vmatpush1.bf16.msra.mxu0 %v419
        %1161 = vmatprep.subr.bf16.mxu0 0
        %1162 = vmatpush1.bf16.msra.mxu0 0
        %1163 = vmatprep.subr.bf16.mxu0 0
        %1164 = vmatpush1.bf16.msra.mxu0 0
        %1165 = vmatprep.subr.bf16.mxu0 0
        %1166 = vmatpush1.bf16.msra.mxu0 0
        %1167 = vmatprep.subr.bf16.mxu0 0
        %1168 = vmatpush1.bf16.msra.mxu0 0
        %1169 = vmatprep.subr.bf16.mxu0 0
        %1170 = vmatpush1.bf16.msra.mxu0 0
        %1171 = vmatprep.subr.bf16.mxu0 0
        %1172 = vmatpush1.bf16.msra.mxu0 0
        %1173 = vmatprep.subr.bf16.mxu0 0
        %1174 = vmatpush1.bf16.msra.mxu0 0
        %1175 = vmatprep.subr.bf16.mxu0 0
        %1176 = vmatpush1.bf16.msra.mxu0 0
        %1177 = vmatprep.subr.bf16.mxu0 0
        %1178 = vmatpush1.bf16.msra.mxu0 0
        %1179 = vmatprep.subr.bf16.mxu0 0
        %1180 = vmatpush1.bf16.msra.mxu0 0
        %1181 = vmatprep.subr.bf16.mxu0 0
        %1182 = vmatpush1.bf16.msra.mxu0 0
        %1183 = vmatprep.subr.bf16.mxu0 0
        %1184 = vmatpush1.bf16.msra.mxu0 0
        %1185 = vmatprep.subr.bf16.mxu0 0
        %1186 = vmatpush1.bf16.msra.mxu0 0
        %1187 = vmatprep.subr.bf16.mxu0 0
        %1188 = vmatpush1.bf16.msra.mxu0 0
        %1189 = vmatprep.subr.bf16.mxu0 0
        %1190 = vmatpush1.bf16.msra.mxu0 0
        %1191 = vmatprep.mubr.bf16.mxu0 0
        %1192 = vmatmul.mubr.bf16.gmra.mrb[0].mxu0 %v1116
        %v1193 = vpop.f32.mrb[0].mxu0
        %v1194 = vadd.f32 %v394, %v1193
        %v1195 = vpop.f32.mrb[0].mxu0
        %v1196 = vpop.f32.mrb[0].mxu0
        %v1197 = vpop.f32.mrb[0].mxu0
        %1198 = vdwg.mxu0
        %v1199 = vpack.c.bf16 %v1110, %v1110
        %1200 = vmatprep.subr.bf16.mxu0 %v590
        %1201 = vmatpush1.bf16.msra.mxu0 %v589
        %1202 = vmatprep.subr.bf16.mxu0 %v593
        %1203 = vmatpush1.bf16.msra.mxu0 %v592
        %1204 = vmatprep.subr.bf16.mxu0 %v596
        %1205 = vmatpush1.bf16.msra.mxu0 %v595
        %1206 = vmatprep.subr.bf16.mxu0 %v599
        %1207 = vmatpush1.bf16.msra.mxu0 %v598
        %1208 = vmatprep.subr.bf16.mxu0 %v602
        %1209 = vmatpush1.bf16.msra.mxu0 %v601
        %1210 = vmatprep.subr.bf16.mxu0 %v605
        %1211 = vmatpush1.bf16.msra.mxu0 %v604
        %1212 = vmatprep.subr.bf16.mxu0 %v608
        %1213 = vmatpush1.bf16.msra.mxu0 %v607
        %1214 = vmatprep.subr.bf16.mxu0 %v611
        %1215 = vmatpush1.bf16.msra.mxu0 %v610
        %1216 = vmatprep.subr.bf16.mxu0 0
        %1217 = vmatpush1.bf16.msra.mxu0 0
        %1218 = vmatprep.subr.bf16.mxu0 0
        %1219 = vmatpush1.bf16.msra.mxu0 0
        %1220 = vmatprep.subr.bf16.mxu0 0
        %1221 = vmatpush1.bf16.msra.mxu0 0
        %1222 = vmatprep.subr.bf16.mxu0 0
        %1223 = vmatpush1.bf16.msra.mxu0 0
        %1224 = vmatprep.subr.bf16.mxu0 0
        %1225 = vmatpush1.bf16.msra.mxu0 0
        %1226 = vmatprep.subr.bf16.mxu0 0
        %1227 = vmatpush1.bf16.msra.mxu0 0
        %1228 = vmatprep.subr.bf16.mxu0 0
        %1229 = vmatpush1.bf16.msra.mxu0 0
        %1230 = vmatprep.subr.bf16.mxu0 0
        %1231 = vmatpush1.bf16.msra.mxu0 0
        %1232 = vmatprep.mubr.bf16.mxu0 0
        %1233 = vmatmul.mubr.bf16.gmra.mrb[0].mxu0 %v1199
        %v1234 = vpop.f32.mrb[0].mxu0
        %v1235 = vadd.f32 0.0, %v1234
        %v1236 = vpop.f32.mrb[0].mxu0
        %v1237 = vadd.f32 0.0, %v1236
        %v1238 = vpop.f32.mrb[0].mxu0
        %v1239 = vpop.f32.mrb[0].mxu0
        %1240 = vdwg.mxu0
        %1241 = vmatprep.subr.bf16.mxu0 0
        %1242 = vmatpush1.bf16.msra.mxu0 %v591
        %1243 = vmatprep.subr.bf16.mxu0 0
        %1244 = vmatpush1.bf16.msra.mxu0 %v594
        %1245 = vmatprep.subr.bf16.mxu0 0
        %1246 = vmatpush1.bf16.msra.mxu0 %v597
        %1247 = vmatprep.subr.bf16.mxu0 0
        %1248 = vmatpush1.bf16.msra.mxu0 %v600
        %1249 = vmatprep.subr.bf16.mxu0 0
        %1250 = vmatpush1.bf16.msra.mxu0 %v603
        %1251 = vmatprep.subr.bf16.mxu0 0
        %1252 = vmatpush1.bf16.msra.mxu0 %v606
        %1253 = vmatprep.subr.bf16.mxu0 0
        %1254 = vmatpush1.bf16.msra.mxu0 %v609
        %1255 = vmatprep.subr.bf16.mxu0 0
        %1256 = vmatpush1.bf16.msra.mxu0 %v612
        %1257 = vmatprep.subr.bf16.mxu0 0
        %1258 = vmatpush1.bf16.msra.mxu0 0
        %1259 = vmatprep.subr.bf16.mxu0 0
        %1260 = vmatpush1.bf16.msra.mxu0 0
        %1261 = vmatprep.subr.bf16.mxu0 0
        %1262 = vmatpush1.bf16.msra.mxu0 0
        %1263 = vmatprep.subr.bf16.mxu0 0
        %1264 = vmatpush1.bf16.msra.mxu0 0
        %1265 = vmatprep.subr.bf16.mxu0 0
        %1266 = vmatpush1.bf16.msra.mxu0 0
        %1267 = vmatprep.subr.bf16.mxu0 0
        %1268 = vmatpush1.bf16.msra.mxu0 0
        %1269 = vmatprep.subr.bf16.mxu0 0
        %1270 = vmatpush1.bf16.msra.mxu0 0
        %1271 = vmatprep.subr.bf16.mxu0 0
        %1272 = vmatpush1.bf16.msra.mxu0 0
        %1273 = vmatprep.mubr.bf16.mxu0 0
        %1274 = vmatmul.mubr.bf16.gmra.mrb[0].mxu0 %v1199
        %v1275 = vpop.f32.mrb[0].mxu0
        %v1276 = vadd.f32 0.0, %v1275
        %v1277 = vpop.f32.mrb[0].mxu0
        %v1278 = vpop.f32.mrb[0].mxu0
        %v1279 = vpop.f32.mrb[0].mxu0
        %1280 = vdwg.mxu0
        %v1281 = vadd.f32 %v1153, %v1235
        %v1282 = vadd.f32 %v1155, %v1237
        %v1283 = vmul.f32 %v1281, 0.5
        %v1284 = vmul.f32 %v1282, 0.5
        %v1285 = vtanh.pop %v1283
        %v1286 = vtanh.pop %v1284
        %v1287 = vmul.f32 %v1285, 0.5
        %v1288 = vmul.f32 %v1286, 0.5
        %v1289 = vadd.f32 %v1287, 0.5
        %v1290 = vadd.f32 %v1288, 0.5
        %v1291 = vadd.f32 %v1276, %v403
        %v1292 = vmul.f32 %v1289, %v1291
        %v1293 = vadd.f32 %v1194, %v1292
        %v1294 = vsub.f32 1.0, %v1290
        %v1295 = vtanh.pop %v1293
        %v1296 = vsub.f32 %v1295, %v1110
        %v1297 = vmul.f32 %v1294, %v1296
        %v1298 = vadd.f32 %v1110, %v1297
        %s1299 = scalar_lea.vmem [#allocation3], 12
        %1300 = vst [vmem:[%s1299] sm:$0xf] %v1298
        %s1301 = scalar_lea.vmem %s295, 8 [#allocation4]
        %v1302 = vld [vmem:[%s1301] sm:$0x3]
        %v1304 = vsel %vm423, %v1302, 0
        %1306 = vmatprep.subr.bf16.mxu0 %v418
        %1307 = vmatpush1.bf16.msra.mxu0 %v417
        %1308 = vmatprep.subr.bf16.mxu0 0
        %1309 = vmatpush1.bf16.msra.mxu0 0
        %1310 = vmatprep.subr.bf16.mxu0 0
        %1311 = vmatpush1.bf16.msra.mxu0 0
        %1312 = vmatprep.subr.bf16.mxu0 0
        %1313 = vmatpush1.bf16.msra.mxu0 0
        %1314 = vmatprep.subr.bf16.mxu0 0
        %1315 = vmatpush1.bf16.msra.mxu0 0
        %1316 = vmatprep.subr.bf16.mxu0 0
        %1317 = vmatpush1.bf16.msra.mxu0 0
        %1318 = vmatprep.subr.bf16.mxu0 0
        %1319 = vmatpush1.bf16.msra.mxu0 0
        %1320 = vmatprep.subr.bf16.mxu0 0
        %1321 = vmatpush1.bf16.msra.mxu0 0
        %1322 = vmatprep.subr.bf16.mxu0 0
        %1323 = vmatpush1.bf16.msra.mxu0 0
        %1324 = vmatprep.subr.bf16.mxu0 0
        %1325 = vmatpush1.bf16.msra.mxu0 0
        %1326 = vmatprep.subr.bf16.mxu0 0
        %1327 = vmatpush1.bf16.msra.mxu0 0
        %1328 = vmatprep.subr.bf16.mxu0 0
        %1329 = vmatpush1.bf16.msra.mxu0 0
        %1330 = vmatprep.subr.bf16.mxu0 0
        %1331 = vmatpush1.bf16.msra.mxu0 0
        %1332 = vmatprep.subr.bf16.mxu0 0
        %1333 = vmatpush1.bf16.msra.mxu0 0
        %1334 = vmatprep.subr.bf16.mxu0 0
        %1335 = vmatpush1.bf16.msra.mxu0 0
        %1336 = vmatprep.subr.bf16.mxu0 0
        %1337 = vmatpush1.bf16.msra.mxu0 0
        %1338 = vmatprep.mubr.bf16.mxu0 0
        %1339 = vmatmul.mubr.bf16.gmra.mrb[0].mxu0 %v1304
        %v1340 = vpop.f32.mrb[0].mxu0
        %v1341 = vadd.f32 %v386, %v1340
        %v1342 = vpop.f32.mrb[0].mxu0
        %v1343 = vadd.f32 %v390, %v1342
        %v1344 = vpop.f32.mrb[0].mxu0
        %v1345 = vpop.f32.mrb[0].mxu0
        %1346 = vdwg.mxu0
        %1347 = vmatprep.subr.bf16.mxu0 0
        %1348 = vmatpush1.bf16.msra.mxu0 %v419
        %1349 = vmatprep.subr.bf16.mxu0 0
        %1350 = vmatpush1.bf16.msra.mxu0 0
        %1351 = vmatprep.subr.bf16.mxu0 0
        %1352 = vmatpush1.bf16.msra.mxu0 0
        %1353 = vmatprep.subr.bf16.mxu0 0
        %1354 = vmatpush1.bf16.msra.mxu0 0
        %1355 = vmatprep.subr.bf16.mxu0 0
        %1356 = vmatpush1.bf16.msra.mxu0 0
        %1357 = vmatprep.subr.bf16.mxu0 0
        %1358 = vmatpush1.bf16.msra.mxu0 0
        %1359 = vmatprep.subr.bf16.mxu0 0
        %1360 = vmatpush1.bf16.msra.mxu0 0
        %1361 = vmatprep.subr.bf16.mxu0 0
        %1362 = vmatpush1.bf16.msra.mxu0 0
        %1363 = vmatprep.subr.bf16.mxu0 0
        %1364 = vmatpush1.bf16.msra.mxu0 0
        %1365 = vmatprep.subr.bf16.mxu0 0
        %1366 = vmatpush1.bf16.msra.mxu0 0
        %1367 = vmatprep.subr.bf16.mxu0 0
        %1368 = vmatpush1.bf16.msra.mxu0 0
        %1369 = vmatprep.subr.bf16.mxu0 0
        %1370 = vmatpush1.bf16.msra.mxu0 0
        %1371 = vmatprep.subr.bf16.mxu0 0
        %1372 = vmatpush1.bf16.msra.mxu0 0
        %1373 = vmatprep.subr.bf16.mxu0 0
        %1374 = vmatpush1.bf16.msra.mxu0 0
        %1375 = vmatprep.subr.bf16.mxu0 0
        %1376 = vmatpush1.bf16.msra.mxu0 0
        %1377 = vmatprep.subr.bf16.mxu0 0
        %1378 = vmatpush1.bf16.msra.mxu0 0
        %1379 = vmatprep.mubr.bf16.mxu0 0
        %1380 = vmatmul.mubr.bf16.gmra.mrb[0].mxu0 %v1304
        %v1381 = vpop.f32.mrb[0].mxu0
        %v1382 = vadd.f32 %v394, %v1381
        %v1383 = vpop.f32.mrb[0].mxu0
        %v1384 = vpop.f32.mrb[0].mxu0
        %v1385 = vpop.f32.mrb[0].mxu0
        %1386 = vdwg.mxu0
        %v1387 = vpack.c.bf16 %v1298, %v1298
        %1388 = vmatprep.subr.bf16.mxu0 %v590
        %1389 = vmatpush1.bf16.msra.mxu0 %v589
        %1390 = vmatprep.subr.bf16.mxu0 %v593
        %1391 = vmatpush1.bf16.msra.mxu0 %v592
        %1392 = vmatprep.subr.bf16.mxu0 %v596
        %1393 = vmatpush1.bf16.msra.mxu0 %v595
        %1394 = vmatprep.subr.bf16.mxu0 %v599
        %1395 = vmatpush1.bf16.msra.mxu0 %v598
        %1396 = vmatprep.subr.bf16.mxu0 %v602
        %1397 = vmatpush1.bf16.msra.mxu0 %v601
        %1398 = vmatprep.subr.bf16.mxu0 %v605
        %1399 = vmatpush1.bf16.msra.mxu0 %v604
        %1400 = vmatprep.subr.bf16.mxu0 %v608
        %1401 = vmatpush1.bf16.msra.mxu0 %v607
        %1402 = vmatprep.subr.bf16.mxu0 %v611
        %1403 = vmatpush1.bf16.msra.mxu0 %v610
        %1404 = vmatprep.subr.bf16.mxu0 0
        %1405 = vmatpush1.bf16.msra.mxu0 0
        %1406 = vmatprep.subr.bf16.mxu0 0
        %1407 = vmatpush1.bf16.msra.mxu0 0
        %1408 = vmatprep.subr.bf16.mxu0 0
        %1409 = vmatpush1.bf16.msra.mxu0 0
        %1410 = vmatprep.subr.bf16.mxu0 0
        %1411 = vmatpush1.bf16.msra.mxu0 0
        %1412 = vmatprep.subr.bf16.mxu0 0
        %1413 = vmatpush1.bf16.msra.mxu0 0
        %1414 = vmatprep.subr.bf16.mxu0 0
        %1415 = vmatpush1.bf16.msra.mxu0 0
        %1416 = vmatprep.subr.bf16.mxu0 0
        %1417 = vmatpush1.bf16.msra.mxu0 0
        %1418 = vmatprep.subr.bf16.mxu0 0
        %1419 = vmatpush1.bf16.msra.mxu0 0
        %1420 = vmatprep.mubr.bf16.mxu0 0
        %1421 = vmatmul.mubr.bf16.gmra.mrb[0].mxu0 %v1387
        %v1422 = vpop.f32.mrb[0].mxu0
        %v1423 = vadd.f32 0.0, %v1422
        %v1424 = vpop.f32.mrb[0].mxu0
        %v1425 = vadd.f32 0.0, %v1424
        %v1426 = vpop.f32.mrb[0].mxu0
        %v1427 = vpop.f32.mrb[0].mxu0
        %1428 = vdwg.mxu0
        %1429 = vmatprep.subr.bf16.mxu0 0
        %1430 = vmatpush1.bf16.msra.mxu0 %v591
        %1431 = vmatprep.subr.bf16.mxu0 0
        %1432 = vmatpush1.bf16.msra.mxu0 %v594
        %1433 = vmatprep.subr.bf16.mxu0 0
        %1434 = vmatpush1.bf16.msra.mxu0 %v597
        %1435 = vmatprep.subr.bf16.mxu0 0
        %1436 = vmatpush1.bf16.msra.mxu0 %v600
        %1437 = vmatprep.subr.bf16.mxu0 0
        %1438 = vmatpush1.bf16.msra.mxu0 %v603
        %1439 = vmatprep.subr.bf16.mxu0 0
        %1440 = vmatpush1.bf16.msra.mxu0 %v606
        %1441 = vmatprep.subr.bf16.mxu0 0
        %1442 = vmatpush1.bf16.msra.mxu0 %v609
        %1443 = vmatprep.subr.bf16.mxu0 0
        %1444 = vmatpush1.bf16.msra.mxu0 %v612
        %1445 = vmatprep.subr.bf16.mxu0 0
        %1446 = vmatpush1.bf16.msra.mxu0 0
        %1447 = vmatprep.subr.bf16.mxu0 0
        %1448 = vmatpush1.bf16.msra.mxu0 0
        %1449 = vmatprep.subr.bf16.mxu0 0
        %1450 = vmatpush1.bf16.msra.mxu0 0
        %1451 = vmatprep.subr.bf16.mxu0 0
        %1452 = vmatpush1.bf16.msra.mxu0 0
        %1453 = vmatprep.subr.bf16.mxu0 0
        %1454 = vmatpush1.bf16.msra.mxu0 0
        %1455 = vmatprep.subr.bf16.mxu0 0
        %1456 = vmatpush1.bf16.msra.mxu0 0
        %1457 = vmatprep.subr.bf16.mxu0 0
        %1458 = vmatpush1.bf16.msra.mxu0 0
        %1459 = vmatprep.subr.bf16.mxu0 0
        %1460 = vmatpush1.bf16.msra.mxu0 0
        %1461 = vmatprep.mubr.bf16.mxu0 0
        %1462 = vmatmul.mubr.bf16.gmra.mrb[0].mxu0 %v1387
        %v1463 = vpop.f32.mrb[0].mxu0
        %v1464 = vadd.f32 0.0, %v1463
        %v1465 = vpop.f32.mrb[0].mxu0
        %v1466 = vpop.f32.mrb[0].mxu0
        %v1467 = vpop.f32.mrb[0].mxu0
        %1468 = vdwg.mxu0
        %v1469 = vadd.f32 %v1341, %v1423
        %v1470 = vadd.f32 %v1343, %v1425
        %v1471 = vmul.f32 %v1469, 0.5
        %v1472 = vmul.f32 %v1470, 0.5
        %v1473 = vtanh.pop %v1471
        %v1474 = vtanh.pop %v1472
        %v1475 = vmul.f32 %v1473, 0.5
        %v1476 = vmul.f32 %v1474, 0.5
        %v1477 = vadd.f32 %v1475, 0.5
        %v1478 = vadd.f32 %v1476, 0.5
        %v1479 = vadd.f32 %v1464, %v403
        %v1480 = vmul.f32 %v1477, %v1479
        %v1481 = vadd.f32 %v1382, %v1480
        %v1482 = vsub.f32 1.0, %v1478
        %v1483 = vtanh.pop %v1481
        %v1484 = vsub.f32 %v1483, %v1298
        %v1485 = vmul.f32 %v1482, %v1484
        %v1486 = vadd.f32 %v1298, %v1485
        %s1487 = scalar_lea.vmem [#allocation3], 16
        %1488 = vst [vmem:[%s1487] sm:$0xf] %v1486
        %s1489 = scalar_lea.vmem %s295, 10 [#allocation4]
        %v1490 = vld [vmem:[%s1489] sm:$0x3]
        %v1492 = vsel %vm423, %v1490, 0
        %1494 = vmatprep.subr.bf16.mxu0 %v418
        %1495 = vmatpush1.bf16.msra.mxu0 %v417
        %1496 = vmatprep.subr.bf16.mxu0 0
        %1497 = vmatpush1.bf16.msra.mxu0 0
        %1498 = vmatprep.subr.bf16.mxu0 0
        %1499 = vmatpush1.bf16.msra.mxu0 0
        %1500 = vmatprep.subr.bf16.mxu0 0
        %1501 = vmatpush1.bf16.msra.mxu0 0
        %1502 = vmatprep.subr.bf16.mxu0 0
        %1503 = vmatpush1.bf16.msra.mxu0 0
        %1504 = vmatprep.subr.bf16.mxu0 0
        %1505 = vmatpush1.bf16.msra.mxu0 0
        %1506 = vmatprep.subr.bf16.mxu0 0
        %1507 = vmatpush1.bf16.msra.mxu0 0
        %1508 = vmatprep.subr.bf16.mxu0 0
        %1509 = vmatpush1.bf16.msra.mxu0 0
        %1510 = vmatprep.subr.bf16.mxu0 0
        %1511 = vmatpush1.bf16.msra.mxu0 0
        %1512 = vmatprep.subr.bf16.mxu0 0
        %1513 = vmatpush1.bf16.msra.mxu0 0
        %1514 = vmatprep.subr.bf16.mxu0 0
        %1515 = vmatpush1.bf16.msra.mxu0 0
        %1516 = vmatprep.subr.bf16.mxu0 0
        %1517 = vmatpush1.bf16.msra.mxu0 0
        %1518 = vmatprep.subr.bf16.mxu0 0
        %1519 = vmatpush1.bf16.msra.mxu0 0
        %1520 = vmatprep.subr.bf16.mxu0 0
        %1521 = vmatpush1.bf16.msra.mxu0 0
        %1522 = vmatprep.subr.bf16.mxu0 0
        %1523 = vmatpush1.bf16.msra.mxu0 0
        %1524 = vmatprep.subr.bf16.mxu0 0
        %1525 = vmatpush1.bf16.msra.mxu0 0
        %1526 = vmatprep.mubr.bf16.mxu0 0
        %1527 = vmatmul.mubr.bf16.gmra.mrb[0].mxu0 %v1492
        %v1528 = vpop.f32.mrb[0].mxu0
        %v1529 = vadd.f32 %v386, %v1528
        %v1530 = vpop.f32.mrb[0].mxu0
        %v1531 = vadd.f32 %v390, %v1530
        %v1532 = vpop.f32.mrb[0].mxu0
        %v1533 = vpop.f32.mrb[0].mxu0
        %1534 = vdwg.mxu0
        %1535 = vmatprep.subr.bf16.mxu0 0
        %1536 = vmatpush1.bf16.msra.mxu0 %v419
        %1537 = vmatprep.subr.bf16.mxu0 0
        %1538 = vmatpush1.bf16.msra.mxu0 0
        %1539 = vmatprep.subr.bf16.mxu0 0
        %1540 = vmatpush1.bf16.msra.mxu0 0
        %1541 = vmatprep.subr.bf16.mxu0 0
        %1542 = vmatpush1.bf16.msra.mxu0 0
        %1543 = vmatprep.subr.bf16.mxu0 0
        %1544 = vmatpush1.bf16.msra.mxu0 0
        %1545 = vmatprep.subr.bf16.mxu0 0
        %1546 = vmatpush1.bf16.msra.mxu0 0
        %1547 = vmatprep.subr.bf16.mxu0 0
        %1548 = vmatpush1.bf16.msra.mxu0 0
        %1549 = vmatprep.subr.bf16.mxu0 0
        %1550 = vmatpush1.bf16.msra.mxu0 0
        %1551 = vmatprep.subr.bf16.mxu0 0
        %1552 = vmatpush1.bf16.msra.mxu0 0
        %1553 = vmatprep.subr.bf16.mxu0 0
        %1554 = vmatpush1.bf16.msra.mxu0 0
        %1555 = vmatprep.subr.bf16.mxu0 0
        %1556 = vmatpush1.bf16.msra.mxu0 0
        %1557 = vmatprep.subr.bf16.mxu0 0
        %1558 = vmatpush1.bf16.msra.mxu0 0
        %1559 = vmatprep.subr.bf16.mxu0 0
        %1560 = vmatpush1.bf16.msra.mxu0 0
        %1561 = vmatprep.subr.bf16.mxu0 0
        %1562 = vmatpush1.bf16.msra.mxu0 0
        %1563 = vmatprep.subr.bf16.mxu0 0
        %1564 = vmatpush1.bf16.msra.mxu0 0
        %1565 = vmatprep.subr.bf16.mxu0 0
        %1566 = vmatpush1.bf16.msra.mxu0 0
        %1567 = vmatprep.mubr.bf16.mxu0 0
        %1568 = vmatmul.mubr.bf16.gmra.mrb[0].mxu0 %v1492
        %v1569 = vpop.f32.mrb[0].mxu0
        %v1570 = vadd.f32 %v394, %v1569
        %v1571 = vpop.f32.mrb[0].mxu0
        %v1572 = vpop.f32.mrb[0].mxu0
        %v1573 = vpop.f32.mrb[0].mxu0
        %1574 = vdwg.mxu0
        %v1575 = vpack.c.bf16 %v1486, %v1486
        %1576 = vmatprep.subr.bf16.mxu0 %v590
        %1577 = vmatpush1.bf16.msra.mxu0 %v589
        %1578 = vmatprep.subr.bf16.mxu0 %v593
        %1579 = vmatpush1.bf16.msra.mxu0 %v592
        %1580 = vmatprep.subr.bf16.mxu0 %v596
        %1581 = vmatpush1.bf16.msra.mxu0 %v595
        %1582 = vmatprep.subr.bf16.mxu0 %v599
        %1583 = vmatpush1.bf16.msra.mxu0 %v598
        %1584 = vmatprep.subr.bf16.mxu0 %v602
        %1585 = vmatpush1.bf16.msra.mxu0 %v601
        %1586 = vmatprep.subr.bf16.mxu0 %v605
        %1587 = vmatpush1.bf16.msra.mxu0 %v604
        %1588 = vmatprep.subr.bf16.mxu0 %v608
        %1589 = vmatpush1.bf16.msra.mxu0 %v607
        %1590 = vmatprep.subr.bf16.mxu0 %v611
        %1591 = vmatpush1.bf16.msra.mxu0 %v610
        %1592 = vmatprep.subr.bf16.mxu0 0
        %1593 = vmatpush1.bf16.msra.mxu0 0
        %1594 = vmatprep.subr.bf16.mxu0 0
        %1595 = vmatpush1.bf16.msra.mxu0 0
        %1596 = vmatprep.subr.bf16.mxu0 0
        %1597 = vmatpush1.bf16.msra.mxu0 0
        %1598 = vmatprep.subr.bf16.mxu0 0
        %1599 = vmatpush1.bf16.msra.mxu0 0
        %1600 = vmatprep.subr.bf16.mxu0 0
        %1601 = vmatpush1.bf16.msra.mxu0 0
        %1602 = vmatprep.subr.bf16.mxu0 0
        %1603 = vmatpush1.bf16.msra.mxu0 0
        %1604 = vmatprep.subr.bf16.mxu0 0
        %1605 = vmatpush1.bf16.msra.mxu0 0
        %1606 = vmatprep.subr.bf16.mxu0 0
        %1607 = vmatpush1.bf16.msra.mxu0 0
        %1608 = vmatprep.mubr.bf16.mxu0 0
        %1609 = vmatmul.mubr.bf16.gmra.mrb[0].mxu0 %v1575
        %v1610 = vpop.f32.mrb[0].mxu0
        %v1611 = vadd.f32 0.0, %v1610
        %v1612 = vpop.f32.mrb[0].mxu0
        %v1613 = vadd.f32 0.0, %v1612
        %v1614 = vpop.f32.mrb[0].mxu0
        %v1615 = vpop.f32.mrb[0].mxu0
        %1616 = vdwg.mxu0
        %1617 = vmatprep.subr.bf16.mxu0 0
        %1618 = vmatpush1.bf16.msra.mxu0 %v591
        %1619 = vmatprep.subr.bf16.mxu0 0
        %1620 = vmatpush1.bf16.msra.mxu0 %v594
        %1621 = vmatprep.subr.bf16.mxu0 0
        %1622 = vmatpush1.bf16.msra.mxu0 %v597
        %1623 = vmatprep.subr.bf16.mxu0 0
        %1624 = vmatpush1.bf16.msra.mxu0 %v600
        %1625 = vmatprep.subr.bf16.mxu0 0
        %1626 = vmatpush1.bf16.msra.mxu0 %v603
        %1627 = vmatprep.subr.bf16.mxu0 0
        %1628 = vmatpush1.bf16.msra.mxu0 %v606
        %1629 = vmatprep.subr.bf16.mxu0 0
        %1630 = vmatpush1.bf16.msra.mxu0 %v609
        %1631 = vmatprep.subr.bf16.mxu0 0
        %1632 = vmatpush1.bf16.msra.mxu0 %v612
        %1633 = vmatprep.subr.bf16.mxu0 0
        %1634 = vmatpush1.bf16.msra.mxu0 0
        %1635 = vmatprep.subr.bf16.mxu0 0
        %1636 = vmatpush1.bf16.msra.mxu0 0
        %1637 = vmatprep.subr.bf16.mxu0 0
        %1638 = vmatpush1.bf16.msra.mxu0 0
        %1639 = vmatprep.subr.bf16.mxu0 0
        %1640 = vmatpush1.bf16.msra.mxu0 0
        %1641 = vmatprep.subr.bf16.mxu0 0
        %1642 = vmatpush1.bf16.msra.mxu0 0
        %1643 = vmatprep.subr.bf16.mxu0 0
        %1644 = vmatpush1.bf16.msra.mxu0 0
        %1645 = vmatprep.subr.bf16.mxu0 0
        %1646 = vmatpush1.bf16.msra.mxu0 0
        %1647 = vmatprep.subr.bf16.mxu0 0
        %1648 = vmatpush1.bf16.msra.mxu0 0
        %1649 = vmatprep.mubr.bf16.mxu0 0
        %1650 = vmatmul.mubr.bf16.gmra.mrb[0].mxu0 %v1575
        %v1651 = vpop.f32.mrb[0].mxu0
        %v1652 = vadd.f32 0.0, %v1651
        %v1653 = vpop.f32.mrb[0].mxu0
        %v1654 = vpop.f32.mrb[0].mxu0
        %v1655 = vpop.f32.mrb[0].mxu0
        %1656 = vdwg.mxu0
        %v1657 = vadd.f32 %v1529, %v1611
        %v1658 = vadd.f32 %v1531, %v1613
        %v1659 = vmul.f32 %v1657, 0.5
        %v1660 = vmul.f32 %v1658, 0.5
        %v1661 = vtanh.pop %v1659
        %v1662 = vtanh.pop %v1660
        %v1663 = vmul.f32 %v1661, 0.5
        %v1664 = vmul.f32 %v1662, 0.5
        %v1665 = vadd.f32 %v1663, 0.5
        %v1666 = vadd.f32 %v1664, 0.5
        %v1667 = vadd.f32 %v1652, %v403
        %v1668 = vmul.f32 %v1665, %v1667
        %v1669 = vadd.f32 %v1570, %v1668
        %v1670 = vsub.f32 1.0, %v1666
        %v1671 = vtanh.pop %v1669
        %v1672 = vsub.f32 %v1671, %v1486
        %v1673 = vmul.f32 %v1670, %v1672
        %v1674 = vadd.f32 %v1486, %v1673
        %s1675 = scalar_lea.vmem [#allocation3], 20
        %1676 = vst [vmem:[%s1675] sm:$0xf] %v1674
        %s1677 = scalar_lea.vmem %s295, 12 [#allocation4]
        %v1678 = vld [vmem:[%s1677] sm:$0x3]
        %v1680 = vsel %vm423, %v1678, 0
        %1682 = vmatprep.subr.bf16.mxu0 %v418
        %1683 = vmatpush1.bf16.msra.mxu0 %v417
        %1684 = vmatprep.subr.bf16.mxu0 0
        %1685 = vmatpush1.bf16.msra.mxu0 0
        %1686 = vmatprep.subr.bf16.mxu0 0
        %1687 = vmatpush1.bf16.msra.mxu0 0
        %1688 = vmatprep.subr.bf16.mxu0 0
        %1689 = vmatpush1.bf16.msra.mxu0 0
        %1690 = vmatprep.subr.bf16.mxu0 0
        %1691 = vmatpush1.bf16.msra.mxu0 0
        %1692 = vmatprep.subr.bf16.mxu0 0
        %1693 = vmatpush1.bf16.msra.mxu0 0
        %1694 = vmatprep.subr.bf16.mxu0 0
        %1695 = vmatpush1.bf16.msra.mxu0 0
        %1696 = vmatprep.subr.bf16.mxu0 0
        %1697 = vmatpush1.bf16.msra.mxu0 0
        %1698 = vmatprep.subr.bf16.mxu0 0
        %1699 = vmatpush1.bf16.msra.mxu0 0
        %1700 = vmatprep.subr.bf16.mxu0 0
        %1701 = vmatpush1.bf16.msra.mxu0 0
        %1702 = vmatprep.subr.bf16.mxu0 0
        %1703 = vmatpush1.bf16.msra.mxu0 0
        %1704 = vmatprep.subr.bf16.mxu0 0
        %1705 = vmatpush1.bf16.msra.mxu0 0
        %1706 = vmatprep.subr.bf16.mxu0 0
        %1707 = vmatpush1.bf16.msra.mxu0 0
        %1708 = vmatprep.subr.bf16.mxu0 0
        %1709 = vmatpush1.bf16.msra.mxu0 0
        %1710 = vmatprep.subr.bf16.mxu0 0
        %1711 = vmatpush1.bf16.msra.mxu0 0
        %1712 = vmatprep.subr.bf16.mxu0 0
        %1713 = vmatpush1.bf16.msra.mxu0 0
        %1714 = vmatprep.mubr.bf16.mxu0 0
        %1715 = vmatmul.mubr.bf16.gmra.mrb[0].mxu0 %v1680
        %v1716 = vpop.f32.mrb[0].mxu0
        %v1717 = vadd.f32 %v386, %v1716
        %v1718 = vpop.f32.mrb[0].mxu0
        %v1719 = vadd.f32 %v390, %v1718
        %v1720 = vpop.f32.mrb[0].mxu0
        %v1721 = vpop.f32.mrb[0].mxu0
        %1722 = vdwg.mxu0
        %1723 = vmatprep.subr.bf16.mxu0 0
        %1724 = vmatpush1.bf16.msra.mxu0 %v419
        %1725 = vmatprep.subr.bf16.mxu0 0
        %1726 = vmatpush1.bf16.msra.mxu0 0
        %1727 = vmatprep.subr.bf16.mxu0 0
        %1728 = vmatpush1.bf16.msra.mxu0 0
        %1729 = vmatprep.subr.bf16.mxu0 0
        %1730 = vmatpush1.bf16.msra.mxu0 0
        %1731 = vmatprep.subr.bf16.mxu0 0
        %1732 = vmatpush1.bf16.msra.mxu0 0
        %1733 = vmatprep.subr.bf16.mxu0 0
        %1734 = vmatpush1.bf16.msra.mxu0 0
        %1735 = vmatprep.subr.bf16.mxu0 0
        %1736 = vmatpush1.bf16.msra.mxu0 0
        %1737 = vmatprep.subr.bf16.mxu0 0
        %1738 = vmatpush1.bf16.msra.mxu0 0
        %1739 = vmatprep.subr.bf16.mxu0 0
        %1740 = vmatpush1.bf16.msra.mxu0 0
        %1741 = vmatprep.subr.bf16.mxu0 0
        %1742 = vmatpush1.bf16.msra.mxu0 0
        %1743 = vmatprep.subr.bf16.mxu0 0
        %1744 = vmatpush1.bf16.msra.mxu0 0
        %1745 = vmatprep.subr.bf16.mxu0 0
        %1746 = vmatpush1.bf16.msra.mxu0 0
        %1747 = vmatprep.subr.bf16.mxu0 0
        %1748 = vmatpush1.bf16.msra.mxu0 0
        %1749 = vmatprep.subr.bf16.mxu0 0
        %1750 = vmatpush1.bf16.msra.mxu0 0
        %1751 = vmatprep.subr.bf16.mxu0 0
        %1752 = vmatpush1.bf16.msra.mxu0 0
        %1753 = vmatprep.subr.bf16.mxu0 0
        %1754 = vmatpush1.bf16.msra.mxu0 0
        %1755 = vmatprep.mubr.bf16.mxu0 0
        %1756 = vmatmul.mubr.bf16.gmra.mrb[0].mxu0 %v1680
        %v1757 = vpop.f32.mrb[0].mxu0
        %v1758 = vadd.f32 %v394, %v1757
        %v1759 = vpop.f32.mrb[0].mxu0
        %v1760 = vpop.f32.mrb[0].mxu0
        %v1761 = vpop.f32.mrb[0].mxu0
        %1762 = vdwg.mxu0
        %v1763 = vpack.c.bf16 %v1674, %v1674
        %1764 = vmatprep.subr.bf16.mxu0 %v590
        %1765 = vmatpush1.bf16.msra.mxu0 %v589
        %1766 = vmatprep.subr.bf16.mxu0 %v593
        %1767 = vmatpush1.bf16.msra.mxu0 %v592
        %1768 = vmatprep.subr.bf16.mxu0 %v596
        %1769 = vmatpush1.bf16.msra.mxu0 %v595
        %1770 = vmatprep.subr.bf16.mxu0 %v599
        %1771 = vmatpush1.bf16.msra.mxu0 %v598
        %1772 = vmatprep.subr.bf16.mxu0 %v602
        %1773 = vmatpush1.bf16.msra.mxu0 %v601
        %1774 = vmatprep.subr.bf16.mxu0 %v605
        %1775 = vmatpush1.bf16.msra.mxu0 %v604
        %1776 = vmatprep.subr.bf16.mxu0 %v608
        %1777 = vmatpush1.bf16.msra.mxu0 %v607
        %1778 = vmatprep.subr.bf16.mxu0 %v611
        %1779 = vmatpush1.bf16.msra.mxu0 %v610
        %1780 = vmatprep.subr.bf16.mxu0 0
        %1781 = vmatpush1.bf16.msra.mxu0 0
        %1782 = vmatprep.subr.bf16.mxu0 0
        %1783 = vmatpush1.bf16.msra.mxu0 0
        %1784 = vmatprep.subr.bf16.mxu0 0
        %1785 = vmatpush1.bf16.msra.mxu0 0
        %1786 = vmatprep.subr.bf16.mxu0 0
        %1787 = vmatpush1.bf16.msra.mxu0 0
        %1788 = vmatprep.subr.bf16.mxu0 0
        %1789 = vmatpush1.bf16.msra.mxu0 0
        %1790 = vmatprep.subr.bf16.mxu0 0
        %1791 = vmatpush1.bf16.msra.mxu0 0
        %1792 = vmatprep.subr.bf16.mxu0 0
        %1793 = vmatpush1.bf16.msra.mxu0 0
        %1794 = vmatprep.subr.bf16.mxu0 0
        %1795 = vmatpush1.bf16.msra.mxu0 0
        %1796 = vmatprep.mubr.bf16.mxu0 0
        %1797 = vmatmul.mubr.bf16.gmra.mrb[0].mxu0 %v1763
        %v1798 = vpop.f32.mrb[0].mxu0
        %v1799 = vadd.f32 0.0, %v1798
        %v1800 = vpop.f32.mrb[0].mxu0
        %v1801 = vadd.f32 0.0, %v1800
        %v1802 = vpop.f32.mrb[0].mxu0
        %v1803 = vpop.f32.mrb[0].mxu0
        %1804 = vdwg.mxu0
        %1805 = vmatprep.subr.bf16.mxu0 0
        %1806 = vmatpush1.bf16.msra.mxu0 %v591
        %1807 = vmatprep.subr.bf16.mxu0 0
        %1808 = vmatpush1.bf16.msra.mxu0 %v594
        %1809 = vmatprep.subr.bf16.mxu0 0
        %1810 = vmatpush1.bf16.msra.mxu0 %v597
        %1811 = vmatprep.subr.bf16.mxu0 0
        %1812 = vmatpush1.bf16.msra.mxu0 %v600
        %1813 = vmatprep.subr.bf16.mxu0 0
        %1814 = vmatpush1.bf16.msra.mxu0 %v603
        %1815 = vmatprep.subr.bf16.mxu0 0
        %1816 = vmatpush1.bf16.msra.mxu0 %v606
        %1817 = vmatprep.subr.bf16.mxu0 0
        %1818 = vmatpush1.bf16.msra.mxu0 %v609
        %1819 = vmatprep.subr.bf16.mxu0 0
        %1820 = vmatpush1.bf16.msra.mxu0 %v612
        %1821 = vmatprep.subr.bf16.mxu0 0
        %1822 = vmatpush1.bf16.msra.mxu0 0
        %1823 = vmatprep.subr.bf16.mxu0 0
        %1824 = vmatpush1.bf16.msra.mxu0 0
        %1825 = vmatprep.subr.bf16.mxu0 0
        %1826 = vmatpush1.bf16.msra.mxu0 0
        %1827 = vmatprep.subr.bf16.mxu0 0
        %1828 = vmatpush1.bf16.msra.mxu0 0
        %1829 = vmatprep.subr.bf16.mxu0 0
        %1830 = vmatpush1.bf16.msra.mxu0 0
        %1831 = vmatprep.subr.bf16.mxu0 0
        %1832 = vmatpush1.bf16.msra.mxu0 0
        %1833 = vmatprep.subr.bf16.mxu0 0
        %1834 = vmatpush1.bf16.msra.mxu0 0
        %1835 = vmatprep.subr.bf16.mxu0 0
        %1836 = vmatpush1.bf16.msra.mxu0 0
        %1837 = vmatprep.mubr.bf16.mxu0 0
        %1838 = vmatmul.mubr.bf16.gmra.mrb[0].mxu0 %v1763
        %v1839 = vpop.f32.mrb[0].mxu0
        %v1840 = vadd.f32 0.0, %v1839
        %v1841 = vpop.f32.mrb[0].mxu0
        %v1842 = vpop.f32.mrb[0].mxu0
        %v1843 = vpop.f32.mrb[0].mxu0
        %1844 = vdwg.mxu0
        %v1845 = vadd.f32 %v1717, %v1799
        %v1846 = vadd.f32 %v1719, %v1801
        %v1847 = vmul.f32 %v1845, 0.5
        %v1848 = vmul.f32 %v1846, 0.5
        %v1849 = vtanh.pop %v1847
        %v1850 = vtanh.pop %v1848
        %v1851 = vmul.f32 %v1849, 0.5
        %v1852 = vmul.f32 %v1850, 0.5
        %v1853 = vadd.f32 %v1851, 0.5
        %v1854 = vadd.f32 %v1852, 0.5
        %v1855 = vadd.f32 %v1840, %v403
        %v1856 = vmul.f32 %v1853, %v1855
        %v1857 = vadd.f32 %v1758, %v1856
        %v1858 = vsub.f32 1.0, %v1854
        %v1859 = vtanh.pop %v1857
        %v1860 = vsub.f32 %v1859, %v1674
        %v1861 = vmul.f32 %v1858, %v1860
        %v1862 = vadd.f32 %v1674, %v1861
        %s1863 = scalar_lea.vmem [#allocation3], 24
        %1864 = vst [vmem:[%s1863] sm:$0xf] %v1862
        %s1865 = scalar_lea.vmem %s295, 14 [#allocation4]
        %v1866 = vld [vmem:[%s1865] sm:$0x3]
        %v1868 = vsel %vm423, %v1866, 0
        %1870 = vmatprep.subr.bf16.mxu0 %v418
        %1871 = vmatpush1.bf16.msra.mxu0 %v417
        %1872 = vmatprep.subr.bf16.mxu0 0
        %1873 = vmatpush1.bf16.msra.mxu0 0
        %1874 = vmatprep.subr.bf16.mxu0 0
        %1875 = vmatpush1.bf16.msra.mxu0 0
        %1876 = vmatprep.subr.bf16.mxu0 0
        %1877 = vmatpush1.bf16.msra.mxu0 0
        %1878 = vmatprep.subr.bf16.mxu0 0
        %1879 = vmatpush1.bf16.msra.mxu0 0
        %1880 = vmatprep.subr.bf16.mxu0 0
        %1881 = vmatpush1.bf16.msra.mxu0 0
        %1882 = vmatprep.subr.bf16.mxu0 0
        %1883 = vmatpush1.bf16.msra.mxu0 0
        %1884 = vmatprep.subr.bf16.mxu0 0
        %1885 = vmatpush1.bf16.msra.mxu0 0
        %1886 = vmatprep.subr.bf16.mxu0 0
        %1887 = vmatpush1.bf16.msra.mxu0 0
        %1888 = vmatprep.subr.bf16.mxu0 0
        %1889 = vmatpush1.bf16.msra.mxu0 0
        %1890 = vmatprep.subr.bf16.mxu0 0
        %1891 = vmatpush1.bf16.msra.mxu0 0
        %1892 = vmatprep.subr.bf16.mxu0 0
        %1893 = vmatpush1.bf16.msra.mxu0 0
        %1894 = vmatprep.subr.bf16.mxu0 0
        %1895 = vmatpush1.bf16.msra.mxu0 0
        %1896 = vmatprep.subr.bf16.mxu0 0
        %1897 = vmatpush1.bf16.msra.mxu0 0
        %1898 = vmatprep.subr.bf16.mxu0 0
        %1899 = vmatpush1.bf16.msra.mxu0 0
        %1900 = vmatprep.subr.bf16.mxu0 0
        %1901 = vmatpush1.bf16.msra.mxu0 0
        %1902 = vmatprep.mubr.bf16.mxu0 0
        %1903 = vmatmul.mubr.bf16.gmra.mrb[0].mxu0 %v1868
        %v1904 = vpop.f32.mrb[0].mxu0
        %v1905 = vadd.f32 %v386, %v1904
        %v1906 = vpop.f32.mrb[0].mxu0
        %v1907 = vadd.f32 %v390, %v1906
        %v1908 = vpop.f32.mrb[0].mxu0
        %v1909 = vpop.f32.mrb[0].mxu0
        %1910 = vdwg.mxu0
        %1911 = vmatprep.subr.bf16.mxu0 0
        %1912 = vmatpush1.bf16.msra.mxu0 %v419
        %1913 = vmatprep.subr.bf16.mxu0 0
        %1914 = vmatpush1.bf16.msra.mxu0 0
        %1915 = vmatprep.subr.bf16.mxu0 0
        %1916 = vmatpush1.bf16.msra.mxu0 0
        %1917 = vmatprep.subr.bf16.mxu0 0
        %1918 = vmatpush1.bf16.msra.mxu0 0
        %1919 = vmatprep.subr.bf16.mxu0 0
        %1920 = vmatpush1.bf16.msra.mxu0 0
        %1921 = vmatprep.subr.bf16.mxu0 0
        %1922 = vmatpush1.bf16.msra.mxu0 0
        %1923 = vmatprep.subr.bf16.mxu0 0
        %1924 = vmatpush1.bf16.msra.mxu0 0
        %1925 = vmatprep.subr.bf16.mxu0 0
        %1926 = vmatpush1.bf16.msra.mxu0 0
        %1927 = vmatprep.subr.bf16.mxu0 0
        %1928 = vmatpush1.bf16.msra.mxu0 0
        %1929 = vmatprep.subr.bf16.mxu0 0
        %1930 = vmatpush1.bf16.msra.mxu0 0
        %1931 = vmatprep.subr.bf16.mxu0 0
        %1932 = vmatpush1.bf16.msra.mxu0 0
        %1933 = vmatprep.subr.bf16.mxu0 0
        %1934 = vmatpush1.bf16.msra.mxu0 0
        %1935 = vmatprep.subr.bf16.mxu0 0
        %1936 = vmatpush1.bf16.msra.mxu0 0
        %1937 = vmatprep.subr.bf16.mxu0 0
        %1938 = vmatpush1.bf16.msra.mxu0 0
        %1939 = vmatprep.subr.bf16.mxu0 0
        %1940 = vmatpush1.bf16.msra.mxu0 0
        %1941 = vmatprep.subr.bf16.mxu0 0
        %1942 = vmatpush1.bf16.msra.mxu0 0
        %1943 = vmatprep.mubr.bf16.mxu0 0
        %1944 = vmatmul.mubr.bf16.gmra.mrb[0].mxu0 %v1868
        %v1945 = vpop.f32.mrb[0].mxu0
        %v1946 = vadd.f32 %v394, %v1945
        %v1947 = vpop.f32.mrb[0].mxu0
        %v1948 = vpop.f32.mrb[0].mxu0
        %v1949 = vpop.f32.mrb[0].mxu0
        %1950 = vdwg.mxu0
        %v1951 = vpack.c.bf16 %v1862, %v1862
        %1952 = vmatprep.subr.bf16.mxu0 %v590
        %1953 = vmatpush1.bf16.msra.mxu0 %v589
        %1954 = vmatprep.subr.bf16.mxu0 %v593
        %1955 = vmatpush1.bf16.msra.mxu0 %v592
        %1956 = vmatprep.subr.bf16.mxu0 %v596
        %1957 = vmatpush1.bf16.msra.mxu0 %v595
        %1958 = vmatprep.subr.bf16.mxu0 %v599
        %1959 = vmatpush1.bf16.msra.mxu0 %v598
        %1960 = vmatprep.subr.bf16.mxu0 %v602
        %1961 = vmatpush1.bf16.msra.mxu0 %v601
        %1962 = vmatprep.subr.bf16.mxu0 %v605
        %1963 = vmatpush1.bf16.msra.mxu0 %v604
        %1964 = vmatprep.subr.bf16.mxu0 %v608
        %1965 = vmatpush1.bf16.msra.mxu0 %v607
        %1966 = vmatprep.subr.bf16.mxu0 %v611
        %1967 = vmatpush1.bf16.msra.mxu0 %v610
        %1968 = vmatprep.subr.bf16.mxu0 0
        %1969 = vmatpush1.bf16.msra.mxu0 0
        %1970 = vmatprep.subr.bf16.mxu0 0
        %1971 = vmatpush1.bf16.msra.mxu0 0
        %1972 = vmatprep.subr.bf16.mxu0 0
        %1973 = vmatpush1.bf16.msra.mxu0 0
        %1974 = vmatprep.subr.bf16.mxu0 0
        %1975 = vmatpush1.bf16.msra.mxu0 0
        %1976 = vmatprep.subr.bf16.mxu0 0
        %1977 = vmatpush1.bf16.msra.mxu0 0
        %1978 = vmatprep.subr.bf16.mxu0 0
        %1979 = vmatpush1.bf16.msra.mxu0 0
        %1980 = vmatprep.subr.bf16.mxu0 0
        %1981 = vmatpush1.bf16.msra.mxu0 0
        %1982 = vmatprep.subr.bf16.mxu0 0
        %1983 = vmatpush1.bf16.msra.mxu0 0
        %1984 = vmatprep.mubr.bf16.mxu0 0
        %1985 = vmatmul.mubr.bf16.gmra.mrb[0].mxu0 %v1951
        %v1986 = vpop.f32.mrb[0].mxu0
        %v1987 = vadd.f32 0.0, %v1986
        %v1988 = vpop.f32.mrb[0].mxu0
        %v1989 = vadd.f32 0.0, %v1988
        %v1990 = vpop.f32.mrb[0].mxu0
        %v1991 = vpop.f32.mrb[0].mxu0
        %1992 = vdwg.mxu0
        %1993 = vmatprep.subr.bf16.mxu0 0
        %1994 = vmatpush1.bf16.msra.mxu0 %v591
        %1995 = vmatprep.subr.bf16.mxu0 0
        %1996 = vmatpush1.bf16.msra.mxu0 %v594
        %1997 = vmatprep.subr.bf16.mxu0 0
        %1998 = vmatpush1.bf16.msra.mxu0 %v597
        %1999 = vmatprep.subr.bf16.mxu0 0
        %2000 = vmatpush1.bf16.msra.mxu0 %v600
        %2001 = vmatprep.subr.bf16.mxu0 0
        %2002 = vmatpush1.bf16.msra.mxu0 %v603
        %2003 = vmatprep.subr.bf16.mxu0 0
        %2004 = vmatpush1.bf16.msra.mxu0 %v606
        %2005 = vmatprep.subr.bf16.mxu0 0
        %2006 = vmatpush1.bf16.msra.mxu0 %v609
        %2007 = vmatprep.subr.bf16.mxu0 0
        %2008 = vmatpush1.bf16.msra.mxu0 %v612
        %2009 = vmatprep.subr.bf16.mxu0 0
        %2010 = vmatpush1.bf16.msra.mxu0 0
        %2011 = vmatprep.subr.bf16.mxu0 0
        %2012 = vmatpush1.bf16.msra.mxu0 0
        %2013 = vmatprep.subr.bf16.mxu0 0
        %2014 = vmatpush1.bf16.msra.mxu0 0
        %2015 = vmatprep.subr.bf16.mxu0 0
        %2016 = vmatpush1.bf16.msra.mxu0 0
        %2017 = vmatprep.subr.bf16.mxu0 0
        %2018 = vmatpush1.bf16.msra.mxu0 0
        %2019 = vmatprep.subr.bf16.mxu0 0
        %2020 = vmatpush1.bf16.msra.mxu0 0
        %2021 = vmatprep.subr.bf16.mxu0 0
        %2022 = vmatpush1.bf16.msra.mxu0 0
        %2023 = vmatprep.subr.bf16.mxu0 0
        %2024 = vmatpush1.bf16.msra.mxu0 0
        %2025 = vmatprep.mubr.bf16.mxu0 0
        %2026 = vmatmul.mubr.bf16.gmra.mrb[0].mxu0 %v1951
        %v2027 = vpop.f32.mrb[0].mxu0
        %v2028 = vadd.f32 0.0, %v2027
        %v2029 = vpop.f32.mrb[0].mxu0
        %v2030 = vpop.f32.mrb[0].mxu0
        %v2031 = vpop.f32.mrb[0].mxu0
        %2032 = vdwg.mxu0
        %v2033 = vadd.f32 %v1905, %v1987
        %v2034 = vadd.f32 %v1907, %v1989
        %v2035 = vmul.f32 %v2033, 0.5
        %v2036 = vmul.f32 %v2034, 0.5
        %v2037 = vtanh.pop %v2035
        %v2038 = vtanh.pop %v2036
        %v2039 = vmul.f32 %v2037, 0.5
        %v2040 = vmul.f32 %v2038, 0.5
        %v2041 = vadd.f32 %v2039, 0.5
        %v2042 = vadd.f32 %v2040, 0.5
        %v2043 = vadd.f32 %v2028, %v403
        %v2044 = vmul.f32 %v2041, %v2043
        %v2045 = vadd.f32 %v1946, %v2044
        %v2046 = vsub.f32 1.0, %v2042
        %v2047 = vtanh.pop %v2045
        %v2048 = vsub.f32 %v2047, %v1862
        %v2049 = vmul.f32 %v2046, %v2048
        %v2050 = vadd.f32 %v1862, %v2049
        %s2051 = scalar_lea.vmem [#allocation3], 28
        %2052 = vst [vmem:[%s2051] sm:$0xf] %v2050
        %2053 = vst [vmem:[#allocation2] sm:$0xf] %v2050
        %v2054 = vld [vmem:[#allocation3] sm:$0xf]
        %v2057 = vunpack.c.l.s4 1966171168
        %v2058 = vunpack.c.0.s8 %v2057
        %v2059 = vlaneseq
        %v2060 = vshrl.u32 %v2059, 7
        %v2061 = vsub.s32 %v2058, %v2060
        %v2062 = vrot.slane %v2054, %v2061
        %v2063 = vcombine.high %v2062, %v2062
        %v2065 = vunpack.c.l.s4 1966171168
        %v2066 = vunpack.c.0.s8 %v2065
        %v2067 = vlaneseq
        %v2068 = vshrl.u32 %v2067, 7
        %v2069 = vsub.s32 %v2066, %v2068
        %v2070 = vrot.slane %v2062, %v2069
        %v2072 = vunpack.c.l.s4 1966171168
        %v2073 = vunpack.c.0.s8 %v2072
        %v2074 = vlaneseq
        %v2075 = vshrl.u32 %v2074, 7
        %v2076 = vsub.s32 %v2073, %v2075
        %v2077 = vrot.slane %v2063, %v2076
        %v2078 = vcombine.high %v2070, %v2070
        %v2079 = vcombine.high %v2077, %v2077
        %2084 = vst [vmem:[%s335] sm:$0x1] %v2070
        %2085 = vst [vmem:[%s335 + $0x8] sm:$0x1] %v2077
        %2086 = vst [vmem:[%s335 + $0x10] sm:$0x1] %v2078
        %2087 = vst [vmem:[%s335 + $0x18] sm:$0x1] %v2079
        %v2088 = vld [vmem:[%s923] sm:$0xf]
        %v2091 = vunpack.c.l.s4 1966171168
        %v2092 = vunpack.c.0.s8 %v2091
        %v2093 = vlaneseq
        %v2094 = vshrl.u32 %v2093, 7
        %v2095 = vsub.s32 %v2092, %v2094
        %v2096 = vrot.slane %v2088, %v2095
        %v2097 = vcombine.high %v2096, %v2096
        %v2099 = vunpack.c.l.s4 1966171168
        %v2100 = vunpack.c.0.s8 %v2099
        %v2101 = vlaneseq
        %v2102 = vshrl.u32 %v2101, 7
        %v2103 = vsub.s32 %v2100, %v2102
        %v2104 = vrot.slane %v2096, %v2103
        %v2106 = vunpack.c.l.s4 1966171168
        %v2107 = vunpack.c.0.s8 %v2106
        %v2108 = vlaneseq
        %v2109 = vshrl.u32 %v2108, 7
        %v2110 = vsub.s32 %v2107, %v2109
        %v2111 = vrot.slane %v2097, %v2110
        %v2112 = vcombine.high %v2104, %v2104
        %v2113 = vcombine.high %v2111, %v2111
        %2118 = vst [vmem:[%s335 + $0x1] sm:$0x1] %v2104
        %2119 = vst [vmem:[%s335 + $0x9] sm:$0x1] %v2111
        %2120 = vst [vmem:[%s335 + $0x11] sm:$0x1] %v2112
        %2121 = vst [vmem:[%s335 + $0x19] sm:$0x1] %v2113
        %v2122 = vld [vmem:[%s1111] sm:$0xf]
        %v2125 = vunpack.c.l.s4 1966171168
        %v2126 = vunpack.c.0.s8 %v2125
        %v2127 = vlaneseq
        %v2128 = vshrl.u32 %v2127, 7
        %v2129 = vsub.s32 %v2126, %v2128
        %v2130 = vrot.slane %v2122, %v2129
        %v2131 = vcombine.high %v2130, %v2130
        %v2133 = vunpack.c.l.s4 1966171168
        %v2134 = vunpack.c.0.s8 %v2133
        %v2135 = vlaneseq
        %v2136 = vshrl.u32 %v2135, 7
        %v2137 = vsub.s32 %v2134, %v2136
        %v2138 = vrot.slane %v2130, %v2137
        %v2140 = vunpack.c.l.s4 1966171168
        %v2141 = vunpack.c.0.s8 %v2140
        %v2142 = vlaneseq
        %v2143 = vshrl.u32 %v2142, 7
        %v2144 = vsub.s32 %v2141, %v2143
        %v2145 = vrot.slane %v2131, %v2144
        %v2146 = vcombine.high %v2138, %v2138
        %v2147 = vcombine.high %v2145, %v2145
        %2152 = vst [vmem:[%s335 + $0x2] sm:$0x1] %v2138
        %2153 = vst [vmem:[%s335 + $0xa] sm:$0x1] %v2145
        %2154 = vst [vmem:[%s335 + $0x12] sm:$0x1] %v2146
        %2155 = vst [vmem:[%s335 + $0x1a] sm:$0x1] %v2147
        %v2156 = vld [vmem:[%s1299] sm:$0xf]
        %v2159 = vunpack.c.l.s4 1966171168
        %v2160 = vunpack.c.0.s8 %v2159
        %v2161 = vlaneseq
        %v2162 = vshrl.u32 %v2161, 7
        %v2163 = vsub.s32 %v2160, %v2162
        %v2164 = vrot.slane %v2156, %v2163
        %v2165 = vcombine.high %v2164, %v2164
        %v2167 = vunpack.c.l.s4 1966171168
        %v2168 = vunpack.c.0.s8 %v2167
        %v2169 = vlaneseq
        %v2170 = vshrl.u32 %v2169, 7
        %v2171 = vsub.s32 %v2168, %v2170
        %v2172 = vrot.slane %v2164, %v2171
        %v2174 = vunpack.c.l.s4 1966171168
        %v2175 = vunpack.c.0.s8 %v2174
        %v2176 = vlaneseq
        %v2177 = vshrl.u32 %v2176, 7
        %v2178 = vsub.s32 %v2175, %v2177
        %v2179 = vrot.slane %v2165, %v2178
        %v2180 = vcombine.high %v2172, %v2172
        %v2181 = vcombine.high %v2179, %v2179
        %2186 = vst [vmem:[%s335 + $0x3] sm:$0x1] %v2172
        %2187 = vst [vmem:[%s335 + $0xb] sm:$0x1] %v2179
        %2188 = vst [vmem:[%s335 + $0x13] sm:$0x1] %v2180
        %2189 = vst [vmem:[%s335 + $0x1b] sm:$0x1] %v2181
        %v2190 = vld [vmem:[%s1487] sm:$0xf]
        %v2193 = vunpack.c.l.s4 1966171168
        %v2194 = vunpack.c.0.s8 %v2193
        %v2195 = vlaneseq
        %v2196 = vshrl.u32 %v2195, 7
        %v2197 = vsub.s32 %v2194, %v2196
        %v2198 = vrot.slane %v2190, %v2197
        %v2199 = vcombine.high %v2198, %v2198
        %v2201 = vunpack.c.l.s4 1966171168
        %v2202 = vunpack.c.0.s8 %v2201
        %v2203 = vlaneseq
        %v2204 = vshrl.u32 %v2203, 7
        %v2205 = vsub.s32 %v2202, %v2204
        %v2206 = vrot.slane %v2198, %v2205
        %v2208 = vunpack.c.l.s4 1966171168
        %v2209 = vunpack.c.0.s8 %v2208
        %v2210 = vlaneseq
        %v2211 = vshrl.u32 %v2210, 7
        %v2212 = vsub.s32 %v2209, %v2211
        %v2213 = vrot.slane %v2199, %v2212
        %v2214 = vcombine.high %v2206, %v2206
        %v2215 = vcombine.high %v2213, %v2213
        %2220 = vst [vmem:[%s335 + $0x4] sm:$0x1] %v2206
        %2221 = vst [vmem:[%s335 + $0xc] sm:$0x1] %v2213
        %2222 = vst [vmem:[%s335 + $0x14] sm:$0x1] %v2214
        %2223 = vst [vmem:[%s335 + $0x1c] sm:$0x1] %v2215
        %v2224 = vld [vmem:[%s1675] sm:$0xf]
        %v2227 = vunpack.c.l.s4 1966171168
        %v2228 = vunpack.c.0.s8 %v2227
        %v2229 = vlaneseq
        %v2230 = vshrl.u32 %v2229, 7
        %v2231 = vsub.s32 %v2228, %v2230
        %v2232 = vrot.slane %v2224, %v2231
        %v2233 = vcombine.high %v2232, %v2232
        %v2235 = vunpack.c.l.s4 1966171168
        %v2236 = vunpack.c.0.s8 %v2235
        %v2237 = vlaneseq
        %v2238 = vshrl.u32 %v2237, 7
        %v2239 = vsub.s32 %v2236, %v2238
        %v2240 = vrot.slane %v2232, %v2239
        %v2242 = vunpack.c.l.s4 1966171168
        %v2243 = vunpack.c.0.s8 %v2242
        %v2244 = vlaneseq
        %v2245 = vshrl.u32 %v2244, 7
        %v2246 = vsub.s32 %v2243, %v2245
        %v2247 = vrot.slane %v2233, %v2246
        %v2248 = vcombine.high %v2240, %v2240
        %v2249 = vcombine.high %v2247, %v2247
        %2254 = vst [vmem:[%s335 + $0x5] sm:$0x1] %v2240
        %2255 = vst [vmem:[%s335 + $0xd] sm:$0x1] %v2247
        %2256 = vst [vmem:[%s335 + $0x15] sm:$0x1] %v2248
        %2257 = vst [vmem:[%s335 + $0x1d] sm:$0x1] %v2249
        %v2258 = vld [vmem:[%s1863] sm:$0xf]
        %v2261 = vunpack.c.l.s4 1966171168
        %v2262 = vunpack.c.0.s8 %v2261
        %v2263 = vlaneseq
        %v2264 = vshrl.u32 %v2263, 7
        %v2265 = vsub.s32 %v2262, %v2264
        %v2266 = vrot.slane %v2258, %v2265
        %v2267 = vcombine.high %v2266, %v2266
        %v2269 = vunpack.c.l.s4 1966171168
        %v2270 = vunpack.c.0.s8 %v2269
        %v2271 = vlaneseq
        %v2272 = vshrl.u32 %v2271, 7
        %v2273 = vsub.s32 %v2270, %v2272
        %v2274 = vrot.slane %v2266, %v2273
        %v2276 = vunpack.c.l.s4 1966171168
        %v2277 = vunpack.c.0.s8 %v2276
        %v2278 = vlaneseq
        %v2279 = vshrl.u32 %v2278, 7
        %v2280 = vsub.s32 %v2277, %v2279
        %v2281 = vrot.slane %v2267, %v2280
        %v2282 = vcombine.high %v2274, %v2274
        %v2283 = vcombine.high %v2281, %v2281
        %2288 = vst [vmem:[%s335 + $0x6] sm:$0x1] %v2274
        %2289 = vst [vmem:[%s335 + $0xe] sm:$0x1] %v2281
        %2290 = vst [vmem:[%s335 + $0x16] sm:$0x1] %v2282
        %2291 = vst [vmem:[%s335 + $0x1e] sm:$0x1] %v2283
        %v2292 = vld [vmem:[%s2051] sm:$0xf]
        %v2295 = vunpack.c.l.s4 1966171168
        %v2296 = vunpack.c.0.s8 %v2295
        %v2297 = vlaneseq
        %v2298 = vshrl.u32 %v2297, 7
        %v2299 = vsub.s32 %v2296, %v2298
        %v2300 = vrot.slane %v2292, %v2299
        %v2301 = vcombine.high %v2300, %v2300
        %v2303 = vunpack.c.l.s4 1966171168
        %v2304 = vunpack.c.0.s8 %v2303
        %v2305 = vlaneseq
        %v2306 = vshrl.u32 %v2305, 7
        %v2307 = vsub.s32 %v2304, %v2306
        %v2308 = vrot.slane %v2300, %v2307
        %v2310 = vunpack.c.l.s4 1966171168
        %v2311 = vunpack.c.0.s8 %v2310
        %v2312 = vlaneseq
        %v2313 = vshrl.u32 %v2312, 7
        %v2314 = vsub.s32 %v2311, %v2313
        %v2315 = vrot.slane %v2301, %v2314
        %v2316 = vcombine.high %v2308, %v2308
        %v2317 = vcombine.high %v2315, %v2315
        %2322 = vst [vmem:[%s335 + $0x7] sm:$0x1] %v2308
        %2323 = vst [vmem:[%s335 + $0xf] sm:$0x1] %v2315
        %2324 = vst [vmem:[%s335 + $0x17] sm:$0x1] %v2316
        %2325 = vst [vmem:[%s335 + $0x1f] sm:$0x1] %v2317
        %s2326 = sand.u32 %s185, 1
        %s2327 = scalar_lea.sflag [#allocation6], %s2326
        %s2328 = sand.u32 %s185, 1
        %s2329 = smul.addr %s2328, 32
        %s2330 = scalar_lea.vmem [#allocation12], %s2329
        // Predicated region
        $region65: #{tpu_custom_call.1} parent=43 // pred_check
          %p2331 = pneg %p195
        $region66: #{tpu_custom_call.1} parent=43 // pred_check_branch
          %2333 = sbr.rel (%p2331) target = $region68
        $region67: #{tpu_custom_call.1} parent=43 // pred_region
          %s2334 = smul.u32 4, %s29
          %s2336 = ssub.s32 512, 512
          %2337 = vsyncadd %s2327, %s2336
          %s2338 = smul.addr %s2334, 2
          %s2339 = sadd.s32 %s30, %s2338
          %s2340 = smul.addr %s2339, 128
          %s2341 = scalar_lea.hbm %s6, %s2340
          %s2342 = sshll.u32 %s2330, 4
          %s2343 = int_to_ptr.vmem [resolvable:$true] %s2342
          %2348 = dma.vmem_to_hbm [thread:$0]  %s2343, 512, %s2341, %s2327, 128, 256, 8
        $region68: #{tpu_custom_call.1} parent=43 // pred_fallthru
          _
      $region44: #{tpu_custom_call.1} parent=5 // pred_fallthru
        _
      %p2349 = scmp.le.s32.totalorder 2, %s20
      // Predicated region
      $region69: #{tpu_custom_call.1} parent=5 // pred_check
        %p2350 = pneg %p2349
      $region70: #{tpu_custom_call.1} parent=5 // pred_check_branch
        %2352 = sbr.rel (%p2350) target = $region72
      $region71: #{tpu_custom_call.1} parent=5 // pred_region
        %s2353 = ssub.s32 %s20, 2
        // Predicated region
        $region73: #{tpu_custom_call.1} parent=71 // pred_check
          %p2354 = pneg %p201
        $region74: #{tpu_custom_call.1} parent=71 // pred_check_branch
          %2356 = sbr.rel (%p2354) target = $region76
        $region75: #{tpu_custom_call.1} parent=71 // pred_region
          %s2357 = sand.u32 %s186, 1
          %s2358 = scalar_lea.sflag [#allocation6], %s2357
          %s2359 = sand.u32 %s186, 1
          %s2360 = smul.addr %s2359, 32
          %s2361 = scalar_lea.vmem [#allocation12], %s2360
          %2362 = dma.done %s2358, 512
        $region76: #{tpu_custom_call.1} parent=71 // pred_fallthru
          _
      $region72: #{tpu_custom_call.1} parent=5 // pred_fallthru
        _
    $region6: #{tpu_custom_call.1} parent=1 // loop_footer
      %s24 = sadd.s32 1, %s20
    $region7: #{tpu_custom_call.1} parent=1 // loop_footer_branch
      %19 = sbr.rel target = $region3
    $region8: #{tpu_custom_call.1} parent=1 // loop_exit
      _
    %2363 = vsyncpa [#allocation5], 1
    %s2364 = scalar_lea.sflag [#allocation5], 1
    %2365 = vsyncpa %s2364, 1
    %2366 = vsyncpa [#allocation8], 1
    %2367 = vsyncpa [#allocation11], 1
    %2368 = vsyncpa [#allocation6], 1
    %s2369 = scalar_lea.sflag [#allocation6], 1
    %2370 = vsyncpa %s2369, 1

</llo_original>
